<compile_context>
chip_gen: v7x
topology: tpu7x:2x2x1
jax: 0.10.0
libtpu: 0.0.40
codegen_flags: <defaults>
</compile_context>

<pallas_src>
import jax
import jax.numpy as jnp
from jax import lax
from jax.experimental import pallas as pl
from jax.experimental.pallas import tpu as pltpu


def _round_up(x, m):
    return (x + m - 1) // m * m


def _sigmoid(z):
    # 1 EUP op (tanh) instead of exp + divide.
    return 0.5 * jnp.tanh(0.5 * z) + 0.5


def lstm_block_kernel(lens_ref, x_ref, wih_ref, whh_ref, bias_ref,
                      out_ref, ht_ref, ct_ref, h_sc, c_sc):
    """One grid step == TT timesteps of the LSTM for one batch tile.

    lens_ref : (TB, 1)      int32  valid lengths (padded rows are 0)
    x_ref    : (TT, TB, D)  bf16   raw inputs for this time block
    wih_ref  : (D,  4Hp)    bf16   W_ih^T, gate-padded
    whh_ref  : (Hp, 4Hp)    bf16   W_hh^T, gate-padded
    bias_ref : (1,  4Hp)    f32    b_ih + b_hh, gate-padded
    out_ref  : (TT, TB, Hp) bf16   hidden outputs (zeros past length)
    ht_ref   : (TB, Hp)     f32    final hidden state (written on last block)
    ct_ref   : (TB, Hp)     f32    final cell state   (written on last block)
    h_sc     : (TB, Hp)     bf16   recurrent hidden carried across time blocks
    c_sc     : (TB, Hp)     f32    recurrent cell   carried across time blocks
    """
    TT = x_ref.shape[0]
    TB, Hp = h_sc.shape
    tb = pl.program_id(1)                      # time-block index (innermost)

    @pl.when(tb == 0)
    def _():
        h_sc[...] = jnp.zeros_like(h_sc)
        c_sc[...] = jnp.zeros_like(c_sc)

    # Loop-invariant loads / broadcasts hoisted out of the unrolled loop
    # (JAX does not CSE broadcast_in_dim inside unrolled bodies).
    lens = lens_ref[...]                                    # (TB, 1) int32
    wih = wih_ref[...]                                      # (D, 4Hp) bf16
    whh = whh_ref[...]                                      # (Hp, 4Hp) bf16
    bias = jnp.broadcast_to(bias_ref[...], (TB, 4 * Hp))    # (TB, 4Hp) f32
    t_base = tb * TT

    def step(j, carry):
        h, c = carry                                        # bf16 / f32
        # Fused input projection + recurrent projection: two 2-D MXU dots
        # with f32 accumulation; bias added in f32.
        pre = (jnp.dot(x_ref[j], wih, preferred_element_type=jnp.float32)
               + jnp.dot(h, whh, preferred_element_type=jnp.float32)
               + bias)
        # PyTorch gate order i, f, g, o; each gate is a lane-aligned Hp slab.
        i_g = _sigmoid(pre[:, 0 * Hp:1 * Hp])
        f_g = _sigmoid(pre[:, 1 * Hp:2 * Hp])
        g_g = jnp.tanh(pre[:, 2 * Hp:3 * Hp])
        o_g = _sigmoid(pre[:, 3 * Hp:4 * Hp])
        c_new = f_g * c + i_g * g_g
        h_new = o_g * jnp.tanh(c_new)
        h16 = h_new.astype(h_sc.dtype)

        # One mask broadcast per step, reused by all three selects.
        valid = jnp.broadcast_to((t_base + j) < lens, (TB, Hp))
        h = jnp.where(valid, h16, h)                        # freeze past length
        c = jnp.where(valid, c_new, c)
        out_ref[j] = jnp.where(valid, h16, 0).astype(out_ref.dtype)
        return h, c

    h, c = lax.fori_loop(0, TT, step, (h_sc[...], c_sc[...]), unroll=True)
    h_sc[...] = h
    c_sc[...] = c

    @pl.when(tb == pl.num_programs(1) - 1)
    def _():
        ht_ref[...] = h.astype(ht_ref.dtype)
        ct_ref[...] = c


def dynamic_lstm(x, x_len, w_ih, w_hh, b_ih, b_hh, *,
                 time_block=8, batch_block=256):
    """Forward pass of DynamicLSTM (num_layers=1, unidirectional, batch_first).

    x     : (B, T, D) float
    x_len : (B,)      int
    w_ih  : (4H, D), w_hh : (4H, H), b_ih/b_hh : (4H,)
    Returns out (B, T, H), (ht (1, B, H), ct (1, B, H)).
    """
    B, T, D = x.shape
    H = w_ih.shape[0] // 4
    Hp = _round_up(H, 128)                     # lane-dense gates / outputs
    # bf16 blocks need sublane tiles of 16; batch tile fills MXU M on v6e/v7x
    # while staying modest enough to avoid vreg spills in the unrolled loop.
    Bp0 = _round_up(B, 16)
    TB = min(Bp0, _round_up(batch_block, 16))
    Bp = _round_up(Bp0, TB)

    f32, bf16 = jnp.float32, jnp.bfloat16

    # --- VMEM budget: clamp TT so double-buffered streamed blocks + resident
    #     weights fit comfortably (v7x has 64 MiB per TensorCore). ---
    budget = 32 * 1024 * 1024
    resident = (2 * ((D + Hp) * 4 * Hp * 2      # W_ih^T + W_hh^T (bf16, x2 buf)
                     + 4 * Hp * 4               # bias (f32)
                     + TB * 128 * 4             # lens tile (lane-padded int32)
                     + 2 * TB * Hp * 4)         # ht + ct blocks (f32)
                + TB * Hp * (2 + 4))            # h (bf16) + c (f32) scratch
    per_t = 2 * TB * (D + Hp) * 2               # x + out bf16 blocks, x2 buffers
    TT = max(1, min(int(time_block), max(1, (budget - resident) // per_t)))
    Tp = _round_up(T, TT)
    nt = Tp // TT
    vmem_limit = int(min(max(resident + per_t * TT + (4 << 20), 32 << 20),
                         100 << 20))

    # --- gate-padded parameters: gate g occupies columns [g*Hp, g*Hp + H) ---
    # Padded gate columns / hidden rows are exactly 0 -> padded hidden units
    # stay exactly 0 through the recurrence (mathematically inert).
    wih_t = jnp.asarray(w_ih, f32).T.reshape(D, 4, H)
    wih_p = jnp.pad(wih_t, ((0, 0), (0, 0), (0, Hp - H))).reshape(D, 4 * Hp)
    whh_t = jnp.asarray(w_hh, f32).T.reshape(H, 4, H)
    whh_p = jnp.pad(whh_t, ((0, Hp - H), (0, 0), (0, Hp - H))).reshape(Hp, 4 * Hp)
    bias = (jnp.asarray(b_ih, f32) + jnp.asarray(b_hh, f32)).reshape(4, H)
    bias_p = jnp.pad(bias, ((0, 0), (0, Hp - H))).reshape(1, 4 * Hp)

    # --- pad batch / time; padded batch rows get length 0 (fully inert) ---
    x_p = jnp.pad(jnp.asarray(x, f32), ((0, Bp - B), (0, Tp - T), (0, 0)))
    x_t = jnp.transpose(x_p, (1, 0, 2)).astype(bf16)        # (Tp, Bp, D)
    lens = jnp.pad(jnp.asarray(x_len, jnp.int32), (0, Bp - B)).reshape(Bp, 1)

    wih_bf = wih_p.astype(bf16)
    whh_bf = whh_p.astype(bf16)

    cost = pl.CostEstimate(
        flops=int(2 * Bp * Tp * 4 * Hp * (D + Hp)),
        transcendentals=int(5 * Bp * Tp * Hp),
        bytes_accessed=int(Tp * Bp * (D + Hp) * 2          # x in, out back
                           + (D + Hp) * 4 * Hp * 2          # weights
                           + 2 * Bp * Hp * 4                # ht, ct
                           + Bp * 4),
    )

    out_t, ht, ct = pl.pallas_call(
        lstm_block_kernel,
        out_shape=(
            jax.ShapeDtypeStruct((Tp, Bp, Hp), bf16),
            jax.ShapeDtypeStruct((Bp, Hp), f32),
            jax.ShapeDtypeStruct((Bp, Hp), f32),
        ),
        grid_spec=pltpu.PrefetchScalarGridSpec(
            num_scalar_prefetch=0,
            grid=(Bp // TB, nt),                            # (batch, time)
            in_specs=[
                pl.BlockSpec((TB, 1), lambda b, t: (b, 0)),            # lens
                pl.BlockSpec((TT, TB, D), lambda b, t: (t, b, 0)),     # x block
                pl.BlockSpec((D, 4 * Hp), lambda b, t: (0, 0)),        # W_ih^T
                pl.BlockSpec((Hp, 4 * Hp), lambda b, t: (0, 0)),       # W_hh^T
                pl.BlockSpec((1, 4 * Hp), lambda b, t: (0, 0)),        # bias
            ],
            out_specs=[
                pl.BlockSpec((TT, TB, Hp), lambda b, t: (t, b, 0)),    # out blk
                pl.BlockSpec((TB, Hp), lambda b, t: (b, 0)),           # ht
                pl.BlockSpec((TB, Hp), lambda b, t: (b, 0)),           # ct
            ],
            scratch_shapes=[
                pltpu.VMEM((TB, Hp), bf16),   # h carry (only feeds bf16 MXU)
                pltpu.VMEM((TB, Hp), f32),    # c carry
            ],
        ),
        compiler_params=pltpu.CompilerParams(
            dimension_semantics=("parallel", "arbitrary"),  # time is sequential
            vmem_limit_bytes=vmem_limit),
        cost_estimate=cost,
    )(lens, x_t, wih_bf, whh_bf, bias_p)

    # un-pad + back to batch-first (transpose / slice / cast fuse in XLA)
    out = jnp.transpose(out_t, (1, 0, 2))[:B, :T, :H].astype(x.dtype)
    return out, (ht[:B, :H].astype(x.dtype)[None],
                 ct[:B, :H].astype(x.dtype)[None])


def dynamic_lstm_ref(x, x_len, w_ih, w_hh, b_ih, b_hh):
    """Pure-JAX f32 reference (masked LSTM) for correctness checking."""
    B, T, D = x.shape
    H = w_ih.shape[0] // 4
    wih_t, whh_t = w_ih.T, w_hh.T
    bias = b_ih + b_hh

    def step(carry, inp):
        h, c = carry
        x_t, t = inp
        gates = (jnp.dot(x_t, wih_t, precision=lax.Precision.HIGHEST)
                 + jnp.dot(h, whh_t, precision=lax.Precision.HIGHEST) + bias)
        i_g = jax.nn.sigmoid(gates[:, 0 * H:1 * H])
        f_g = jax.nn.sigmoid(gates[:, 1 * H:2 * H])
        g_g = jnp.tanh(gates[:, 2 * H:3 * H])
        o_g = jax.nn.sigmoid(gates[:, 3 * H:4 * H])
        c_new = f_g * c + i_g * g_g
        h_new = o_g * jnp.tanh(c_new)
        valid = (t < x_len)[:, None]
        h_u = jnp.where(valid, h_new, h)
        c_u = jnp.where(valid, c_new, c)
        out_t = jnp.where(valid, h_new, 0.0)
        return (h_u, c_u), out_t

    init = (jnp.zeros((B, H), jnp.float32), jnp.zeros((B, H), jnp.float32))
    (hT, cT), out_t = lax.scan(step, init,
                               (jnp.transpose(x, (1, 0, 2)), jnp.arange(T)))
    return jnp.transpose(out_t, (1, 0, 2)), (hT[None], cT[None])


if __name__ == "__main__":
    B, T, D, H = 4, 16, 16, 32   # batch, seq, input_size, hidden_size

    key = jax.random.PRNGKey(0)
    kx, kwi, kwh, kbi, kbh = jax.random.split(key, 5)

    x = jax.random.normal(kx, (B, T, D), dtype=jnp.float32)
    x_len = jnp.array([16, 11, 3, 7], dtype=jnp.int32)   # variable lengths

    # nn.LSTM default init: U(-1/sqrt(H), 1/sqrt(H))
    k = 1.0 / (H ** 0.5)
    w_ih = jax.random.uniform(kwi, (4 * H, D), jnp.float32, -k, k)
    w_hh = jax.random.uniform(kwh, (4 * H, H), jnp.float32, -k, k)
    b_ih = jax.random.uniform(kbi, (4 * H,), jnp.float32, -k, k)
    b_hh = jax.random.uniform(kbh, (4 * H,), jnp.float32, -k, k)

    out, (ht, ct) = dynamic_lstm(x, x_len, w_ih, w_hh, b_ih, b_hh)
    jax.block_until_ready((out, ht, ct))

    out_r, (ht_r, ct_r) = dynamic_lstm_ref(x, x_len, w_ih, w_hh, b_ih, b_hh)
    assert out.shape == (B, T, H) and ht.shape == (1, B, H) and ct.shape == (1, B, H)
    # bf16 MXU / bf16 output path vs f32 HIGHEST reference -> bf16-class tol
    assert jnp.allclose(out, out_r, atol=3e-2, rtol=3e-2)
    assert jnp.allclose(ht, ht_r, atol=3e-2, rtol=3e-2)
    assert jnp.allclose(ct, ct_r, atol=3e-2, rtol=3e-2)

    print("KERNEL_OK")
</pallas_src>

<mosaic_0001>
module attributes {stable_mosaic.version = 11 : i64} {
  func.func @lstm_block_kernel(%arg0: i32, %arg1: i32, %arg2: memref<16x1xi32, #tpu.memory_space<vmem>>, %arg3: memref<8x16x16xbf16, #tpu.memory_space<vmem>>, %arg4: memref<16x512xbf16, #tpu.memory_space<vmem>>, %arg5: memref<128x512xbf16, #tpu.memory_space<vmem>>, %arg6: memref<1x512xf32, #tpu.memory_space<vmem>>, %arg7: memref<8x16x128xbf16, #tpu.memory_space<vmem>>, %arg8: memref<16x128xf32, #tpu.memory_space<vmem>>, %arg9: memref<16x128xf32, #tpu.memory_space<vmem>>, %arg10: memref<16x128xbf16, #tpu.memory_space<vmem>>, %arg11: memref<16x128xf32, #tpu.memory_space<vmem>>) attributes {dimension_semantics = [#tpu.dimension_semantics<parallel>, #tpu.dimension_semantics<arbitrary>], iteration_bounds = array<i64: 1, 2>, scalar_prefetch = 0 : i64, scratch_operands = 2 : i64, tpu.core_type = #tpu.core_type<tc>, window_params = [{transform_indices = @transform_0, window_bounds = array<i64: 16, 1>}, {transform_indices = @transform_1, window_bounds = array<i64: 8, 16, 16>}, {pipeline_mode = #tpu.pipeline_mode<synchronous>, transform_indices = @transform_2, window_bounds = array<i64: 16, 512>}, {pipeline_mode = #tpu.pipeline_mode<synchronous>, transform_indices = @transform_3, window_bounds = array<i64: 128, 512>}, {pipeline_mode = #tpu.pipeline_mode<synchronous>, transform_indices = @transform_4, window_bounds = array<i64: 1, 512>}, {transform_indices = @transform_5, window_bounds = array<i64: 8, 16, 128>}, {transform_indices = @transform_6, window_bounds = array<i64: 16, 128>}, {transform_indices = @transform_7, window_bounds = array<i64: 16, 128>}]} {
    %c0_i32 = arith.constant 0 : i32
    %0 = arith.cmpi eq, %arg1, %c0_i32 : i32
    %1 = arith.extui %0 : i1 to i32
    %c0_i32_0 = arith.constant 0 : i32
    %2 = arith.cmpi ne, %1, %c0_i32_0 : i32
    scf.if %2 {
      %cst_147 = arith.constant 0.000000e+00 : bf16
      %441 = vector.broadcast %cst_147 : bf16 to vector<16x128xbf16>
      %c0_148 = arith.constant 0 : index
      %c0_149 = arith.constant 0 : index
      %442 = vector.load %arg10[%c0_148, %c0_149] : memref<16x128xbf16, #tpu.memory_space<vmem>>, vector<16x128xbf16>
      tpu.vector_store %arg10[%c0_148, %c0_149], %441 {strides = array<i32>} : memref<16x128xbf16, #tpu.memory_space<vmem>>, vector<16x128xbf16>,
      %cst_150 = arith.constant 0.000000e+00 : f32
      %443 = vector.broadcast %cst_150 : f32 to vector<16x128xf32>
      %c0_151 = arith.constant 0 : index
      %c0_152 = arith.constant 0 : index
      %444 = vector.load %arg11[%c0_151, %c0_152] : memref<16x128xf32, #tpu.memory_space<vmem>>, vector<16x128xf32>
      tpu.vector_store %arg11[%c0_151, %c0_152], %443 {strides = array<i32>} : memref<16x128xf32, #tpu.memory_space<vmem>>, vector<16x128xf32>,
    } else {
    }
    %c0 = arith.constant 0 : index
    %c0_1 = arith.constant 0 : index
    %3 = vector.load %arg2[%c0, %c0_1] : memref<16x1xi32, #tpu.memory_space<vmem>>, vector<16x1xi32>
    %c0_2 = arith.constant 0 : index
    %c0_3 = arith.constant 0 : index
    %4 = vector.load %arg4[%c0_2, %c0_3] : memref<16x512xbf16, #tpu.memory_space<vmem>>, vector<16x512xbf16>
    %c0_4 = arith.constant 0 : index
    %c0_5 = arith.constant 0 : index
    %5 = vector.load %arg5[%c0_4, %c0_5] : memref<128x512xbf16, #tpu.memory_space<vmem>>, vector<128x512xbf16>
    %c0_6 = arith.constant 0 : index
    %c0_7 = arith.constant 0 : index
    %6 = vector.load %arg6[%c0_6, %c0_7] : memref<1x512xf32, #tpu.memory_space<vmem>>, vector<1x512xf32>
    %7 = vector.shape_cast %6 : vector<1x512xf32> to vector<1x512xf32>
    %8 = vector.broadcast %7 : vector<1x512xf32> to vector<16x512xf32>
    %c8_i32 = arith.constant 8 : i32
    %9 = arith.muli %arg1, %c8_i32 : i32
    %c0_8 = arith.constant 0 : index
    %c0_9 = arith.constant 0 : index
    %10 = vector.load %arg10[%c0_8, %c0_9] : memref<16x128xbf16, #tpu.memory_space<vmem>>, vector<16x128xbf16>
    %c0_10 = arith.constant 0 : index
    %c0_11 = arith.constant 0 : index
    %11 = vector.load %arg11[%c0_10, %c0_11] : memref<16x128xf32, #tpu.memory_space<vmem>>, vector<16x128xf32>
    %c0_i32_12 = arith.constant 0 : i32
    %12 = arith.index_cast %c0_i32_12 : i32 to index
    %c0_13 = arith.constant 0 : index
    %c0_14 = arith.constant 0 : index
    %13 = vector.load %arg3[%12, %c0_13, %c0_14] : memref<8x16x16xbf16, #tpu.memory_space<vmem>>, vector<1x16x16xbf16>
    %14 = vector.shape_cast %13 : vector<1x16x16xbf16> to vector<16x16xbf16>
    %cst = arith.constant dense<0.000000e+00> : vector<16x512xf32>
    %15 = tpu.matmul %14, %4, %cst {dimension_numbers = #tpu.dot_dimension_numbers<[1], [0], [0], [1], [0, 0, 1, 1], [], []>} : vector<16x16xbf16>, vector<16x512xbf16>, vector<16x512xf32> -> vector<16x512xf32>
    %cst_15 = arith.constant dense<0.000000e+00> : vector<16x512xf32>
    %16 = tpu.matmul %10, %5, %cst_15 {dimension_numbers = #tpu.dot_dimension_numbers<[1], [0], [0], [1], [0, 0, 1, 1], [], []>} : vector<16x128xbf16>, vector<128x512xbf16>, vector<16x512xf32> -> vector<16x512xf32>
    %17 = arith.addf %15, %16 : vector<16x512xf32>
    %18 = arith.addf %17, %8 : vector<16x512xf32>
    %19 = vector.extract_strided_slice %18 {offsets = [0, 0], sizes = [16, 128], strides = [1, 1]} : vector<16x512xf32> to vector<16x128xf32>
    %cst_16 = arith.constant 5.000000e-01 : f32
    %20 = vector.broadcast %cst_16 : f32 to vector<16x128xf32>
    %21 = arith.mulf %20, %19 : vector<16x128xf32>
    %22 = math.tanh %21 : vector<16x128xf32>
    %cst_17 = arith.constant 5.000000e-01 : f32
    %23 = vector.broadcast %cst_17 : f32 to vector<16x128xf32>
    %24 = arith.mulf %23, %22 : vector<16x128xf32>
    %cst_18 = arith.constant 5.000000e-01 : f32
    %25 = vector.broadcast %cst_18 : f32 to vector<16x128xf32>
    %26 = arith.addf %24, %25 : vector<16x128xf32>
    %27 = vector.extract_strided_slice %18 {offsets = [0, 128], sizes = [16, 128], strides = [1, 1]} : vector<16x512xf32> to vector<16x128xf32>
    %cst_19 = arith.constant 5.000000e-01 : f32
    %28 = vector.broadcast %cst_19 : f32 to vector<16x128xf32>
    %29 = arith.mulf %28, %27 : vector<16x128xf32>
    %30 = math.tanh %29 : vector<16x128xf32>
    %cst_20 = arith.constant 5.000000e-01 : f32
    %31 = vector.broadcast %cst_20 : f32 to vector<16x128xf32>
    %32 = arith.mulf %31, %30 : vector<16x128xf32>
    %cst_21 = arith.constant 5.000000e-01 : f32
    %33 = vector.broadcast %cst_21 : f32 to vector<16x128xf32>
    %34 = arith.addf %32, %33 : vector<16x128xf32>
    %35 = vector.extract_strided_slice %18 {offsets = [0, 256], sizes = [16, 128], strides = [1, 1]} : vector<16x512xf32> to vector<16x128xf32>
    %36 = math.tanh %35 : vector<16x128xf32>
    %37 = vector.extract_strided_slice %18 {offsets = [0, 384], sizes = [16, 128], strides = [1, 1]} : vector<16x512xf32> to vector<16x128xf32>
    %cst_22 = arith.constant 5.000000e-01 : f32
    %38 = vector.broadcast %cst_22 : f32 to vector<16x128xf32>
    %39 = arith.mulf %38, %37 : vector<16x128xf32>
    %40 = math.tanh %39 : vector<16x128xf32>
    %cst_23 = arith.constant 5.000000e-01 : f32
    %41 = vector.broadcast %cst_23 : f32 to vector<16x128xf32>
    %42 = arith.mulf %41, %40 : vector<16x128xf32>
    %cst_24 = arith.constant 5.000000e-01 : f32
    %43 = vector.broadcast %cst_24 : f32 to vector<16x128xf32>
    %44 = arith.addf %42, %43 : vector<16x128xf32>
    %45 = arith.mulf %34, %11 : vector<16x128xf32>
    %46 = arith.mulf %26, %36 : vector<16x128xf32>
    %47 = arith.addf %45, %46 : vector<16x128xf32>
    %48 = math.tanh %47 : vector<16x128xf32>
    %49 = arith.mulf %44, %48 : vector<16x128xf32>
    %50 = arith.truncf %49 : vector<16x128xf32> to vector<16x128xbf16>
    %51 = arith.addi %9, %c0_i32_12 : i32
    %52 = vector.broadcast %51 : i32 to vector<16x1xi32>
    %53 = arith.cmpi slt, %52, %3 : vector<16x1xi32>
    %54 = vector.shape_cast %53 : vector<16x1xi1> to vector<16x1xi1>
    %55 = vector.broadcast %54 : vector<16x1xi1> to vector<16x128xi1>
    %56 = arith.select %55, %50, %10 : vector<16x128xi1>, vector<16x128xbf16>
    %57 = arith.select %55, %47, %11 : vector<16x128xi1>, vector<16x128xf32>
    %c0_i32_25 = arith.constant 0 : i32
    %58 = arith.sitofp %c0_i32_25 : i32 to bf16
    %59 = vector.broadcast %58 : bf16 to vector<16x128xbf16>
    %60 = arith.select %55, %50, %59 : vector<16x128xi1>, vector<16x128xbf16>
    %61 = arith.index_cast %c0_i32_12 : i32 to index
    %c0_26 = arith.constant 0 : index
    %c0_27 = arith.constant 0 : index
    %62 = vector.load %arg7[%61, %c0_26, %c0_27] : memref<8x16x128xbf16, #tpu.memory_space<vmem>>, vector<1x16x128xbf16>
    %63 = vector.shape_cast %62 : vector<1x16x128xbf16> to vector<16x128xbf16>
    %64 = vector.shape_cast %60 : vector<16x128xbf16> to vector<1x16x128xbf16>
    tpu.vector_store %arg7[%61, %c0_26, %c0_27], %64 {strides = array<i32>} : memref<8x16x128xbf16, #tpu.memory_space<vmem>>, vector<1x16x128xbf16>,
    %c1_i32 = arith.constant 1 : i32
    %65 = arith.index_cast %c1_i32 : i32 to index
    %c0_28 = arith.constant 0 : index
    %c0_29 = arith.constant 0 : index
    %66 = vector.load %arg3[%65, %c0_28, %c0_29] : memref<8x16x16xbf16, #tpu.memory_space<vmem>>, vector<1x16x16xbf16>
    %67 = vector.shape_cast %66 : vector<1x16x16xbf16> to vector<16x16xbf16>
    %cst_30 = arith.constant dense<0.000000e+00> : vector<16x512xf32>
    %68 = tpu.matmul %67, %4, %cst_30 {dimension_numbers = #tpu.dot_dimension_numbers<[1], [0], [0], [1], [0, 0, 1, 1], [], []>} : vector<16x16xbf16>, vector<16x512xbf16>, vector<16x512xf32> -> vector<16x512xf32>
    %cst_31 = arith.constant dense<0.000000e+00> : vector<16x512xf32>
    %69 = tpu.matmul %56, %5, %cst_31 {dimension_numbers = #tpu.dot_dimension_numbers<[1], [0], [0], [1], [0, 0, 1, 1], [], []>} : vector<16x128xbf16>, vector<128x512xbf16>, vector<16x512xf32> -> vector<16x512xf32>
    %70 = arith.addf %68, %69 : vector<16x512xf32>
    %71 = arith.addf %70, %8 : vector<16x512xf32>
    %72 = vector.extract_strided_slice %71 {offsets = [0, 0], sizes = [16, 128], strides = [1, 1]} : vector<16x512xf32> to vector<16x128xf32>
    %cst_32 = arith.constant 5.000000e-01 : f32
    %73 = vector.broadcast %cst_32 : f32 to vector<16x128xf32>
    %74 = arith.mulf %73, %72 : vector<16x128xf32>
    %75 = math.tanh %74 : vector<16x128xf32>
    %cst_33 = arith.constant 5.000000e-01 : f32
    %76 = vector.broadcast %cst_33 : f32 to vector<16x128xf32>
    %77 = arith.mulf %76, %75 : vector<16x128xf32>
    %cst_34 = arith.constant 5.000000e-01 : f32
    %78 = vector.broadcast %cst_34 : f32 to vector<16x128xf32>
    %79 = arith.addf %77, %78 : vector<16x128xf32>
    %80 = vector.extract_strided_slice %71 {offsets = [0, 128], sizes = [16, 128], strides = [1, 1]} : vector<16x512xf32> to vector<16x128xf32>
    %cst_35 = arith.constant 5.000000e-01 : f32
    %81 = vector.broadcast %cst_35 : f32 to vector<16x128xf32>
    %82 = arith.mulf %81, %80 : vector<16x128xf32>
    %83 = math.tanh %82 : vector<16x128xf32>
    %cst_36 = arith.constant 5.000000e-01 : f32
    %84 = vector.broadcast %cst_36 : f32 to vector<16x128xf32>
    %85 = arith.mulf %84, %83 : vector<16x128xf32>
    %cst_37 = arith.constant 5.000000e-01 : f32
    %86 = vector.broadcast %cst_37 : f32 to vector<16x128xf32>
    %87 = arith.addf %85, %86 : vector<16x128xf32>
    %88 = vector.extract_strided_slice %71 {offsets = [0, 256], sizes = [16, 128], strides = [1, 1]} : vector<16x512xf32> to vector<16x128xf32>
    %89 = math.tanh %88 : vector<16x128xf32>
    %90 = vector.extract_strided_slice %71 {offsets = [0, 384], sizes = [16, 128], strides = [1, 1]} : vector<16x512xf32> to vector<16x128xf32>
    %cst_38 = arith.constant 5.000000e-01 : f32
    %91 = vector.broadcast %cst_38 : f32 to vector<16x128xf32>
    %92 = arith.mulf %91, %90 : vector<16x128xf32>
    %93 = math.tanh %92 : vector<16x128xf32>
    %cst_39 = arith.constant 5.000000e-01 : f32
    %94 = vector.broadcast %cst_39 : f32 to vector<16x128xf32>
    %95 = arith.mulf %94, %93 : vector<16x128xf32>
    %cst_40 = arith.constant 5.000000e-01 : f32
    %96 = vector.broadcast %cst_40 : f32 to vector<16x128xf32>
    %97 = arith.addf %95, %96 : vector<16x128xf32>
    %98 = arith.mulf %87, %57 : vector<16x128xf32>
    %99 = arith.mulf %79, %89 : vector<16x128xf32>
    %100 = arith.addf %98, %99 : vector<16x128xf32>
    %101 = math.tanh %100 : vector<16x128xf32>
    %102 = arith.mulf %97, %101 : vector<16x128xf32>
    %103 = arith.truncf %102 : vector<16x128xf32> to vector<16x128xbf16>
    %104 = arith.addi %9, %c1_i32 : i32
    %105 = vector.broadcast %104 : i32 to vector<16x1xi32>
    %106 = arith.cmpi slt, %105, %3 : vector<16x1xi32>
    %107 = vector.shape_cast %106 : vector<16x1xi1> to vector<16x1xi1>
    %108 = vector.broadcast %107 : vector<16x1xi1> to vector<16x128xi1>
    %109 = arith.select %108, %103, %56 : vector<16x128xi1>, vector<16x128xbf16>
    %110 = arith.select %108, %100, %57 : vector<16x128xi1>, vector<16x128xf32>
    %c0_i32_41 = arith.constant 0 : i32
    %111 = arith.sitofp %c0_i32_41 : i32 to bf16
    %112 = vector.broadcast %111 : bf16 to vector<16x128xbf16>
    %113 = arith.select %108, %103, %112 : vector<16x128xi1>, vector<16x128xbf16>
    %114 = arith.index_cast %c1_i32 : i32 to index
    %c0_42 = arith.constant 0 : index
    %c0_43 = arith.constant 0 : index
    %115 = vector.load %arg7[%114, %c0_42, %c0_43] : memref<8x16x128xbf16, #tpu.memory_space<vmem>>, vector<1x16x128xbf16>
    %116 = vector.shape_cast %115 : vector<1x16x128xbf16> to vector<16x128xbf16>
    %117 = vector.shape_cast %113 : vector<16x128xbf16> to vector<1x16x128xbf16>
    tpu.vector_store %arg7[%114, %c0_42, %c0_43], %117 {strides = array<i32>} : memref<8x16x128xbf16, #tpu.memory_space<vmem>>, vector<1x16x128xbf16>,
    %c2_i32 = arith.constant 2 : i32
    %118 = arith.index_cast %c2_i32 : i32 to index
    %c0_44 = arith.constant 0 : index
    %c0_45 = arith.constant 0 : index
    %119 = vector.load %arg3[%118, %c0_44, %c0_45] : memref<8x16x16xbf16, #tpu.memory_space<vmem>>, vector<1x16x16xbf16>
    %120 = vector.shape_cast %119 : vector<1x16x16xbf16> to vector<16x16xbf16>
    %cst_46 = arith.constant dense<0.000000e+00> : vector<16x512xf32>
    %121 = tpu.matmul %120, %4, %cst_46 {dimension_numbers = #tpu.dot_dimension_numbers<[1], [0], [0], [1], [0, 0, 1, 1], [], []>} : vector<16x16xbf16>, vector<16x512xbf16>, vector<16x512xf32> -> vector<16x512xf32>
    %cst_47 = arith.constant dense<0.000000e+00> : vector<16x512xf32>
    %122 = tpu.matmul %109, %5, %cst_47 {dimension_numbers = #tpu.dot_dimension_numbers<[1], [0], [0], [1], [0, 0, 1, 1], [], []>} : vector<16x128xbf16>, vector<128x512xbf16>, vector<16x512xf32> -> vector<16x512xf32>
    %123 = arith.addf %121, %122 : vector<16x512xf32>
    %124 = arith.addf %123, %8 : vector<16x512xf32>
    %125 = vector.extract_strided_slice %124 {offsets = [0, 0], sizes = [16, 128], strides = [1, 1]} : vector<16x512xf32> to vector<16x128xf32>
    %cst_48 = arith.constant 5.000000e-01 : f32
    %126 = vector.broadcast %cst_48 : f32 to vector<16x128xf32>
    %127 = arith.mulf %126, %125 : vector<16x128xf32>
    %128 = math.tanh %127 : vector<16x128xf32>
    %cst_49 = arith.constant 5.000000e-01 : f32
    %129 = vector.broadcast %cst_49 : f32 to vector<16x128xf32>
    %130 = arith.mulf %129, %128 : vector<16x128xf32>
    %cst_50 = arith.constant 5.000000e-01 : f32
    %131 = vector.broadcast %cst_50 : f32 to vector<16x128xf32>
    %132 = arith.addf %130, %131 : vector<16x128xf32>
    %133 = vector.extract_strided_slice %124 {offsets = [0, 128], sizes = [16, 128], strides = [1, 1]} : vector<16x512xf32> to vector<16x128xf32>
    %cst_51 = arith.constant 5.000000e-01 : f32
    %134 = vector.broadcast %cst_51 : f32 to vector<16x128xf32>
    %135 = arith.mulf %134, %133 : vector<16x128xf32>
    %136 = math.tanh %135 : vector<16x128xf32>
    %cst_52 = arith.constant 5.000000e-01 : f32
    %137 = vector.broadcast %cst_52 : f32 to vector<16x128xf32>
    %138 = arith.mulf %137, %136 : vector<16x128xf32>
    %cst_53 = arith.constant 5.000000e-01 : f32
    %139 = vector.broadcast %cst_53 : f32 to vector<16x128xf32>
    %140 = arith.addf %138, %139 : vector<16x128xf32>
    %141 = vector.extract_strided_slice %124 {offsets = [0, 256], sizes = [16, 128], strides = [1, 1]} : vector<16x512xf32> to vector<16x128xf32>
    %142 = math.tanh %141 : vector<16x128xf32>
    %143 = vector.extract_strided_slice %124 {offsets = [0, 384], sizes = [16, 128], strides = [1, 1]} : vector<16x512xf32> to vector<16x128xf32>
    %cst_54 = arith.constant 5.000000e-01 : f32
    %144 = vector.broadcast %cst_54 : f32 to vector<16x128xf32>
    %145 = arith.mulf %144, %143 : vector<16x128xf32>
    %146 = math.tanh %145 : vector<16x128xf32>
    %cst_55 = arith.constant 5.000000e-01 : f32
    %147 = vector.broadcast %cst_55 : f32 to vector<16x128xf32>
    %148 = arith.mulf %147, %146 : vector<16x128xf32>
    %cst_56 = arith.constant 5.000000e-01 : f32
    %149 = vector.broadcast %cst_56 : f32 to vector<16x128xf32>
    %150 = arith.addf %148, %149 : vector<16x128xf32>
    %151 = arith.mulf %140, %110 : vector<16x128xf32>
    %152 = arith.mulf %132, %142 : vector<16x128xf32>
    %153 = arith.addf %151, %152 : vector<16x128xf32>
    %154 = math.tanh %153 : vector<16x128xf32>
    %155 = arith.mulf %150, %154 : vector<16x128xf32>
    %156 = arith.truncf %155 : vector<16x128xf32> to vector<16x128xbf16>
    %157 = arith.addi %9, %c2_i32 : i32
    %158 = vector.broadcast %157 : i32 to vector<16x1xi32>
    %159 = arith.cmpi slt, %158, %3 : vector<16x1xi32>
    %160 = vector.shape_cast %159 : vector<16x1xi1> to vector<16x1xi1>
    %161 = vector.broadcast %160 : vector<16x1xi1> to vector<16x128xi1>
    %162 = arith.select %161, %156, %109 : vector<16x128xi1>, vector<16x128xbf16>
    %163 = arith.select %161, %153, %110 : vector<16x128xi1>, vector<16x128xf32>
    %c0_i32_57 = arith.constant 0 : i32
    %164 = arith.sitofp %c0_i32_57 : i32 to bf16
    %165 = vector.broadcast %164 : bf16 to vector<16x128xbf16>
    %166 = arith.select %161, %156, %165 : vector<16x128xi1>, vector<16x128xbf16>
    %167 = arith.index_cast %c2_i32 : i32 to index
    %c0_58 = arith.constant 0 : index
    %c0_59 = arith.constant 0 : index
    %168 = vector.load %arg7[%167, %c0_58, %c0_59] : memref<8x16x128xbf16, #tpu.memory_space<vmem>>, vector<1x16x128xbf16>
    %169 = vector.shape_cast %168 : vector<1x16x128xbf16> to vector<16x128xbf16>
    %170 = vector.shape_cast %166 : vector<16x128xbf16> to vector<1x16x128xbf16>
    tpu.vector_store %arg7[%167, %c0_58, %c0_59], %170 {strides = array<i32>} : memref<8x16x128xbf16, #tpu.memory_space<vmem>>, vector<1x16x128xbf16>,
    %c3_i32 = arith.constant 3 : i32
    %171 = arith.index_cast %c3_i32 : i32 to index
    %c0_60 = arith.constant 0 : index
    %c0_61 = arith.constant 0 : index
    %172 = vector.load %arg3[%171, %c0_60, %c0_61] : memref<8x16x16xbf16, #tpu.memory_space<vmem>>, vector<1x16x16xbf16>
    %173 = vector.shape_cast %172 : vector<1x16x16xbf16> to vector<16x16xbf16>
    %cst_62 = arith.constant dense<0.000000e+00> : vector<16x512xf32>
    %174 = tpu.matmul %173, %4, %cst_62 {dimension_numbers = #tpu.dot_dimension_numbers<[1], [0], [0], [1], [0, 0, 1, 1], [], []>} : vector<16x16xbf16>, vector<16x512xbf16>, vector<16x512xf32> -> vector<16x512xf32>
    %cst_63 = arith.constant dense<0.000000e+00> : vector<16x512xf32>
    %175 = tpu.matmul %162, %5, %cst_63 {dimension_numbers = #tpu.dot_dimension_numbers<[1], [0], [0], [1], [0, 0, 1, 1], [], []>} : vector<16x128xbf16>, vector<128x512xbf16>, vector<16x512xf32> -> vector<16x512xf32>
    %176 = arith.addf %174, %175 : vector<16x512xf32>
    %177 = arith.addf %176, %8 : vector<16x512xf32>
    %178 = vector.extract_strided_slice %177 {offsets = [0, 0], sizes = [16, 128], strides = [1, 1]} : vector<16x512xf32> to vector<16x128xf32>
    %cst_64 = arith.constant 5.000000e-01 : f32
    %179 = vector.broadcast %cst_64 : f32 to vector<16x128xf32>
    %180 = arith.mulf %179, %178 : vector<16x128xf32>
    %181 = math.tanh %180 : vector<16x128xf32>
    %cst_65 = arith.constant 5.000000e-01 : f32
    %182 = vector.broadcast %cst_65 : f32 to vector<16x128xf32>
    %183 = arith.mulf %182, %181 : vector<16x128xf32>
    %cst_66 = arith.constant 5.000000e-01 : f32
    %184 = vector.broadcast %cst_66 : f32 to vector<16x128xf32>
    %185 = arith.addf %183, %184 : vector<16x128xf32>
    %186 = vector.extract_strided_slice %177 {offsets = [0, 128], sizes = [16, 128], strides = [1, 1]} : vector<16x512xf32> to vector<16x128xf32>
    %cst_67 = arith.constant 5.000000e-01 : f32
    %187 = vector.broadcast %cst_67 : f32 to vector<16x128xf32>
    %188 = arith.mulf %187, %186 : vector<16x128xf32>
    %189 = math.tanh %188 : vector<16x128xf32>
    %cst_68 = arith.constant 5.000000e-01 : f32
    %190 = vector.broadcast %cst_68 : f32 to vector<16x128xf32>
    %191 = arith.mulf %190, %189 : vector<16x128xf32>
    %cst_69 = arith.constant 5.000000e-01 : f32
    %192 = vector.broadcast %cst_69 : f32 to vector<16x128xf32>
    %193 = arith.addf %191, %192 : vector<16x128xf32>
    %194 = vector.extract_strided_slice %177 {offsets = [0, 256], sizes = [16, 128], strides = [1, 1]} : vector<16x512xf32> to vector<16x128xf32>
    %195 = math.tanh %194 : vector<16x128xf32>
    %196 = vector.extract_strided_slice %177 {offsets = [0, 384], sizes = [16, 128], strides = [1, 1]} : vector<16x512xf32> to vector<16x128xf32>
    %cst_70 = arith.constant 5.000000e-01 : f32
    %197 = vector.broadcast %cst_70 : f32 to vector<16x128xf32>
    %198 = arith.mulf %197, %196 : vector<16x128xf32>
    %199 = math.tanh %198 : vector<16x128xf32>
    %cst_71 = arith.constant 5.000000e-01 : f32
    %200 = vector.broadcast %cst_71 : f32 to vector<16x128xf32>
    %201 = arith.mulf %200, %199 : vector<16x128xf32>
    %cst_72 = arith.constant 5.000000e-01 : f32
    %202 = vector.broadcast %cst_72 : f32 to vector<16x128xf32>
    %203 = arith.addf %201, %202 : vector<16x128xf32>
    %204 = arith.mulf %193, %163 : vector<16x128xf32>
    %205 = arith.mulf %185, %195 : vector<16x128xf32>
    %206 = arith.addf %204, %205 : vector<16x128xf32>
    %207 = math.tanh %206 : vector<16x128xf32>
    %208 = arith.mulf %203, %207 : vector<16x128xf32>
    %209 = arith.truncf %208 : vector<16x128xf32> to vector<16x128xbf16>
    %210 = arith.addi %9, %c3_i32 : i32
    %211 = vector.broadcast %210 : i32 to vector<16x1xi32>
    %212 = arith.cmpi slt, %211, %3 : vector<16x1xi32>
    %213 = vector.shape_cast %212 : vector<16x1xi1> to vector<16x1xi1>
    %214 = vector.broadcast %213 : vector<16x1xi1> to vector<16x128xi1>
    %215 = arith.select %214, %209, %162 : vector<16x128xi1>, vector<16x128xbf16>
    %216 = arith.select %214, %206, %163 : vector<16x128xi1>, vector<16x128xf32>
    %c0_i32_73 = arith.constant 0 : i32
    %217 = arith.sitofp %c0_i32_73 : i32 to bf16
    %218 = vector.broadcast %217 : bf16 to vector<16x128xbf16>
    %219 = arith.select %214, %209, %218 : vector<16x128xi1>, vector<16x128xbf16>
    %220 = arith.index_cast %c3_i32 : i32 to index
    %c0_74 = arith.constant 0 : index
    %c0_75 = arith.constant 0 : index
    %221 = vector.load %arg7[%220, %c0_74, %c0_75] : memref<8x16x128xbf16, #tpu.memory_space<vmem>>, vector<1x16x128xbf16>
    %222 = vector.shape_cast %221 : vector<1x16x128xbf16> to vector<16x128xbf16>
    %223 = vector.shape_cast %219 : vector<16x128xbf16> to vector<1x16x128xbf16>
    tpu.vector_store %arg7[%220, %c0_74, %c0_75], %223 {strides = array<i32>} : memref<8x16x128xbf16, #tpu.memory_space<vmem>>, vector<1x16x128xbf16>,
    %c4_i32 = arith.constant 4 : i32
    %224 = arith.index_cast %c4_i32 : i32 to index
    %c0_76 = arith.constant 0 : index
    %c0_77 = arith.constant 0 : index
    %225 = vector.load %arg3[%224, %c0_76, %c0_77] : memref<8x16x16xbf16, #tpu.memory_space<vmem>>, vector<1x16x16xbf16>
    %226 = vector.shape_cast %225 : vector<1x16x16xbf16> to vector<16x16xbf16>
    %cst_78 = arith.constant dense<0.000000e+00> : vector<16x512xf32>
    %227 = tpu.matmul %226, %4, %cst_78 {dimension_numbers = #tpu.dot_dimension_numbers<[1], [0], [0], [1], [0, 0, 1, 1], [], []>} : vector<16x16xbf16>, vector<16x512xbf16>, vector<16x512xf32> -> vector<16x512xf32>
    %cst_79 = arith.constant dense<0.000000e+00> : vector<16x512xf32>
    %228 = tpu.matmul %215, %5, %cst_79 {dimension_numbers = #tpu.dot_dimension_numbers<[1], [0], [0], [1], [0, 0, 1, 1], [], []>} : vector<16x128xbf16>, vector<128x512xbf16>, vector<16x512xf32> -> vector<16x512xf32>
    %229 = arith.addf %227, %228 : vector<16x512xf32>
    %230 = arith.addf %229, %8 : vector<16x512xf32>
    %231 = vector.extract_strided_slice %230 {offsets = [0, 0], sizes = [16, 128], strides = [1, 1]} : vector<16x512xf32> to vector<16x128xf32>
    %cst_80 = arith.constant 5.000000e-01 : f32
    %232 = vector.broadcast %cst_80 : f32 to vector<16x128xf32>
    %233 = arith.mulf %232, %231 : vector<16x128xf32>
    %234 = math.tanh %233 : vector<16x128xf32>
    %cst_81 = arith.constant 5.000000e-01 : f32
    %235 = vector.broadcast %cst_81 : f32 to vector<16x128xf32>
    %236 = arith.mulf %235, %234 : vector<16x128xf32>
    %cst_82 = arith.constant 5.000000e-01 : f32
    %237 = vector.broadcast %cst_82 : f32 to vector<16x128xf32>
    %238 = arith.addf %236, %237 : vector<16x128xf32>
    %239 = vector.extract_strided_slice %230 {offsets = [0, 128], sizes = [16, 128], strides = [1, 1]} : vector<16x512xf32> to vector<16x128xf32>
    %cst_83 = arith.constant 5.000000e-01 : f32
    %240 = vector.broadcast %cst_83 : f32 to vector<16x128xf32>
    %241 = arith.mulf %240, %239 : vector<16x128xf32>
    %242 = math.tanh %241 : vector<16x128xf32>
    %cst_84 = arith.constant 5.000000e-01 : f32
    %243 = vector.broadcast %cst_84 : f32 to vector<16x128xf32>
    %244 = arith.mulf %243, %242 : vector<16x128xf32>
    %cst_85 = arith.constant 5.000000e-01 : f32
    %245 = vector.broadcast %cst_85 : f32 to vector<16x128xf32>
    %246 = arith.addf %244, %245 : vector<16x128xf32>
    %247 = vector.extract_strided_slice %230 {offsets = [0, 256], sizes = [16, 128], strides = [1, 1]} : vector<16x512xf32> to vector<16x128xf32>
    %248 = math.tanh %247 : vector<16x128xf32>
    %249 = vector.extract_strided_slice %230 {offsets = [0, 384], sizes = [16, 128], strides = [1, 1]} : vector<16x512xf32> to vector<16x128xf32>
    %cst_86 = arith.constant 5.000000e-01 : f32
    %250 = vector.broadcast %cst_86 : f32 to vector<16x128xf32>
    %251 = arith.mulf %250, %249 : vector<16x128xf32>
    %252 = math.tanh %251 : vector<16x128xf32>
    %cst_87 = arith.constant 5.000000e-01 : f32
    %253 = vector.broadcast %cst_87 : f32 to vector<16x128xf32>
    %254 = arith.mulf %253, %252 : vector<16x128xf32>
    %cst_88 = arith.constant 5.000000e-01 : f32
    %255 = vector.broadcast %cst_88 : f32 to vector<16x128xf32>
    %256 = arith.addf %254, %255 : vector<16x128xf32>
    %257 = arith.mulf %246, %216 : vector<16x128xf32>
    %258 = arith.mulf %238, %248 : vector<16x128xf32>
    %259 = arith.addf %257, %258 : vector<16x128xf32>
    %260 = math.tanh %259 : vector<16x128xf32>
    %261 = arith.mulf %256, %260 : vector<16x128xf32>
    %262 = arith.truncf %261 : vector<16x128xf32> to vector<16x128xbf16>
    %263 = arith.addi %9, %c4_i32 : i32
    %264 = vector.broadcast %263 : i32 to vector<16x1xi32>
    %265 = arith.cmpi slt, %264, %3 : vector<16x1xi32>
    %266 = vector.shape_cast %265 : vector<16x1xi1> to vector<16x1xi1>
    %267 = vector.broadcast %266 : vector<16x1xi1> to vector<16x128xi1>
    %268 = arith.select %267, %262, %215 : vector<16x128xi1>, vector<16x128xbf16>
    %269 = arith.select %267, %259, %216 : vector<16x128xi1>, vector<16x128xf32>
    %c0_i32_89 = arith.constant 0 : i32
    %270 = arith.sitofp %c0_i32_89 : i32 to bf16
    %271 = vector.broadcast %270 : bf16 to vector<16x128xbf16>
    %272 = arith.select %267, %262, %271 : vector<16x128xi1>, vector<16x128xbf16>
    %273 = arith.index_cast %c4_i32 : i32 to index
    %c0_90 = arith.constant 0 : index
    %c0_91 = arith.constant 0 : index
    %274 = vector.load %arg7[%273, %c0_90, %c0_91] : memref<8x16x128xbf16, #tpu.memory_space<vmem>>, vector<1x16x128xbf16>
    %275 = vector.shape_cast %274 : vector<1x16x128xbf16> to vector<16x128xbf16>
    %276 = vector.shape_cast %272 : vector<16x128xbf16> to vector<1x16x128xbf16>
    tpu.vector_store %arg7[%273, %c0_90, %c0_91], %276 {strides = array<i32>} : memref<8x16x128xbf16, #tpu.memory_space<vmem>>, vector<1x16x128xbf16>,
    %c5_i32 = arith.constant 5 : i32
    %277 = arith.index_cast %c5_i32 : i32 to index
    %c0_92 = arith.constant 0 : index
    %c0_93 = arith.constant 0 : index
    %278 = vector.load %arg3[%277, %c0_92, %c0_93] : memref<8x16x16xbf16, #tpu.memory_space<vmem>>, vector<1x16x16xbf16>
    %279 = vector.shape_cast %278 : vector<1x16x16xbf16> to vector<16x16xbf16>
    %cst_94 = arith.constant dense<0.000000e+00> : vector<16x512xf32>
    %280 = tpu.matmul %279, %4, %cst_94 {dimension_numbers = #tpu.dot_dimension_numbers<[1], [0], [0], [1], [0, 0, 1, 1], [], []>} : vector<16x16xbf16>, vector<16x512xbf16>, vector<16x512xf32> -> vector<16x512xf32>
    %cst_95 = arith.constant dense<0.000000e+00> : vector<16x512xf32>
    %281 = tpu.matmul %268, %5, %cst_95 {dimension_numbers = #tpu.dot_dimension_numbers<[1], [0], [0], [1], [0, 0, 1, 1], [], []>} : vector<16x128xbf16>, vector<128x512xbf16>, vector<16x512xf32> -> vector<16x512xf32>
    %282 = arith.addf %280, %281 : vector<16x512xf32>
    %283 = arith.addf %282, %8 : vector<16x512xf32>
    %284 = vector.extract_strided_slice %283 {offsets = [0, 0], sizes = [16, 128], strides = [1, 1]} : vector<16x512xf32> to vector<16x128xf32>
    %cst_96 = arith.constant 5.000000e-01 : f32
    %285 = vector.broadcast %cst_96 : f32 to vector<16x128xf32>
    %286 = arith.mulf %285, %284 : vector<16x128xf32>
    %287 = math.tanh %286 : vector<16x128xf32>
    %cst_97 = arith.constant 5.000000e-01 : f32
    %288 = vector.broadcast %cst_97 : f32 to vector<16x128xf32>
    %289 = arith.mulf %288, %287 : vector<16x128xf32>
    %cst_98 = arith.constant 5.000000e-01 : f32
    %290 = vector.broadcast %cst_98 : f32 to vector<16x128xf32>
    %291 = arith.addf %289, %290 : vector<16x128xf32>
    %292 = vector.extract_strided_slice %283 {offsets = [0, 128], sizes = [16, 128], strides = [1, 1]} : vector<16x512xf32> to vector<16x128xf32>
    %cst_99 = arith.constant 5.000000e-01 : f32
    %293 = vector.broadcast %cst_99 : f32 to vector<16x128xf32>
    %294 = arith.mulf %293, %292 : vector<16x128xf32>
    %295 = math.tanh %294 : vector<16x128xf32>
    %cst_100 = arith.constant 5.000000e-01 : f32
    %296 = vector.broadcast %cst_100 : f32 to vector<16x128xf32>
    %297 = arith.mulf %296, %295 : vector<16x128xf32>
    %cst_101 = arith.constant 5.000000e-01 : f32
    %298 = vector.broadcast %cst_101 : f32 to vector<16x128xf32>
    %299 = arith.addf %297, %298 : vector<16x128xf32>
    %300 = vector.extract_strided_slice %283 {offsets = [0, 256], sizes = [16, 128], strides = [1, 1]} : vector<16x512xf32> to vector<16x128xf32>
    %301 = math.tanh %300 : vector<16x128xf32>
    %302 = vector.extract_strided_slice %283 {offsets = [0, 384], sizes = [16, 128], strides = [1, 1]} : vector<16x512xf32> to vector<16x128xf32>
    %cst_102 = arith.constant 5.000000e-01 : f32
    %303 = vector.broadcast %cst_102 : f32 to vector<16x128xf32>
    %304 = arith.mulf %303, %302 : vector<16x128xf32>
    %305 = math.tanh %304 : vector<16x128xf32>
    %cst_103 = arith.constant 5.000000e-01 : f32
    %306 = vector.broadcast %cst_103 : f32 to vector<16x128xf32>
    %307 = arith.mulf %306, %305 : vector<16x128xf32>
    %cst_104 = arith.constant 5.000000e-01 : f32
    %308 = vector.broadcast %cst_104 : f32 to vector<16x128xf32>
    %309 = arith.addf %307, %308 : vector<16x128xf32>
    %310 = arith.mulf %299, %269 : vector<16x128xf32>
    %311 = arith.mulf %291, %301 : vector<16x128xf32>
    %312 = arith.addf %310, %311 : vector<16x128xf32>
    %313 = math.tanh %312 : vector<16x128xf32>
    %314 = arith.mulf %309, %313 : vector<16x128xf32>
    %315 = arith.truncf %314 : vector<16x128xf32> to vector<16x128xbf16>
    %316 = arith.addi %9, %c5_i32 : i32
    %317 = vector.broadcast %316 : i32 to vector<16x1xi32>
    %318 = arith.cmpi slt, %317, %3 : vector<16x1xi32>
    %319 = vector.shape_cast %318 : vector<16x1xi1> to vector<16x1xi1>
    %320 = vector.broadcast %319 : vector<16x1xi1> to vector<16x128xi1>
    %321 = arith.select %320, %315, %268 : vector<16x128xi1>, vector<16x128xbf16>
    %322 = arith.select %320, %312, %269 : vector<16x128xi1>, vector<16x128xf32>
    %c0_i32_105 = arith.constant 0 : i32
    %323 = arith.sitofp %c0_i32_105 : i32 to bf16
    %324 = vector.broadcast %323 : bf16 to vector<16x128xbf16>
    %325 = arith.select %320, %315, %324 : vector<16x128xi1>, vector<16x128xbf16>
    %326 = arith.index_cast %c5_i32 : i32 to index
    %c0_106 = arith.constant 0 : index
    %c0_107 = arith.constant 0 : index
    %327 = vector.load %arg7[%326, %c0_106, %c0_107] : memref<8x16x128xbf16, #tpu.memory_space<vmem>>, vector<1x16x128xbf16>
    %328 = vector.shape_cast %327 : vector<1x16x128xbf16> to vector<16x128xbf16>
    %329 = vector.shape_cast %325 : vector<16x128xbf16> to vector<1x16x128xbf16>
    tpu.vector_store %arg7[%326, %c0_106, %c0_107], %329 {strides = array<i32>} : memref<8x16x128xbf16, #tpu.memory_space<vmem>>, vector<1x16x128xbf16>,
    %c6_i32 = arith.constant 6 : i32
    %330 = arith.index_cast %c6_i32 : i32 to index
    %c0_108 = arith.constant 0 : index
    %c0_109 = arith.constant 0 : index
    %331 = vector.load %arg3[%330, %c0_108, %c0_109] : memref<8x16x16xbf16, #tpu.memory_space<vmem>>, vector<1x16x16xbf16>
    %332 = vector.shape_cast %331 : vector<1x16x16xbf16> to vector<16x16xbf16>
    %cst_110 = arith.constant dense<0.000000e+00> : vector<16x512xf32>
    %333 = tpu.matmul %332, %4, %cst_110 {dimension_numbers = #tpu.dot_dimension_numbers<[1], [0], [0], [1], [0, 0, 1, 1], [], []>} : vector<16x16xbf16>, vector<16x512xbf16>, vector<16x512xf32> -> vector<16x512xf32>
    %cst_111 = arith.constant dense<0.000000e+00> : vector<16x512xf32>
    %334 = tpu.matmul %321, %5, %cst_111 {dimension_numbers = #tpu.dot_dimension_numbers<[1], [0], [0], [1], [0, 0, 1, 1], [], []>} : vector<16x128xbf16>, vector<128x512xbf16>, vector<16x512xf32> -> vector<16x512xf32>
    %335 = arith.addf %333, %334 : vector<16x512xf32>
    %336 = arith.addf %335, %8 : vector<16x512xf32>
    %337 = vector.extract_strided_slice %336 {offsets = [0, 0], sizes = [16, 128], strides = [1, 1]} : vector<16x512xf32> to vector<16x128xf32>
    %cst_112 = arith.constant 5.000000e-01 : f32
    %338 = vector.broadcast %cst_112 : f32 to vector<16x128xf32>
    %339 = arith.mulf %338, %337 : vector<16x128xf32>
    %340 = math.tanh %339 : vector<16x128xf32>
    %cst_113 = arith.constant 5.000000e-01 : f32
    %341 = vector.broadcast %cst_113 : f32 to vector<16x128xf32>
    %342 = arith.mulf %341, %340 : vector<16x128xf32>
    %cst_114 = arith.constant 5.000000e-01 : f32
    %343 = vector.broadcast %cst_114 : f32 to vector<16x128xf32>
    %344 = arith.addf %342, %343 : vector<16x128xf32>
    %345 = vector.extract_strided_slice %336 {offsets = [0, 128], sizes = [16, 128], strides = [1, 1]} : vector<16x512xf32> to vector<16x128xf32>
    %cst_115 = arith.constant 5.000000e-01 : f32
    %346 = vector.broadcast %cst_115 : f32 to vector<16x128xf32>
    %347 = arith.mulf %346, %345 : vector<16x128xf32>
    %348 = math.tanh %347 : vector<16x128xf32>
    %cst_116 = arith.constant 5.000000e-01 : f32
    %349 = vector.broadcast %cst_116 : f32 to vector<16x128xf32>
    %350 = arith.mulf %349, %348 : vector<16x128xf32>
    %cst_117 = arith.constant 5.000000e-01 : f32
    %351 = vector.broadcast %cst_117 : f32 to vector<16x128xf32>
    %352 = arith.addf %350, %351 : vector<16x128xf32>
    %353 = vector.extract_strided_slice %336 {offsets = [0, 256], sizes = [16, 128], strides = [1, 1]} : vector<16x512xf32> to vector<16x128xf32>
    %354 = math.tanh %353 : vector<16x128xf32>
    %355 = vector.extract_strided_slice %336 {offsets = [0, 384], sizes = [16, 128], strides = [1, 1]} : vector<16x512xf32> to vector<16x128xf32>
    %cst_118 = arith.constant 5.000000e-01 : f32
    %356 = vector.broadcast %cst_118 : f32 to vector<16x128xf32>
    %357 = arith.mulf %356, %355 : vector<16x128xf32>
    %358 = math.tanh %357 : vector<16x128xf32>
    %cst_119 = arith.constant 5.000000e-01 : f32
    %359 = vector.broadcast %cst_119 : f32 to vector<16x128xf32>
    %360 = arith.mulf %359, %358 : vector<16x128xf32>
    %cst_120 = arith.constant 5.000000e-01 : f32
    %361 = vector.broadcast %cst_120 : f32 to vector<16x128xf32>
    %362 = arith.addf %360, %361 : vector<16x128xf32>
    %363 = arith.mulf %352, %322 : vector<16x128xf32>
    %364 = arith.mulf %344, %354 : vector<16x128xf32>
    %365 = arith.addf %363, %364 : vector<16x128xf32>
    %366 = math.tanh %365 : vector<16x128xf32>
    %367 = arith.mulf %362, %366 : vector<16x128xf32>
    %368 = arith.truncf %367 : vector<16x128xf32> to vector<16x128xbf16>
    %369 = arith.addi %9, %c6_i32 : i32
    %370 = vector.broadcast %369 : i32 to vector<16x1xi32>
    %371 = arith.cmpi slt, %370, %3 : vector<16x1xi32>
    %372 = vector.shape_cast %371 : vector<16x1xi1> to vector<16x1xi1>
    %373 = vector.broadcast %372 : vector<16x1xi1> to vector<16x128xi1>
    %374 = arith.select %373, %368, %321 : vector<16x128xi1>, vector<16x128xbf16>
    %375 = arith.select %373, %365, %322 : vector<16x128xi1>, vector<16x128xf32>
    %c0_i32_121 = arith.constant 0 : i32
    %376 = arith.sitofp %c0_i32_121 : i32 to bf16
    %377 = vector.broadcast %376 : bf16 to vector<16x128xbf16>
    %378 = arith.select %373, %368, %377 : vector<16x128xi1>, vector<16x128xbf16>
    %379 = arith.index_cast %c6_i32 : i32 to index
    %c0_122 = arith.constant 0 : index
    %c0_123 = arith.constant 0 : index
    %380 = vector.load %arg7[%379, %c0_122, %c0_123] : memref<8x16x128xbf16, #tpu.memory_space<vmem>>, vector<1x16x128xbf16>
    %381 = vector.shape_cast %380 : vector<1x16x128xbf16> to vector<16x128xbf16>
    %382 = vector.shape_cast %378 : vector<16x128xbf16> to vector<1x16x128xbf16>
    tpu.vector_store %arg7[%379, %c0_122, %c0_123], %382 {strides = array<i32>} : memref<8x16x128xbf16, #tpu.memory_space<vmem>>, vector<1x16x128xbf16>,
    %c7_i32 = arith.constant 7 : i32
    %383 = arith.index_cast %c7_i32 : i32 to index
    %c0_124 = arith.constant 0 : index
    %c0_125 = arith.constant 0 : index
    %384 = vector.load %arg3[%383, %c0_124, %c0_125] : memref<8x16x16xbf16, #tpu.memory_space<vmem>>, vector<1x16x16xbf16>
    %385 = vector.shape_cast %384 : vector<1x16x16xbf16> to vector<16x16xbf16>
    %cst_126 = arith.constant dense<0.000000e+00> : vector<16x512xf32>
    %386 = tpu.matmul %385, %4, %cst_126 {dimension_numbers = #tpu.dot_dimension_numbers<[1], [0], [0], [1], [0, 0, 1, 1], [], []>} : vector<16x16xbf16>, vector<16x512xbf16>, vector<16x512xf32> -> vector<16x512xf32>
    %cst_127 = arith.constant dense<0.000000e+00> : vector<16x512xf32>
    %387 = tpu.matmul %374, %5, %cst_127 {dimension_numbers = #tpu.dot_dimension_numbers<[1], [0], [0], [1], [0, 0, 1, 1], [], []>} : vector<16x128xbf16>, vector<128x512xbf16>, vector<16x512xf32> -> vector<16x512xf32>
    %388 = arith.addf %386, %387 : vector<16x512xf32>
    %389 = arith.addf %388, %8 : vector<16x512xf32>
    %390 = vector.extract_strided_slice %389 {offsets = [0, 0], sizes = [16, 128], strides = [1, 1]} : vector<16x512xf32> to vector<16x128xf32>
    %cst_128 = arith.constant 5.000000e-01 : f32
    %391 = vector.broadcast %cst_128 : f32 to vector<16x128xf32>
    %392 = arith.mulf %391, %390 : vector<16x128xf32>
    %393 = math.tanh %392 : vector<16x128xf32>
    %cst_129 = arith.constant 5.000000e-01 : f32
    %394 = vector.broadcast %cst_129 : f32 to vector<16x128xf32>
    %395 = arith.mulf %394, %393 : vector<16x128xf32>
    %cst_130 = arith.constant 5.000000e-01 : f32
    %396 = vector.broadcast %cst_130 : f32 to vector<16x128xf32>
    %397 = arith.addf %395, %396 : vector<16x128xf32>
    %398 = vector.extract_strided_slice %389 {offsets = [0, 128], sizes = [16, 128], strides = [1, 1]} : vector<16x512xf32> to vector<16x128xf32>
    %cst_131 = arith.constant 5.000000e-01 : f32
    %399 = vector.broadcast %cst_131 : f32 to vector<16x128xf32>
    %400 = arith.mulf %399, %398 : vector<16x128xf32>
    %401 = math.tanh %400 : vector<16x128xf32>
    %cst_132 = arith.constant 5.000000e-01 : f32
    %402 = vector.broadcast %cst_132 : f32 to vector<16x128xf32>
    %403 = arith.mulf %402, %401 : vector<16x128xf32>
    %cst_133 = arith.constant 5.000000e-01 : f32
    %404 = vector.broadcast %cst_133 : f32 to vector<16x128xf32>
    %405 = arith.addf %403, %404 : vector<16x128xf32>
    %406 = vector.extract_strided_slice %389 {offsets = [0, 256], sizes = [16, 128], strides = [1, 1]} : vector<16x512xf32> to vector<16x128xf32>
    %407 = math.tanh %406 : vector<16x128xf32>
    %408 = vector.extract_strided_slice %389 {offsets = [0, 384], sizes = [16, 128], strides = [1, 1]} : vector<16x512xf32> to vector<16x128xf32>
    %cst_134 = arith.constant 5.000000e-01 : f32
    %409 = vector.broadcast %cst_134 : f32 to vector<16x128xf32>
    %410 = arith.mulf %409, %408 : vector<16x128xf32>
    %411 = math.tanh %410 : vector<16x128xf32>
    %cst_135 = arith.constant 5.000000e-01 : f32
    %412 = vector.broadcast %cst_135 : f32 to vector<16x128xf32>
    %413 = arith.mulf %412, %411 : vector<16x128xf32>
    %cst_136 = arith.constant 5.000000e-01 : f32
    %414 = vector.broadcast %cst_136 : f32 to vector<16x128xf32>
    %415 = arith.addf %413, %414 : vector<16x128xf32>
    %416 = arith.mulf %405, %375 : vector<16x128xf32>
    %417 = arith.mulf %397, %407 : vector<16x128xf32>
    %418 = arith.addf %416, %417 : vector<16x128xf32>
    %419 = math.tanh %418 : vector<16x128xf32>
    %420 = arith.mulf %415, %419 : vector<16x128xf32>
    %421 = arith.truncf %420 : vector<16x128xf32> to vector<16x128xbf16>
    %422 = arith.addi %9, %c7_i32 : i32
    %423 = vector.broadcast %422 : i32 to vector<16x1xi32>
    %424 = arith.cmpi slt, %423, %3 : vector<16x1xi32>
    %425 = vector.shape_cast %424 : vector<16x1xi1> to vector<16x1xi1>
    %426 = vector.broadcast %425 : vector<16x1xi1> to vector<16x128xi1>
    %427 = arith.select %426, %421, %374 : vector<16x128xi1>, vector<16x128xbf16>
    %428 = arith.select %426, %418, %375 : vector<16x128xi1>, vector<16x128xf32>
    %c0_i32_137 = arith.constant 0 : i32
    %429 = arith.sitofp %c0_i32_137 : i32 to bf16
    %430 = vector.broadcast %429 : bf16 to vector<16x128xbf16>
    %431 = arith.select %426, %421, %430 : vector<16x128xi1>, vector<16x128xbf16>
    %432 = arith.index_cast %c7_i32 : i32 to index
    %c0_138 = arith.constant 0 : index
    %c0_139 = arith.constant 0 : index
    %433 = vector.load %arg7[%432, %c0_138, %c0_139] : memref<8x16x128xbf16, #tpu.memory_space<vmem>>, vector<1x16x128xbf16>
    %434 = vector.shape_cast %433 : vector<1x16x128xbf16> to vector<16x128xbf16>
    %435 = vector.shape_cast %431 : vector<16x128xbf16> to vector<1x16x128xbf16>
    tpu.vector_store %arg7[%432, %c0_138, %c0_139], %435 {strides = array<i32>} : memref<8x16x128xbf16, #tpu.memory_space<vmem>>, vector<1x16x128xbf16>,
    %c8_i32_140 = arith.constant 8 : i32
    %c0_141 = arith.constant 0 : index
    %c0_142 = arith.constant 0 : index
    %436 = vector.load %arg10[%c0_141, %c0_142] : memref<16x128xbf16, #tpu.memory_space<vmem>>, vector<16x128xbf16>
    tpu.vector_store %arg10[%c0_141, %c0_142], %427 {strides = array<i32>} : memref<16x128xbf16, #tpu.memory_space<vmem>>, vector<16x128xbf16>,
    %c0_143 = arith.constant 0 : index
    %c0_144 = arith.constant 0 : index
    %437 = vector.load %arg11[%c0_143, %c0_144] : memref<16x128xf32, #tpu.memory_space<vmem>>, vector<16x128xf32>
    tpu.vector_store %arg11[%c0_143, %c0_144], %428 {strides = array<i32>} : memref<16x128xf32, #tpu.memory_space<vmem>>, vector<16x128xf32>,
    %c1_i32_145 = arith.constant 1 : i32
    %438 = arith.cmpi eq, %arg1, %c1_i32_145 : i32
    %439 = arith.extui %438 : i1 to i32
    %c0_i32_146 = arith.constant 0 : i32
    %440 = arith.cmpi ne, %439, %c0_i32_146 : i32
    scf.if %440 {
      %441 = arith.extf %427 : vector<16x128xbf16> to vector<16x128xf32>
      %c0_147 = arith.constant 0 : index
      %c0_148 = arith.constant 0 : index
      %442 = vector.load %arg8[%c0_147, %c0_148] : memref<16x128xf32, #tpu.memory_space<vmem>>, vector<16x128xf32>
      tpu.vector_store %arg8[%c0_147, %c0_148], %441 {strides = array<i32>} : memref<16x128xf32, #tpu.memory_space<vmem>>, vector<16x128xf32>,
      %c0_149 = arith.constant 0 : index
      %c0_150 = arith.constant 0 : index
      %443 = vector.load %arg9[%c0_149, %c0_150] : memref<16x128xf32, #tpu.memory_space<vmem>>, vector<16x128xf32>
      tpu.vector_store %arg9[%c0_149, %c0_150], %428 {strides = array<i32>} : memref<16x128xf32, #tpu.memory_space<vmem>>, vector<16x128xf32>,
    } else {
    }
    return
  }
  func.func @transform_0(%arg0: i32, %arg1: i32) -> (i32, i32) {
    %c0_i32 = arith.constant 0 : i32
    %c0_i32_0 = arith.constant 0 : i32
    return %arg0, %c0_i32 : i32, i32
  }
  func.func @transform_1(%arg0: i32, %arg1: i32) -> (i32, i32, i32) {
    %c0_i32 = arith.constant 0 : i32
    %c0_i32_0 = arith.constant 0 : i32
    return %arg1, %arg0, %c0_i32 : i32, i32, i32
  }
  func.func @transform_2(%arg0: i32, %arg1: i32) -> (i32, i32) {
    %c0_i32 = arith.constant 0 : i32
    %c0_i32_0 = arith.constant 0 : i32
    %c0_i32_1 = arith.constant 0 : i32
    return %c0_i32, %c0_i32_0 : i32, i32
  }
  func.func @transform_3(%arg0: i32, %arg1: i32) -> (i32, i32) {
    %c0_i32 = arith.constant 0 : i32
    %c0_i32_0 = arith.constant 0 : i32
    %c0_i32_1 = arith.constant 0 : i32
    return %c0_i32, %c0_i32_0 : i32, i32
  }
  func.func @transform_4(%arg0: i32, %arg1: i32) -> (i32, i32) {
    %c0_i32 = arith.constant 0 : i32
    %c0_i32_0 = arith.constant 0 : i32
    %c0_i32_1 = arith.constant 0 : i32
    return %c0_i32, %c0_i32_0 : i32, i32
  }
  func.func @transform_5(%arg0: i32, %arg1: i32) -> (i32, i32, i32) {
    %c0_i32 = arith.constant 0 : i32
    %c0_i32_0 = arith.constant 0 : i32
    return %arg1, %arg0, %c0_i32 : i32, i32, i32
  }
  func.func @transform_6(%arg0: i32, %arg1: i32) -> (i32, i32) {
    %c0_i32 = arith.constant 0 : i32
    %c0_i32_0 = arith.constant 0 : i32
    return %arg0, %c0_i32 : i32, i32
  }
  func.func @transform_7(%arg0: i32, %arg1: i32) -> (i32, i32) {
    %c0_i32 = arith.constant 0 : i32
    %c0_i32_0 = arith.constant 0 : i32
    return %arg0, %c0_i32 : i32, i32
  }
}

</mosaic_0001>

<llo_original>
// kernel: tpu_custom_call.1
$region0: #{tpu_custom_call.1}
  #allocation0 [shape = 'u32[]', space=smem, size = 0x4, offset = 0x4, fixed_abs, tag = 'smem constant byte address 0x4 - core index']
  #allocation1 [shape = 'u32[144,128]{1,0:T(1,128)}', space=vmem, size = 0x12000, scoped, tag = 'internal scratch']
  #allocation2 [shape = 'bf16[16,128]{1,0:T(16,128)(2,1)}', space=vmem, size = 0x1000, scoped, tag = 'scratch operand']
  #allocation3 [shape = 'f32[16,128]{1,0:T(8,128)}', space=vmem, size = 0x2000, scoped, tag = 'scratch operand']
  %s0 = inlined_call_operand.vmem [shape: s32[16,1], index: 0, kind: input, shape index: {}]
  %s1 = inlined_call_operand.hbm [shape: bf16[16,16,16], index: 1, kind: input, shape index: {}]
  %s2 = inlined_call_operand.hbm [shape: bf16[16,512], index: 2, kind: input, shape index: {}]
  %s3 = inlined_call_operand.hbm [shape: bf16[128,512], index: 3, kind: input, shape index: {}]
  %s4 = inlined_call_operand.vmem [shape: f32[1,512], index: 4, kind: input, shape index: {}]
  %s5 = inlined_call_operand.hbm [shape: bf16[16,16,128], index: 5, kind: output, shape index: {0}]
  %s6 = inlined_call_operand.hbm [shape: f32[16,128], index: 6, kind: output, shape index: {1}]
  %s7 = inlined_call_operand.hbm [shape: f32[16,128], index: 7, kind: output, shape index: {2}]
  %8 = xla_tuple %s5, %s6, %s7
  %s9 = sld [smem:[#allocation0]]
  $region89: #{tpu_custom_call.1} parent=0
    _
  %s11 = ssub.s32 1, %s9
  %s12 = scalar_select 0, %s11, %s9
  $region1: #{tpu_custom_call.1} parent=0
    #allocation4 [shape = 'u8[65536]{0}', space=vmem, size = 0x10000, scoped, tag = 'input window, operand 1']
    #allocation5 [shape = 's32[2]{0}', space=sflag, size = 0x8, scoped, tag = 'scoped memory for tpu_custom_call.1']
    #allocation6 [shape = 's32[2]{0}', space=sflag, size = 0x8, scoped, tag = 'scoped memory for tpu_custom_call.1']
    #allocation7 [shape = 'u8[16384]{0}', space=vmem, size = 0x4000, scoped, tag = 'input window, operand 2, single buffered']
    #allocation8 [shape = 's32[1]{0}', space=sflag, size = 0x4, scoped, tag = 'scoped memory for tpu_custom_call.1']
    #allocation9 [shape = 'u8[131072]{0}', space=vmem, size = 0x20000, scoped, tag = 'input window, operand 3, single buffered']
    #allocation10 [shape = 'u8[65536]{0}', space=vmem, size = 0x10000, scoped, tag = 'output window, operand 0']
    #allocation11 [shape = 'u8[8192]{0}', space=vmem, size = 0x2000, scoped, tag = 'output window, operand 1, single buffered']
    #allocation12 [shape = 's32[1]{0}', space=sflag, size = 0x4, scoped, tag = 'scoped memory for tpu_custom_call.1']
    #allocation13 [shape = 'u8[8192]{0}', space=vmem, size = 0x2000, scoped, tag = 'output window, operand 2, single buffered']
    %13 = vsyncpa [#allocation5], 0
    %s14 = scalar_lea.sflag [#allocation5], 1
    %15 = vsyncpa %s14, 0
    %16 = vsyncpa [#allocation8], 0
    %17 = vsyncpa [#allocation6], 0
    %s18 = scalar_lea.sflag [#allocation6], 1
    %19 = vsyncpa %s18, 0
    %20 = vsyncpa [#allocation12], 0
    loop: start=0, step=1, limit=4
    $region2: #{tpu_custom_call.1} parent=1 // loop_pre_header
      _
    $region3: #{tpu_custom_call.1} parent=1 // loop_header
      %s22 = sphi 0, %s26
      %p23 = scmp.ge.s32.totalorder %s22, 4
      %s29 = sphi 0, %s41
      %s30 = sphi 0, %s37
      %s31 = sphi 0, %s29
      %s32 = sphi 0, %s30
      %s33 = sphi 0, %s31
      %s34 = sphi 0, %s32
      %s44 = sphi 0, %s46
      %s47 = sphi 0, %s44
      %s48 = sphi 0, %s47
      %s64 = sphi 0, %s48
      %s72 = sphi 0, %s74
      %s75 = sphi 0, %s72
      %s76 = sphi 0, %s75
      %s92 = sphi 0, %s76
      %s96 = sphi 0, %s96
      %s98 = sphi 0, %s96
      %s99 = sphi 0, %s98
      %s113 = sphi 0, %s99
      %s117 = sphi 0, %s117
      %s119 = sphi 0, %s117
      %s120 = sphi 0, %s119
      %s134 = sphi 0, %s120
      %s138 = sphi 0, %s138
      %s140 = sphi 0, %s138
      %s141 = sphi 0, %s140
      %s155 = sphi 0, %s141
      %s163 = sphi 0, %s165
      %s166 = sphi 0, %s163
      %s167 = sphi 0, %s166
      %s183 = sphi 0, %s167
      %s189 = sphi 0, %s191
      %s192 = sphi 0, %s189
      %s193 = sphi 0, %s192
      %s209 = sphi 0, %s193
      %s215 = sphi 0, %s217
      %s218 = sphi 0, %s215
      %s219 = sphi 0, %s218
      %s235 = sphi 0, %s219
    $region4: #{tpu_custom_call.1} parent=1 // loop_header_branch
      %25 = sbr.rel (%p23) target = $region8
    $region5: #{tpu_custom_call.1} parent=1 // loop_body
      %s27 = ssub.s32 %s22, 1
      %s28 = ssub.s32 %s22, 2
      %s35 = sadd.s32 1, %s30
      %p36 = scmp.ge.s32.totalorder %s35, 2
      %s37 = scalar_select %p36, 0, %s35
      %s38 = sadd.s32 1, %s29
      %s39 = scalar_select %p36, %s38, %s29
      %p40 = scmp.ge.s32.totalorder %s39, 1
      %s41 = scalar_select %p40, 0, %s39
      %s42 = ssub.s32 %s29, %s41
      %p43 = scmp.eq.s32.totalorder %s42, 0
      %s45 = sadd.s32 %s44, 1
      %s46 = scalar_select %p43, %s44, %s45
      %p49 = pneg %p43
      %p50 = scmp.eq.s32.totalorder %s22, 1
      %p51 = por %p49, %p50
      %p52 = scmp.ne.s32.totalorder %s44, %s47
      %p53 = scmp.eq.s32.totalorder %s22, 0
      %p54 = por %p52, %p53
      %p55 = scmp.ne.s32.totalorder %s44, %s47
      %p56 = scmp.eq.s32.totalorder %s27, 1
      %p57 = por %p55, %p56
      %p58 = scmp.ne.s32.totalorder %s47, %s48
      %p59 = scmp.eq.s32.totalorder %s27, 0
      %p60 = por %p58, %p59
      %p61 = scmp.ne.s32.totalorder %s47, %s48
      %p62 = scmp.eq.s32.totalorder %s28, 1
      %p63 = por %p61, %p62
      %p65 = scmp.ne.s32.totalorder %s48, %s64
      %p66 = scmp.eq.s32.totalorder %s28, 0
      %p67 = por %p65, %p66
      %s68 = ssub.s32 %s30, %s37
      %s69 = ssub.s32 %s29, %s41
      %s70 = sor.u32 %s68, %s69
      %p71 = scmp.eq.s32.totalorder %s70, 0
      %s73 = sadd.s32 %s72, 1
      %s74 = scalar_select %p71, %s72, %s73
      %p77 = pneg %p71
      %p78 = scmp.eq.s32.totalorder %s22, 1
      %p79 = por %p77, %p78
      %p80 = scmp.ne.s32.totalorder %s72, %s75
      %p81 = scmp.eq.s32.totalorder %s22, 0
      %p82 = por %p80, %p81
      %p83 = scmp.ne.s32.totalorder %s72, %s75
      %p84 = scmp.eq.s32.totalorder %s27, 1
      %p85 = por %p83, %p84
      %p86 = scmp.ne.s32.totalorder %s75, %s76
      %p87 = scmp.eq.s32.totalorder %s27, 0
      %p88 = por %p86, %p87
      %p89 = scmp.ne.s32.totalorder %s75, %s76
      %p90 = scmp.eq.s32.totalorder %s28, 1
      %p91 = por %p89, %p90
      %p93 = scmp.ne.s32.totalorder %s76, %s92
      %p94 = scmp.eq.s32.totalorder %s28, 0
      %p95 = por %p93, %p94
      %s97 = sadd.s32 %s96, 1
      %p100 = scmp.eq.s32.totalorder %s22, 1
      %p101 = scmp.ne.s32.totalorder %s96, %s98
      %p102 = scmp.eq.s32.totalorder %s22, 0
      %p103 = por %p101, %p102
      %p104 = scmp.ne.s32.totalorder %s96, %s98
      %p105 = scmp.eq.s32.totalorder %s27, 1
      %p106 = por %p104, %p105
      %p107 = scmp.ne.s32.totalorder %s98, %s99
      %p108 = scmp.eq.s32.totalorder %s27, 0
      %p109 = por %p107, %p108
      %p110 = scmp.ne.s32.totalorder %s98, %s99
      %p111 = scmp.eq.s32.totalorder %s28, 1
      %p112 = por %p110, %p111
      %p114 = scmp.ne.s32.totalorder %s99, %s113
      %p115 = scmp.eq.s32.totalorder %s28, 0
      %p116 = por %p114, %p115
      %s118 = sadd.s32 %s117, 1
      %p121 = scmp.eq.s32.totalorder %s22, 1
      %p122 = scmp.ne.s32.totalorder %s117, %s119
      %p123 = scmp.eq.s32.totalorder %s22, 0
      %p124 = por %p122, %p123
      %p125 = scmp.ne.s32.totalorder %s117, %s119
      %p126 = scmp.eq.s32.totalorder %s27, 1
      %p127 = por %p125, %p126
      %p128 = scmp.ne.s32.totalorder %s119, %s120
      %p129 = scmp.eq.s32.totalorder %s27, 0
      %p130 = por %p128, %p129
      %p131 = scmp.ne.s32.totalorder %s119, %s120
      %p132 = scmp.eq.s32.totalorder %s28, 1
      %p133 = por %p131, %p132
      %p135 = scmp.ne.s32.totalorder %s120, %s134
      %p136 = scmp.eq.s32.totalorder %s28, 0
      %p137 = por %p135, %p136
      %s139 = sadd.s32 %s138, 1
      %p142 = scmp.eq.s32.totalorder %s22, 1
      %p143 = scmp.ne.s32.totalorder %s138, %s140
      %p144 = scmp.eq.s32.totalorder %s22, 0
      %p145 = por %p143, %p144
      %p146 = scmp.ne.s32.totalorder %s138, %s140
      %p147 = scmp.eq.s32.totalorder %s27, 1
      %p148 = por %p146, %p147
      %p149 = scmp.ne.s32.totalorder %s140, %s141
      %p150 = scmp.eq.s32.totalorder %s27, 0
      %p151 = por %p149, %p150
      %p152 = scmp.ne.s32.totalorder %s140, %s141
      %p153 = scmp.eq.s32.totalorder %s28, 1
      %p154 = por %p152, %p153
      %p156 = scmp.ne.s32.totalorder %s141, %s155
      %p157 = scmp.eq.s32.totalorder %s28, 0
      %p158 = por %p156, %p157
      %s159 = ssub.s32 %s30, %s37
      %s160 = ssub.s32 %s29, %s41
      %s161 = sor.u32 %s159, %s160
      %p162 = scmp.eq.s32.totalorder %s161, 0
      %s164 = sadd.s32 %s163, 1
      %s165 = scalar_select %p162, %s163, %s164
      %p168 = pneg %p162
      %p169 = scmp.eq.s32.totalorder %s22, 1
      %p170 = por %p168, %p169
      %p171 = scmp.ne.s32.totalorder %s163, %s166
      %p172 = scmp.eq.s32.totalorder %s22, 0
      %p173 = por %p171, %p172
      %p174 = scmp.ne.s32.totalorder %s163, %s166
      %p175 = scmp.eq.s32.totalorder %s27, 1
      %p176 = por %p174, %p175
      %p177 = scmp.ne.s32.totalorder %s166, %s167
      %p178 = scmp.eq.s32.totalorder %s27, 0
      %p179 = por %p177, %p178
      %p180 = scmp.ne.s32.totalorder %s166, %s167
      %p181 = scmp.eq.s32.totalorder %s28, 1
      %p182 = por %p180, %p181
      %p184 = scmp.ne.s32.totalorder %s167, %s183
      %p185 = scmp.eq.s32.totalorder %s28, 0
      %p186 = por %p184, %p185
      %s187 = ssub.s32 %s29, %s41
      %p188 = scmp.eq.s32.totalorder %s187, 0
      %s190 = sadd.s32 %s189, 1
      %s191 = scalar_select %p188, %s189, %s190
      %p194 = pneg %p188
      %p195 = scmp.eq.s32.totalorder %s22, 1
      %p196 = por %p194, %p195
      %p197 = scmp.ne.s32.totalorder %s189, %s192
      %p198 = scmp.eq.s32.totalorder %s22, 0
      %p199 = por %p197, %p198
      %p200 = scmp.ne.s32.totalorder %s189, %s192
      %p201 = scmp.eq.s32.totalorder %s27, 1
      %p202 = por %p200, %p201
      %p203 = scmp.ne.s32.totalorder %s192, %s193
      %p204 = scmp.eq.s32.totalorder %s27, 0
      %p205 = por %p203, %p204
      %p206 = scmp.ne.s32.totalorder %s192, %s193
      %p207 = scmp.eq.s32.totalorder %s28, 1
      %p208 = por %p206, %p207
      %p210 = scmp.ne.s32.totalorder %s193, %s209
      %p211 = scmp.eq.s32.totalorder %s28, 0
      %p212 = por %p210, %p211
      %s213 = ssub.s32 %s29, %s41
      %p214 = scmp.eq.s32.totalorder %s213, 0
      %s216 = sadd.s32 %s215, 1
      %s217 = scalar_select %p214, %s215, %s216
      %p220 = pneg %p214
      %p221 = scmp.eq.s32.totalorder %s22, 1
      %p222 = por %p220, %p221
      %p223 = scmp.ne.s32.totalorder %s215, %s218
      %p224 = scmp.eq.s32.totalorder %s22, 0
      %p225 = por %p223, %p224
      %p226 = scmp.ne.s32.totalorder %s215, %s218
      %p227 = scmp.eq.s32.totalorder %s27, 1
      %p228 = por %p226, %p227
      %p229 = scmp.ne.s32.totalorder %s218, %s219
      %p230 = scmp.eq.s32.totalorder %s27, 0
      %p231 = por %p229, %p230
      %p232 = scmp.ne.s32.totalorder %s218, %s219
      %p233 = scmp.eq.s32.totalorder %s28, 1
      %p234 = por %p232, %p233
      %p236 = scmp.ne.s32.totalorder %s219, %s235
      %p237 = scmp.eq.s32.totalorder %s28, 0
      %p238 = por %p236, %p237
      %p239 = scmp.le.s32.totalorder 1, %s22
      %p240 = scmp.lt.s32.totalorder %s22, 3
      %p241 = pnand %p239, %p240
      %p242 = pneg %p241
      // Predicated region
      $region9: #{tpu_custom_call.1} parent=5 // pred_check
        _
      $region10: #{tpu_custom_call.1} parent=5 // pred_check_branch
        %244 = sbr.rel (%p241) target = $region12
      $region11: #{tpu_custom_call.1} parent=5 // pred_region
        %s245 = ssub.s32 %s22, 1
        // Predicated region
        $region13: #{tpu_custom_call.1} parent=11 // pred_check
          %p246 = pneg %p60
        $region14: #{tpu_custom_call.1} parent=11 // pred_check_branch
          %248 = sbr.rel (%p246) target = $region16
        $region15: #{tpu_custom_call.1} parent=11 // pred_region
          %s249 = smul.u32 2, %s31
          %p250 = scmp.lt.s32.totalorder %s249, 1
          %s251 = scalar_select %p250, %s249, 1
          %s252 = smul.addr %s251, 8
          %s253 = scalar_lea.vmem %s0, %s252
          %s254 = smul.u32 2, %s31
        $region16: #{tpu_custom_call.1} parent=11 // pred_fallthru
          _
        // Predicated region
        $region17: #{tpu_custom_call.1} parent=11 // pred_check
          %p255 = pneg %p109
        $region18: #{tpu_custom_call.1} parent=11 // pred_check_branch
          %257 = sbr.rel (%p255) target = $region20
        $region19: #{tpu_custom_call.1} parent=11 // pred_region
          %s259 = ssub.s32 512, 512
          %260 = vsyncadd [#allocation8], %s259
          %s261 = sshll.u32 [#allocation7], 4
          %s262 = int_to_ptr.vmem [resolvable:$true] %s261
          %267 = dma.hbm_to_vmem [thread:$0]  %s2, 512, %s262, [#allocation8], 256, 256, 16
        $region20: #{tpu_custom_call.1} parent=11 // pred_fallthru
          _
        // Predicated region
        $region21: #{tpu_custom_call.1} parent=11 // pred_check
          %p268 = pneg %p130
        $region22: #{tpu_custom_call.1} parent=11 // pred_check_branch
          %270 = sbr.rel (%p268) target = $region24
        $region23: #{tpu_custom_call.1} parent=11 // pred_region
          %s272 = ssub.s32 4096, 4096
          %273 = vsyncadd [#allocation8], %s272
          %s274 = sshll.u32 [#allocation9], 4
          %s275 = int_to_ptr.vmem [resolvable:$true] %s274
          %280 = dma.hbm_to_vmem [thread:$0]  %s3, 4096, %s275, [#allocation8], 256, 256, 16
        $region24: #{tpu_custom_call.1} parent=11 // pred_fallthru
          _
        // Predicated region
        $region25: #{tpu_custom_call.1} parent=11 // pred_check
          %p281 = pneg %p151
        $region26: #{tpu_custom_call.1} parent=11 // pred_check_branch
          %283 = sbr.rel (%p281) target = $region28
        $region27: #{tpu_custom_call.1} parent=11 // pred_region
          _
        $region28: #{tpu_custom_call.1} parent=11 // pred_fallthru
          _
      $region12: #{tpu_custom_call.1} parent=5 // pred_fallthru
        _
      %p284 = scmp.lt.s32.totalorder %s22, 2
      // Predicated region
      $region29: #{tpu_custom_call.1} parent=5 // pred_check
        %p285 = pneg %p284
      $region30: #{tpu_custom_call.1} parent=5 // pred_check_branch
        %287 = sbr.rel (%p285) target = $region32
      $region31: #{tpu_custom_call.1} parent=5 // pred_region
        // Predicated region
        $region33: #{tpu_custom_call.1} parent=31 // pred_check
          %p288 = pneg %p82
        $region34: #{tpu_custom_call.1} parent=31 // pred_check_branch
          %290 = sbr.rel (%p288) target = $region36
        $region35: #{tpu_custom_call.1} parent=31 // pred_region
          %s291 = sand.u32 %s72, 1
          %s292 = scalar_lea.sflag [#allocation5], %s291
          %s293 = sand.u32 %s72, 1
          %s294 = smul.addr %s293, 64
          %s295 = scalar_lea.vmem [#allocation4], %s294
          %s296 = smul.u32 8, %s30
          %s297 = smul.u32 2, %s29
          %s299 = ssub.s32 1024, 1024
          %300 = vsyncadd %s292, %s299
          %s301 = smul.addr %s296, 2
          %s302 = sadd.s32 %s297, %s301
          %s303 = smul.addr %s302, 64
          %s304 = scalar_lea.hbm %s1, %s303
          %s305 = sshll.u32 %s295, 4
          %s306 = int_to_ptr.vmem [resolvable:$true] %s305
          %311 = dma.hbm_to_vmem [thread:$0]  %s304, 1024, %s306, %s292, 64, 64, 4
        $region36: #{tpu_custom_call.1} parent=31 // pred_fallthru
          _
      $region32: #{tpu_custom_call.1} parent=5 // pred_fallthru
        _
      %p312 = scmp.le.s32.totalorder 1, %s22
      %p313 = scmp.lt.s32.totalorder %s22, 3
      %p314 = pnand %p312, %p313
      %p315 = pneg %p314
      // Predicated region
      $region37: #{tpu_custom_call.1} parent=5 // pred_check
        _
      $region38: #{tpu_custom_call.1} parent=5 // pred_check_branch
        %317 = sbr.rel (%p314) target = $region40
      $region39: #{tpu_custom_call.1} parent=5 // pred_region
        %s318 = ssub.s32 %s22, 1
        %s319 = sand.u32 %s75, 1
        %s320 = scalar_lea.sflag [#allocation5], %s319
        %s321 = sand.u32 %s75, 1
        %s322 = smul.addr %s321, 64
        %s323 = scalar_lea.vmem [#allocation4], %s322
        // Predicated region
        $region41: #{tpu_custom_call.1} parent=39 // pred_check
          %p324 = pneg %p88
        $region42: #{tpu_custom_call.1} parent=39 // pred_check_branch
          %326 = sbr.rel (%p324) target = $region44
        $region43: #{tpu_custom_call.1} parent=39 // pred_region
          %327 = dma.done %s320, 1024
        $region44: #{tpu_custom_call.1} parent=39 // pred_fallthru
          _
        // Predicated region
        $region45: #{tpu_custom_call.1} parent=39 // pred_check
          %p328 = pneg %p109
        $region46: #{tpu_custom_call.1} parent=39 // pred_check_branch
          %330 = sbr.rel (%p328) target = $region48
        $region47: #{tpu_custom_call.1} parent=39 // pred_region
          %331 = dma.done [#allocation8], 512
        $region48: #{tpu_custom_call.1} parent=39 // pred_fallthru
          _
        // Predicated region
        $region49: #{tpu_custom_call.1} parent=39 // pred_check
          %p332 = pneg %p130
        $region50: #{tpu_custom_call.1} parent=39 // pred_check_branch
          %334 = sbr.rel (%p332) target = $region52
        $region51: #{tpu_custom_call.1} parent=39 // pred_region
          %335 = dma.done [#allocation8], 4096
        $region52: #{tpu_custom_call.1} parent=39 // pred_fallthru
          _
        %s336 = smul.u32 2, %s31
        %p337 = scmp.lt.s32.totalorder %s336, 1
        %s338 = scalar_select %p337, %s336, 1
        %s339 = smul.addr %s338, 8
        %s340 = scalar_lea.vmem %s0, %s339
        %p341 = pneg %p60
        %p342 = pneg %p57
        %s343 = sand.u32 %s75, 1
        %s344 = scalar_lea.sflag [#allocation5], %s343
        %s345 = sand.u32 %s75, 1
        %s346 = smul.addr %s345, 64
        %s347 = scalar_lea.vmem [#allocation4], %s346
        %p348 = pneg %p88
        %p349 = pneg %p85
        %p350 = pneg %p109
        %p351 = pneg %p106
        %p352 = pneg %p130
        %p353 = pneg %p127
        %p354 = pneg %p151
        %p355 = pneg %p148
        %p356 = pneg %p179
        %p357 = pneg %p176
        %s358 = sand.u32 %s166, 1
        %s359 = scalar_lea.sflag [#allocation6], %s358
        %s360 = sand.u32 %s166, 1
        %s361 = smul.addr %s360, 64
        %s362 = scalar_lea.vmem [#allocation10], %s361
        %p363 = pneg %p205
        %p364 = pneg %p202
        %p365 = pneg %p231
        %p366 = pneg %p228
        %s367 = smul.u32 2, %s31
        %p368 = scmp.lt.s32.totalorder %s367, 1
        %s369 = scalar_select %p368, %s367, 1
        %s370 = smul.addr %s369, 8
        %s371 = scalar_lea.vmem %s0, %s370
        %s372 = smul.u32 2, %s31
        %s373 = smul.u32 8, %s32
        %s374 = smul.u32 2, %s31
        %s375 = smul.u32 8, %s32
        %s376 = smul.u32 2, %s31
        %s377 = smul.u32 2, %s31
        %s378 = smul.u32 2, %s31
        %p382 = scmp.eq.s32.totalorder %s32, 0
        // Predicated region
        $region53: #{tpu_custom_call.1} parent=39 // pred_check
          %p383 = pneg %p382
        $region54: #{tpu_custom_call.1} parent=39 // pred_check_branch
          %385 = sbr.rel (%p383) target = $region56
        $region55: #{tpu_custom_call.1} parent=39 // pred_region
          %386 = vst [vmem:[#allocation2] sm:$0xff] 0
          %387 = vst [vmem:[#allocation3] sm:$0xff] 0.0
          %388 = vst [vmem:[#allocation3 + $0x8] sm:$0xff] 0.0
        $region56: #{tpu_custom_call.1} parent=39 // pred_fallthru
          _
        %v389 = vld [vmem:[%s371] sm:$0xff]
        %v390 = vld [vmem:[%s371 + $0x8] sm:$0xff]
        %v391 = vld [vmem:[#allocation7] sm:$0xff]
        %v392 = vld [vmem:[#allocation7 + $0x8] sm:$0xff]
        %v393 = vld [vmem:[#allocation7 + $0x10] sm:$0xff]
        %v394 = vld [vmem:[#allocation7 + $0x18] sm:$0xff]
        %v395 = vld [vmem:[#allocation9] sm:$0xff]
        %v396 = vld [vmem:[#allocation9 + $0x8] sm:$0xff]
        %v397 = vld [vmem:[#allocation9 + $0x10] sm:$0xff]
        %v398 = vld [vmem:[#allocation9 + $0x18] sm:$0xff]
        %v399 = vld [vmem:[#allocation9 + $0x20] sm:$0xff]
        %v400 = vld [vmem:[#allocation9 + $0x28] sm:$0xff]
        %v401 = vld [vmem:[#allocation9 + $0x30] sm:$0xff]
        %v402 = vld [vmem:[#allocation9 + $0x38] sm:$0xff]
        %v403 = vld [vmem:[#allocation9 + $0x40] sm:$0xff]
        %v404 = vld [vmem:[#allocation9 + $0x48] sm:$0xff]
        %v405 = vld [vmem:[#allocation9 + $0x50] sm:$0xff]
        %v406 = vld [vmem:[#allocation9 + $0x58] sm:$0xff]
        %v407 = vld [vmem:[#allocation9 + $0x60] sm:$0xff]
        %v408 = vld [vmem:[#allocation9 + $0x68] sm:$0xff]
        %v409 = vld [vmem:[#allocation9 + $0x70] sm:$0xff]
        %v410 = vld [vmem:[#allocation9 + $0x78] sm:$0xff]
        %v411 = vld [vmem:[#allocation9 + $0x80] sm:$0xff]
        %v412 = vld [vmem:[#allocation9 + $0x88] sm:$0xff]
        %v413 = vld [vmem:[#allocation9 + $0x90] sm:$0xff]
        %v414 = vld [vmem:[#allocation9 + $0x98] sm:$0xff]
        %v415 = vld [vmem:[#allocation9 + $0xa0] sm:$0xff]
        %v416 = vld [vmem:[#allocation9 + $0xa8] sm:$0xff]
        %v417 = vld [vmem:[#allocation9 + $0xb0] sm:$0xff]
        %v418 = vld [vmem:[#allocation9 + $0xb8] sm:$0xff]
        %v419 = vld [vmem:[#allocation9 + $0xc0] sm:$0xff]
        %v420 = vld [vmem:[#allocation9 + $0xc8] sm:$0xff]
        %v421 = vld [vmem:[#allocation9 + $0xd0] sm:$0xff]
        %v422 = vld [vmem:[#allocation9 + $0xd8] sm:$0xff]
        %v423 = vld [vmem:[#allocation9 + $0xe0] sm:$0xff]
        %v424 = vld [vmem:[#allocation9 + $0xe8] sm:$0xff]
        %v425 = vld [vmem:[#allocation9 + $0xf0] sm:$0xff]
        %v426 = vld [vmem:[#allocation9 + $0xf8] sm:$0xff]
        %v427 = vld [vmem:[%s4] sm:$0xf]
        %v429 = vlaneseq
        %v430 = vshrl.u32 %v429, 7
        %v431 = vsub.s32 0, %v430
        %v432 = vrot.slane %v427, %v431
        %v433 = vlaneseq
        %v434 = vshrl.u32 %v433, 7
        %v435 = vsub.s32 1, %v434
        %v436 = vrot.slane %v427, %v435
        %v437 = vlaneseq
        %v438 = vshrl.u32 %v437, 7
        %v439 = vsub.s32 2, %v438
        %v440 = vrot.slane %v427, %v439
        %v441 = vlaneseq
        %v442 = vshrl.u32 %v441, 7
        %v443 = vsub.s32 3, %v442
        %v444 = vrot.slane %v427, %v443
        %s449 = smul.u32 %s32, 8
        %v450 = vld [vmem:[#allocation2] sm:$0xff]
        %v451 = vld [vmem:[#allocation3] sm:$0xff]
        %v452 = vld [vmem:[#allocation3 + $0x8] sm:$0xff]
        %v453 = vld [vmem:[%s323] sm:$0xf]
        %v454 = vld [vmem:[%s323 + $0x4] sm:$0xf]
        %v487 = vunpack.c.l.b16 %v395
        %v488 = vunpack.c.h.b16 %v395
        %v489 = vunpack.c.l.b16 %v396
        %v490 = vunpack.c.h.b16 %v396
        %v491 = vunpack.c.l.b16 %v397
        %v492 = vunpack.c.h.b16 %v397
        %v493 = vunpack.c.l.b16 %v398
        %v494 = vunpack.c.h.b16 %v398
        %v495 = vunpack.c.l.b16 %v399
        %v496 = vunpack.c.h.b16 %v399
        %v497 = vunpack.c.l.b16 %v400
        %v498 = vunpack.c.h.b16 %v400
        %v499 = vunpack.c.l.b16 %v401
        %v500 = vunpack.c.h.b16 %v401
        %v501 = vunpack.c.l.b16 %v402
        %v502 = vunpack.c.h.b16 %v402
        %v503 = vunpack.c.l.b16 %v403
        %v504 = vunpack.c.h.b16 %v403
        %v505 = vunpack.c.l.b16 %v404
        %v506 = vunpack.c.h.b16 %v404
        %v507 = vunpack.c.l.b16 %v405
        %v508 = vunpack.c.h.b16 %v405
        %v509 = vunpack.c.l.b16 %v406
        %v510 = vunpack.c.h.b16 %v406
        %v511 = vunpack.c.l.b16 %v407
        %v512 = vunpack.c.h.b16 %v407
        %v513 = vunpack.c.l.b16 %v408
        %v514 = vunpack.c.h.b16 %v408
        %v515 = vunpack.c.l.b16 %v409
        %v516 = vunpack.c.h.b16 %v409
        %v517 = vunpack.c.l.b16 %v410
        %v518 = vunpack.c.h.b16 %v410
        %v519 = vunpack.c.l.b16 %v411
        %v520 = vunpack.c.h.b16 %v411
        %v521 = vunpack.c.l.b16 %v412
        %v522 = vunpack.c.h.b16 %v412
        %v523 = vunpack.c.l.b16 %v413
        %v524 = vunpack.c.h.b16 %v413
        %v525 = vunpack.c.l.b16 %v414
        %v526 = vunpack.c.h.b16 %v414
        %v527 = vunpack.c.l.b16 %v415
        %v528 = vunpack.c.h.b16 %v415
        %v529 = vunpack.c.l.b16 %v416
        %v530 = vunpack.c.h.b16 %v416
        %v531 = vunpack.c.l.b16 %v417
        %v532 = vunpack.c.h.b16 %v417
        %v533 = vunpack.c.l.b16 %v418
        %v534 = vunpack.c.h.b16 %v418
        %v535 = vunpack.c.l.b16 %v419
        %v536 = vunpack.c.h.b16 %v419
        %v537 = vunpack.c.l.b16 %v420
        %v538 = vunpack.c.h.b16 %v420
        %v539 = vunpack.c.l.b16 %v421
        %v540 = vunpack.c.h.b16 %v421
        %v541 = vunpack.c.l.b16 %v422
        %v542 = vunpack.c.h.b16 %v422
        %v543 = vunpack.c.l.b16 %v423
        %v544 = vunpack.c.h.b16 %v423
        %v545 = vunpack.c.l.b16 %v424
        %v546 = vunpack.c.h.b16 %v424
        %v547 = vunpack.c.l.b16 %v425
        %v548 = vunpack.c.h.b16 %v425
        %v549 = vunpack.c.l.b16 %v426
        %v550 = vunpack.c.h.b16 %v426
        %v551 = vpack.c.b16 %v491, %v487
        %v552 = vpack.c.b16 %v492, %v488
        %v553 = vpack.c.b16 %v493, %v489
        %v554 = vpack.c.b16 %v494, %v490
        %v555 = vpack.c.b16 %v499, %v495
        %v556 = vpack.c.b16 %v500, %v496
        %v557 = vpack.c.b16 %v501, %v497
        %v558 = vpack.c.b16 %v502, %v498
        %v559 = vpack.c.b16 %v507, %v503
        %v560 = vpack.c.b16 %v508, %v504
        %v561 = vpack.c.b16 %v509, %v505
        %v562 = vpack.c.b16 %v510, %v506
        %v563 = vpack.c.b16 %v515, %v511
        %v564 = vpack.c.b16 %v516, %v512
        %v565 = vpack.c.b16 %v517, %v513
        %v566 = vpack.c.b16 %v518, %v514
        %v567 = vpack.c.b16 %v523, %v519
        %v568 = vpack.c.b16 %v524, %v520
        %v569 = vpack.c.b16 %v525, %v521
        %v570 = vpack.c.b16 %v526, %v522
        %v571 = vpack.c.b16 %v531, %v527
        %v572 = vpack.c.b16 %v532, %v528
        %v573 = vpack.c.b16 %v533, %v529
        %v574 = vpack.c.b16 %v534, %v530
        %v575 = vpack.c.b16 %v539, %v535
        %v576 = vpack.c.b16 %v540, %v536
        %v577 = vpack.c.b16 %v541, %v537
        %v578 = vpack.c.b16 %v542, %v538
        %v579 = vpack.c.b16 %v547, %v543
        %v580 = vpack.c.b16 %v548, %v544
        %v581 = vpack.c.b16 %v549, %v545
        %v582 = vpack.c.b16 %v550, %v546
        %615 = vmatprep.subr.bf16.mxu0 %v552
        %616 = vmatpush1.bf16.msra.mxu0 %v551
        %617 = vmatprep.subr.bf16.mxu0 %v556
        %618 = vmatpush1.bf16.msra.mxu0 %v555
        %619 = vmatprep.subr.bf16.mxu0 %v560
        %620 = vmatpush1.bf16.msra.mxu0 %v559
        %621 = vmatprep.subr.bf16.mxu0 %v564
        %622 = vmatpush1.bf16.msra.mxu0 %v563
        %623 = vmatprep.subr.bf16.mxu0 %v568
        %624 = vmatpush1.bf16.msra.mxu0 %v567
        %625 = vmatprep.subr.bf16.mxu0 %v572
        %626 = vmatpush1.bf16.msra.mxu0 %v571
        %627 = vmatprep.subr.bf16.mxu0 %v576
        %628 = vmatpush1.bf16.msra.mxu0 %v575
        %629 = vmatprep.subr.bf16.mxu0 %v580
        %630 = vmatpush1.bf16.msra.mxu0 %v579
        %631 = vmatprep.subr.bf16.mxu0 0
        %632 = vmatpush1.bf16.msra.mxu0 0
        %633 = vmatprep.subr.bf16.mxu0 0
        %634 = vmatpush1.bf16.msra.mxu0 0
        %635 = vmatprep.subr.bf16.mxu0 0
        %636 = vmatpush1.bf16.msra.mxu0 0
        %637 = vmatprep.subr.bf16.mxu0 0
        %638 = vmatpush1.bf16.msra.mxu0 0
        %639 = vmatprep.subr.bf16.mxu0 0
        %640 = vmatpush1.bf16.msra.mxu0 0
        %641 = vmatprep.subr.bf16.mxu0 0
        %642 = vmatpush1.bf16.msra.mxu0 0
        %643 = vmatprep.subr.bf16.mxu0 0
        %644 = vmatpush1.bf16.msra.mxu0 0
        %645 = vmatprep.subr.bf16.mxu0 0
        %646 = vmatpush1.bf16.msra.mxu0 0
        %647 = vmatprep.mubr.bf16.mxu0 0
        %648 = vmatmul.mubr.bf16.gmra.mrb[0].mxu0 %v450
        %v649 = vpop.f32.mrb[0].mxu0
        %v650 = vadd.f32 0.0, %v649
        %v651 = vpop.f32.mrb[0].mxu0
        %v652 = vadd.f32 0.0, %v651
        %v653 = vpop.f32.mrb[0].mxu0
        %v654 = vadd.f32 0.0, %v653
        %v655 = vpop.f32.mrb[0].mxu0
        %v656 = vadd.f32 0.0, %v655
        %657 = vdwg.mxu0
        %658 = vmatprep.subr.bf16.mxu0 %v554
        %659 = vmatpush1.bf16.msra.mxu0 %v553
        %660 = vmatprep.subr.bf16.mxu0 %v558
        %661 = vmatpush1.bf16.msra.mxu0 %v557
        %662 = vmatprep.subr.bf16.mxu0 %v562
        %663 = vmatpush1.bf16.msra.mxu0 %v561
        %664 = vmatprep.subr.bf16.mxu0 %v566
        %665 = vmatpush1.bf16.msra.mxu0 %v565
        %666 = vmatprep.subr.bf16.mxu0 %v570
        %667 = vmatpush1.bf16.msra.mxu0 %v569
        %668 = vmatprep.subr.bf16.mxu0 %v574
        %669 = vmatpush1.bf16.msra.mxu0 %v573
        %670 = vmatprep.subr.bf16.mxu0 %v578
        %671 = vmatpush1.bf16.msra.mxu0 %v577
        %672 = vmatprep.subr.bf16.mxu0 %v582
        %673 = vmatpush1.bf16.msra.mxu0 %v581
        %674 = vmatprep.subr.bf16.mxu0 0
        %675 = vmatpush1.bf16.msra.mxu0 0
        %676 = vmatprep.subr.bf16.mxu0 0
        %677 = vmatpush1.bf16.msra.mxu0 0
        %678 = vmatprep.subr.bf16.mxu0 0
        %679 = vmatpush1.bf16.msra.mxu0 0
        %680 = vmatprep.subr.bf16.mxu0 0
        %681 = vmatpush1.bf16.msra.mxu0 0
        %682 = vmatprep.subr.bf16.mxu0 0
        %683 = vmatpush1.bf16.msra.mxu0 0
        %684 = vmatprep.subr.bf16.mxu0 0
        %685 = vmatpush1.bf16.msra.mxu0 0
        %686 = vmatprep.subr.bf16.mxu0 0
        %687 = vmatpush1.bf16.msra.mxu0 0
        %688 = vmatprep.subr.bf16.mxu0 0
        %689 = vmatpush1.bf16.msra.mxu0 0
        %690 = vmatprep.mubr.bf16.mxu0 0
        %691 = vmatmul.mubr.bf16.gmra.mrb[0].mxu0 %v450
        %v692 = vpop.f32.mrb[0].mxu0
        %v693 = vadd.f32 0.0, %v692
        %v694 = vpop.f32.mrb[0].mxu0
        %v695 = vadd.f32 0.0, %v694
        %v696 = vpop.f32.mrb[0].mxu0
        %v697 = vadd.f32 0.0, %v696
        %v698 = vpop.f32.mrb[0].mxu0
        %v699 = vadd.f32 0.0, %v698
        %700 = vdwg.mxu0
        %v703 = vunpack.c.l.b16 %v453
        %v704 = vunpack.c.l.b16 %v454
        %v705 = vpack.c.b16 %v704, %v703
        %v710 = vunpack.c.l.b16 %v391
        %v711 = vunpack.c.h.b16 %v391
        %v712 = vunpack.c.l.b16 %v392
        %v713 = vunpack.c.h.b16 %v392
        %v714 = vunpack.c.l.b16 %v393
        %v715 = vunpack.c.h.b16 %v393
        %v716 = vunpack.c.l.b16 %v394
        %v717 = vunpack.c.h.b16 %v394
        %v718 = vpack.c.b16 %v714, %v710
        %v719 = vpack.c.b16 %v715, %v711
        %v720 = vpack.c.b16 %v716, %v712
        %v721 = vpack.c.b16 %v717, %v713
        %vm726 = vcmask 130048
        %v728 = vsel %vm726, %v705, 0
        %730 = vmatprep.subr.bf16.mxu0 %v719
        %731 = vmatpush1.bf16.msra.mxu0 %v718
        %732 = vmatprep.subr.bf16.mxu0 0
        %733 = vmatpush1.bf16.msra.mxu0 0
        %734 = vmatprep.subr.bf16.mxu0 0
        %735 = vmatpush1.bf16.msra.mxu0 0
        %736 = vmatprep.subr.bf16.mxu0 0
        %737 = vmatpush1.bf16.msra.mxu0 0
        %738 = vmatprep.subr.bf16.mxu0 0
        %739 = vmatpush1.bf16.msra.mxu0 0
        %740 = vmatprep.subr.bf16.mxu0 0
        %741 = vmatpush1.bf16.msra.mxu0 0
        %742 = vmatprep.subr.bf16.mxu0 0
        %743 = vmatpush1.bf16.msra.mxu0 0
        %744 = vmatprep.subr.bf16.mxu0 0
        %745 = vmatpush1.bf16.msra.mxu0 0
        %746 = vmatprep.subr.bf16.mxu0 0
        %747 = vmatpush1.bf16.msra.mxu0 0
        %748 = vmatprep.subr.bf16.mxu0 0
        %749 = vmatpush1.bf16.msra.mxu0 0
        %750 = vmatprep.subr.bf16.mxu0 0
        %751 = vmatpush1.bf16.msra.mxu0 0
        %752 = vmatprep.subr.bf16.mxu0 0
        %753 = vmatpush1.bf16.msra.mxu0 0
        %754 = vmatprep.subr.bf16.mxu0 0
        %755 = vmatpush1.bf16.msra.mxu0 0
        %756 = vmatprep.subr.bf16.mxu0 0
        %757 = vmatpush1.bf16.msra.mxu0 0
        %758 = vmatprep.subr.bf16.mxu0 0
        %759 = vmatpush1.bf16.msra.mxu0 0
        %760 = vmatprep.subr.bf16.mxu0 0
        %761 = vmatpush1.bf16.msra.mxu0 0
        %762 = vmatprep.mubr.bf16.mxu0 0
        %763 = vmatmul.mubr.bf16.gmra.mrb[0].mxu0 %v728
        %v764 = vpop.f32.mrb[0].mxu0
        %v765 = vadd.f32 %v650, %v764
        %v766 = vpop.f32.mrb[0].mxu0
        %v767 = vadd.f32 %v652, %v766
        %v768 = vpop.f32.mrb[0].mxu0
        %v769 = vadd.f32 %v654, %v768
        %v770 = vpop.f32.mrb[0].mxu0
        %v771 = vadd.f32 %v656, %v770
        %772 = vdwg.mxu0
        %773 = vmatprep.subr.bf16.mxu0 %v721
        %774 = vmatpush1.bf16.msra.mxu0 %v720
        %775 = vmatprep.subr.bf16.mxu0 0
        %776 = vmatpush1.bf16.msra.mxu0 0
        %777 = vmatprep.subr.bf16.mxu0 0
        %778 = vmatpush1.bf16.msra.mxu0 0
        %779 = vmatprep.subr.bf16.mxu0 0
        %780 = vmatpush1.bf16.msra.mxu0 0
        %781 = vmatprep.subr.bf16.mxu0 0
        %782 = vmatpush1.bf16.msra.mxu0 0
        %783 = vmatprep.subr.bf16.mxu0 0
        %784 = vmatpush1.bf16.msra.mxu0 0
        %785 = vmatprep.subr.bf16.mxu0 0
        %786 = vmatpush1.bf16.msra.mxu0 0
        %787 = vmatprep.subr.bf16.mxu0 0
        %788 = vmatpush1.bf16.msra.mxu0 0
        %789 = vmatprep.subr.bf16.mxu0 0
        %790 = vmatpush1.bf16.msra.mxu0 0
        %791 = vmatprep.subr.bf16.mxu0 0
        %792 = vmatpush1.bf16.msra.mxu0 0
        %793 = vmatprep.subr.bf16.mxu0 0
        %794 = vmatpush1.bf16.msra.mxu0 0
        %795 = vmatprep.subr.bf16.mxu0 0
        %796 = vmatpush1.bf16.msra.mxu0 0
        %797 = vmatprep.subr.bf16.mxu0 0
        %798 = vmatpush1.bf16.msra.mxu0 0
        %799 = vmatprep.subr.bf16.mxu0 0
        %800 = vmatpush1.bf16.msra.mxu0 0
        %801 = vmatprep.subr.bf16.mxu0 0
        %802 = vmatpush1.bf16.msra.mxu0 0
        %803 = vmatprep.subr.bf16.mxu0 0
        %804 = vmatpush1.bf16.msra.mxu0 0
        %805 = vmatprep.mubr.bf16.mxu0 0
        %806 = vmatmul.mubr.bf16.gmra.mrb[0].mxu0 %v728
        %v807 = vpop.f32.mrb[0].mxu0
        %v808 = vadd.f32 %v693, %v807
        %v809 = vpop.f32.mrb[0].mxu0
        %v810 = vadd.f32 %v695, %v809
        %v811 = vpop.f32.mrb[0].mxu0
        %v812 = vadd.f32 %v697, %v811
        %v813 = vpop.f32.mrb[0].mxu0
        %v814 = vadd.f32 %v699, %v813
        %815 = vdwg.mxu0
        %v816 = vadd.f32 %v765, %v432
        %v817 = vadd.f32 %v767, %v436
        %v818 = vadd.f32 %v808, %v440
        %v819 = vadd.f32 %v810, %v444
        %v820 = vadd.f32 %v769, %v432
        %v821 = vadd.f32 %v771, %v436
        %v822 = vadd.f32 %v812, %v440
        %v823 = vadd.f32 %v814, %v444
        %v824 = vmul.f32 %v816, 0.5
        %v825 = vmul.f32 %v820, 0.5
        %v826 = vtanh.pop %v824
        %v827 = vtanh.pop %v825
        %v828 = vmul.f32 %v826, 0.5
        %v829 = vmul.f32 %v827, 0.5
        %v830 = vadd.f32 %v828, 0.5
        %v831 = vadd.f32 %v829, 0.5
        %v832 = vmul.f32 %v817, 0.5
        %v833 = vmul.f32 %v821, 0.5
        %v834 = vtanh.pop %v832
        %v835 = vtanh.pop %v833
        %v836 = vmul.f32 %v834, 0.5
        %v837 = vmul.f32 %v835, 0.5
        %v838 = vadd.f32 %v836, 0.5
        %v839 = vadd.f32 %v837, 0.5
        %v840 = vtanh.pop %v818
        %v841 = vtanh.pop %v822
        %v842 = vmul.f32 %v819, 0.5
        %v843 = vmul.f32 %v823, 0.5
        %v844 = vtanh.pop %v842
        %v845 = vtanh.pop %v843
        %v846 = vmul.f32 %v844, 0.5
        %v847 = vmul.f32 %v845, 0.5
        %v848 = vadd.f32 %v846, 0.5
        %v849 = vadd.f32 %v847, 0.5
        %v850 = vmul.f32 %v838, %v451
        %v851 = vmul.f32 %v839, %v452
        %v852 = vmul.f32 %v830, %v840
        %v853 = vmul.f32 %v831, %v841
        %v854 = vadd.f32 %v850, %v852
        %v855 = vadd.f32 %v851, %v853
        %v856 = vtanh.pop %v854
        %v857 = vtanh.pop %v855
        %v858 = vmul.f32 %v848, %v856
        %v859 = vmul.f32 %v849, %v857
        %v860 = vpack.c.bf16 %v859, %v858
        %v861 = vstv %s449
        %vm862 = vcmp.lt.s32.totalorder %v861, %v389
        %vm863 = vcmp.lt.s32.totalorder %v861, %v390
        %v864 = vsel %vm862, 1, 0
        %v865 = vsel %vm863, 1, 0
        %866 = vset.pattern.permute.xlu0 0
        %867 = vperm.xlu0 %866, %v864
        %v868 = vpop.permute.xlu0 %867
        %869 = vset.pattern.permute.xlu0 0
        %870 = vperm.xlu0 %869, %v865
        %v871 = vpop.permute.xlu0 %870
        %vm872 = vcmp.eq.s32.totalorder %v868, 1
        %vm873 = vcmp.eq.s32.totalorder %v871, 1
        %vm874 = vmpackc.low %vm872, %vm872
        %vm875 = vmpackc.low %vm873, %vm873
        %v876 = vsel %vm874, 65537, 0
        %v877 = vsel %vm875, 65537, 0
        %v878 = vunpack.c.l.b16 %v876
        %v879 = vunpack.c.l.b16 %v877
        %v880 = vpack.c.b16 %v879, %v878
        %vm881 = vcmp.ne.s16.totalorder %v880, 0
        %v882 = vsel %vm881, %v860, %v450
        %v883 = vsel %vm872, %v854, %v451
        %v884 = vsel %vm873, %v855, %v452
        %v885 = vsel %vm881, %v860, 0
        %v887 = vunpack.c.l.b16 %v885
        %v888 = vunpack.c.h.b16 %v885
        %v889 = vpack.c.b16 %v887, %v887
        %v890 = vpack.c.b16 %v888, %v888
        %893 = vst [vmem:[%s362] sm:$0xf] %v889
        %894 = vst [vmem:[%s362 + $0x4] sm:$0xf] %v890
        %s895 = scalar_lea.vmem %s323, 8 [#allocation4]
        %v896 = vld [vmem:[%s895] sm:$0xf]
        %v897 = vld [vmem:[%s895 + $0x4] sm:$0xf]
        %898 = vmatprep.subr.bf16.mxu0 %v552
        %899 = vmatpush1.bf16.msra.mxu0 %v551
        %900 = vmatprep.subr.bf16.mxu0 %v556
        %901 = vmatpush1.bf16.msra.mxu0 %v555
        %902 = vmatprep.subr.bf16.mxu0 %v560
        %903 = vmatpush1.bf16.msra.mxu0 %v559
        %904 = vmatprep.subr.bf16.mxu0 %v564
        %905 = vmatpush1.bf16.msra.mxu0 %v563
        %906 = vmatprep.subr.bf16.mxu0 %v568
        %907 = vmatpush1.bf16.msra.mxu0 %v567
        %908 = vmatprep.subr.bf16.mxu0 %v572
        %909 = vmatpush1.bf16.msra.mxu0 %v571
        %910 = vmatprep.subr.bf16.mxu0 %v576
        %911 = vmatpush1.bf16.msra.mxu0 %v575
        %912 = vmatprep.subr.bf16.mxu0 %v580
        %913 = vmatpush1.bf16.msra.mxu0 %v579
        %914 = vmatprep.subr.bf16.mxu0 0
        %915 = vmatpush1.bf16.msra.mxu0 0
        %916 = vmatprep.subr.bf16.mxu0 0
        %917 = vmatpush1.bf16.msra.mxu0 0
        %918 = vmatprep.subr.bf16.mxu0 0
        %919 = vmatpush1.bf16.msra.mxu0 0
        %920 = vmatprep.subr.bf16.mxu0 0
        %921 = vmatpush1.bf16.msra.mxu0 0
        %922 = vmatprep.subr.bf16.mxu0 0
        %923 = vmatpush1.bf16.msra.mxu0 0
        %924 = vmatprep.subr.bf16.mxu0 0
        %925 = vmatpush1.bf16.msra.mxu0 0
        %926 = vmatprep.subr.bf16.mxu0 0
        %927 = vmatpush1.bf16.msra.mxu0 0
        %928 = vmatprep.subr.bf16.mxu0 0
        %929 = vmatpush1.bf16.msra.mxu0 0
        %930 = vmatprep.mubr.bf16.mxu0 0
        %931 = vmatmul.mubr.bf16.gmra.mrb[0].mxu0 %v882
        %v932 = vpop.f32.mrb[0].mxu0
        %v933 = vadd.f32 0.0, %v932
        %v934 = vpop.f32.mrb[0].mxu0
        %v935 = vadd.f32 0.0, %v934
        %v936 = vpop.f32.mrb[0].mxu0
        %v937 = vadd.f32 0.0, %v936
        %v938 = vpop.f32.mrb[0].mxu0
        %v939 = vadd.f32 0.0, %v938
        %940 = vdwg.mxu0
        %941 = vmatprep.subr.bf16.mxu0 %v554
        %942 = vmatpush1.bf16.msra.mxu0 %v553
        %943 = vmatprep.subr.bf16.mxu0 %v558
        %944 = vmatpush1.bf16.msra.mxu0 %v557
        %945 = vmatprep.subr.bf16.mxu0 %v562
        %946 = vmatpush1.bf16.msra.mxu0 %v561
        %947 = vmatprep.subr.bf16.mxu0 %v566
        %948 = vmatpush1.bf16.msra.mxu0 %v565
        %949 = vmatprep.subr.bf16.mxu0 %v570
        %950 = vmatpush1.bf16.msra.mxu0 %v569
        %951 = vmatprep.subr.bf16.mxu0 %v574
        %952 = vmatpush1.bf16.msra.mxu0 %v573
        %953 = vmatprep.subr.bf16.mxu0 %v578
        %954 = vmatpush1.bf16.msra.mxu0 %v577
        %955 = vmatprep.subr.bf16.mxu0 %v582
        %956 = vmatpush1.bf16.msra.mxu0 %v581
        %957 = vmatprep.subr.bf16.mxu0 0
        %958 = vmatpush1.bf16.msra.mxu0 0
        %959 = vmatprep.subr.bf16.mxu0 0
        %960 = vmatpush1.bf16.msra.mxu0 0
        %961 = vmatprep.subr.bf16.mxu0 0
        %962 = vmatpush1.bf16.msra.mxu0 0
        %963 = vmatprep.subr.bf16.mxu0 0
        %964 = vmatpush1.bf16.msra.mxu0 0
        %965 = vmatprep.subr.bf16.mxu0 0
        %966 = vmatpush1.bf16.msra.mxu0 0
        %967 = vmatprep.subr.bf16.mxu0 0
        %968 = vmatpush1.bf16.msra.mxu0 0
        %969 = vmatprep.subr.bf16.mxu0 0
        %970 = vmatpush1.bf16.msra.mxu0 0
        %971 = vmatprep.subr.bf16.mxu0 0
        %972 = vmatpush1.bf16.msra.mxu0 0
        %973 = vmatprep.mubr.bf16.mxu0 0
        %974 = vmatmul.mubr.bf16.gmra.mrb[0].mxu0 %v882
        %v975 = vpop.f32.mrb[0].mxu0
        %v976 = vadd.f32 0.0, %v975
        %v977 = vpop.f32.mrb[0].mxu0
        %v978 = vadd.f32 0.0, %v977
        %v979 = vpop.f32.mrb[0].mxu0
        %v980 = vadd.f32 0.0, %v979
        %v981 = vpop.f32.mrb[0].mxu0
        %v982 = vadd.f32 0.0, %v981
        %983 = vdwg.mxu0
        %v986 = vunpack.c.l.b16 %v896
        %v987 = vunpack.c.l.b16 %v897
        %v988 = vpack.c.b16 %v987, %v986
        %v990 = vsel %vm726, %v988, 0
        %992 = vmatprep.subr.bf16.mxu0 %v719
        %993 = vmatpush1.bf16.msra.mxu0 %v718
        %994 = vmatprep.subr.bf16.mxu0 0
        %995 = vmatpush1.bf16.msra.mxu0 0
        %996 = vmatprep.subr.bf16.mxu0 0
        %997 = vmatpush1.bf16.msra.mxu0 0
        %998 = vmatprep.subr.bf16.mxu0 0
        %999 = vmatpush1.bf16.msra.mxu0 0
        %1000 = vmatprep.subr.bf16.mxu0 0
        %1001 = vmatpush1.bf16.msra.mxu0 0
        %1002 = vmatprep.subr.bf16.mxu0 0
        %1003 = vmatpush1.bf16.msra.mxu0 0
        %1004 = vmatprep.subr.bf16.mxu0 0
        %1005 = vmatpush1.bf16.msra.mxu0 0
        %1006 = vmatprep.subr.bf16.mxu0 0
        %1007 = vmatpush1.bf16.msra.mxu0 0
        %1008 = vmatprep.subr.bf16.mxu0 0
        %1009 = vmatpush1.bf16.msra.mxu0 0
        %1010 = vmatprep.subr.bf16.mxu0 0
        %1011 = vmatpush1.bf16.msra.mxu0 0
        %1012 = vmatprep.subr.bf16.mxu0 0
        %1013 = vmatpush1.bf16.msra.mxu0 0
        %1014 = vmatprep.subr.bf16.mxu0 0
        %1015 = vmatpush1.bf16.msra.mxu0 0
        %1016 = vmatprep.subr.bf16.mxu0 0
        %1017 = vmatpush1.bf16.msra.mxu0 0
        %1018 = vmatprep.subr.bf16.mxu0 0
        %1019 = vmatpush1.bf16.msra.mxu0 0
        %1020 = vmatprep.subr.bf16.mxu0 0
        %1021 = vmatpush1.bf16.msra.mxu0 0
        %1022 = vmatprep.subr.bf16.mxu0 0
        %1023 = vmatpush1.bf16.msra.mxu0 0
        %1024 = vmatprep.mubr.bf16.mxu0 0
        %1025 = vmatmul.mubr.bf16.gmra.mrb[0].mxu0 %v990
        %v1026 = vpop.f32.mrb[0].mxu0
        %v1027 = vadd.f32 %v933, %v1026
        %v1028 = vpop.f32.mrb[0].mxu0
        %v1029 = vadd.f32 %v935, %v1028
        %v1030 = vpop.f32.mrb[0].mxu0
        %v1031 = vadd.f32 %v937, %v1030
        %v1032 = vpop.f32.mrb[0].mxu0
        %v1033 = vadd.f32 %v939, %v1032
        %1034 = vdwg.mxu0
        %1035 = vmatprep.subr.bf16.mxu0 %v721
        %1036 = vmatpush1.bf16.msra.mxu0 %v720
        %1037 = vmatprep.subr.bf16.mxu0 0
        %1038 = vmatpush1.bf16.msra.mxu0 0
        %1039 = vmatprep.subr.bf16.mxu0 0
        %1040 = vmatpush1.bf16.msra.mxu0 0
        %1041 = vmatprep.subr.bf16.mxu0 0
        %1042 = vmatpush1.bf16.msra.mxu0 0
        %1043 = vmatprep.subr.bf16.mxu0 0
        %1044 = vmatpush1.bf16.msra.mxu0 0
        %1045 = vmatprep.subr.bf16.mxu0 0
        %1046 = vmatpush1.bf16.msra.mxu0 0
        %1047 = vmatprep.subr.bf16.mxu0 0
        %1048 = vmatpush1.bf16.msra.mxu0 0
        %1049 = vmatprep.subr.bf16.mxu0 0
        %1050 = vmatpush1.bf16.msra.mxu0 0
        %1051 = vmatprep.subr.bf16.mxu0 0
        %1052 = vmatpush1.bf16.msra.mxu0 0
        %1053 = vmatprep.subr.bf16.mxu0 0
        %1054 = vmatpush1.bf16.msra.mxu0 0
        %1055 = vmatprep.subr.bf16.mxu0 0
        %1056 = vmatpush1.bf16.msra.mxu0 0
        %1057 = vmatprep.subr.bf16.mxu0 0
        %1058 = vmatpush1.bf16.msra.mxu0 0
        %1059 = vmatprep.subr.bf16.mxu0 0
        %1060 = vmatpush1.bf16.msra.mxu0 0
        %1061 = vmatprep.subr.bf16.mxu0 0
        %1062 = vmatpush1.bf16.msra.mxu0 0
        %1063 = vmatprep.subr.bf16.mxu0 0
        %1064 = vmatpush1.bf16.msra.mxu0 0
        %1065 = vmatprep.subr.bf16.mxu0 0
        %1066 = vmatpush1.bf16.msra.mxu0 0
        %1067 = vmatprep.mubr.bf16.mxu0 0
        %1068 = vmatmul.mubr.bf16.gmra.mrb[0].mxu0 %v990
        %v1069 = vpop.f32.mrb[0].mxu0
        %v1070 = vadd.f32 %v976, %v1069
        %v1071 = vpop.f32.mrb[0].mxu0
        %v1072 = vadd.f32 %v978, %v1071
        %v1073 = vpop.f32.mrb[0].mxu0
        %v1074 = vadd.f32 %v980, %v1073
        %v1075 = vpop.f32.mrb[0].mxu0
        %v1076 = vadd.f32 %v982, %v1075
        %1077 = vdwg.mxu0
        %v1078 = vadd.f32 %v1027, %v432
        %v1079 = vadd.f32 %v1029, %v436
        %v1080 = vadd.f32 %v1070, %v440
        %v1081 = vadd.f32 %v1072, %v444
        %v1082 = vadd.f32 %v1031, %v432
        %v1083 = vadd.f32 %v1033, %v436
        %v1084 = vadd.f32 %v1074, %v440
        %v1085 = vadd.f32 %v1076, %v444
        %v1086 = vmul.f32 %v1078, 0.5
        %v1087 = vmul.f32 %v1082, 0.5
        %v1088 = vtanh.pop %v1086
        %v1089 = vtanh.pop %v1087
        %v1090 = vmul.f32 %v1088, 0.5
        %v1091 = vmul.f32 %v1089, 0.5
        %v1092 = vadd.f32 %v1090, 0.5
        %v1093 = vadd.f32 %v1091, 0.5
        %v1094 = vmul.f32 %v1079, 0.5
        %v1095 = vmul.f32 %v1083, 0.5
        %v1096 = vtanh.pop %v1094
        %v1097 = vtanh.pop %v1095
        %v1098 = vmul.f32 %v1096, 0.5
        %v1099 = vmul.f32 %v1097, 0.5
        %v1100 = vadd.f32 %v1098, 0.5
        %v1101 = vadd.f32 %v1099, 0.5
        %v1102 = vtanh.pop %v1080
        %v1103 = vtanh.pop %v1084
        %v1104 = vmul.f32 %v1081, 0.5
        %v1105 = vmul.f32 %v1085, 0.5
        %v1106 = vtanh.pop %v1104
        %v1107 = vtanh.pop %v1105
        %v1108 = vmul.f32 %v1106, 0.5
        %v1109 = vmul.f32 %v1107, 0.5
        %v1110 = vadd.f32 %v1108, 0.5
        %v1111 = vadd.f32 %v1109, 0.5
        %v1112 = vmul.f32 %v1100, %v883
        %v1113 = vmul.f32 %v1101, %v884
        %v1114 = vmul.f32 %v1092, %v1102
        %v1115 = vmul.f32 %v1093, %v1103
        %v1116 = vadd.f32 %v1112, %v1114
        %v1117 = vadd.f32 %v1113, %v1115
        %v1118 = vtanh.pop %v1116
        %v1119 = vtanh.pop %v1117
        %v1120 = vmul.f32 %v1110, %v1118
        %v1121 = vmul.f32 %v1111, %v1119
        %v1122 = vpack.c.bf16 %v1121, %v1120
        %s1123 = sadd.s32 %s449, 1
        %v1124 = vstv %s1123
        %vm1125 = vcmp.lt.s32.totalorder %v1124, %v389
        %vm1126 = vcmp.lt.s32.totalorder %v1124, %v390
        %v1127 = vsel %vm1125, 1, 0
        %v1128 = vsel %vm1126, 1, 0
        %1129 = vset.pattern.permute.xlu0 0
        %1130 = vperm.xlu0 %1129, %v1127
        %v1131 = vpop.permute.xlu0 %1130
        %1132 = vset.pattern.permute.xlu0 0
        %1133 = vperm.xlu0 %1132, %v1128
        %v1134 = vpop.permute.xlu0 %1133
        %vm1135 = vcmp.eq.s32.totalorder %v1131, 1
        %vm1136 = vcmp.eq.s32.totalorder %v1134, 1
        %vm1137 = vmpackc.low %vm1135, %vm1135
        %vm1138 = vmpackc.low %vm1136, %vm1136
        %v1139 = vsel %vm1137, 65537, 0
        %v1140 = vsel %vm1138, 65537, 0
        %v1141 = vunpack.c.l.b16 %v1139
        %v1142 = vunpack.c.l.b16 %v1140
        %v1143 = vpack.c.b16 %v1142, %v1141
        %vm1144 = vcmp.ne.s16.totalorder %v1143, 0
        %v1145 = vsel %vm1144, %v1122, %v882
        %v1146 = vsel %vm1135, %v1116, %v883
        %v1147 = vsel %vm1136, %v1117, %v884
        %v1148 = vsel %vm1144, %v1122, 0
        %v1150 = vunpack.c.l.b16 %v1148
        %v1151 = vunpack.c.h.b16 %v1148
        %v1152 = vpack.c.b16 %v1150, %v1150
        %v1153 = vpack.c.b16 %v1151, %v1151
        %s1156 = scalar_lea.vmem %s362, 8 [#allocation10]
        %1157 = vst [vmem:[%s1156] sm:$0xf] %v1152
        %1158 = vst [vmem:[%s1156 + $0x4] sm:$0xf] %v1153
        %s1159 = scalar_lea.vmem %s323, 16 [#allocation4]
        %v1160 = vld [vmem:[%s1159] sm:$0xf]
        %v1161 = vld [vmem:[%s1159 + $0x4] sm:$0xf]
        %1162 = vmatprep.subr.bf16.mxu0 %v552
        %1163 = vmatpush1.bf16.msra.mxu0 %v551
        %1164 = vmatprep.subr.bf16.mxu0 %v556
        %1165 = vmatpush1.bf16.msra.mxu0 %v555
        %1166 = vmatprep.subr.bf16.mxu0 %v560
        %1167 = vmatpush1.bf16.msra.mxu0 %v559
        %1168 = vmatprep.subr.bf16.mxu0 %v564
        %1169 = vmatpush1.bf16.msra.mxu0 %v563
        %1170 = vmatprep.subr.bf16.mxu0 %v568
        %1171 = vmatpush1.bf16.msra.mxu0 %v567
        %1172 = vmatprep.subr.bf16.mxu0 %v572
        %1173 = vmatpush1.bf16.msra.mxu0 %v571
        %1174 = vmatprep.subr.bf16.mxu0 %v576
        %1175 = vmatpush1.bf16.msra.mxu0 %v575
        %1176 = vmatprep.subr.bf16.mxu0 %v580
        %1177 = vmatpush1.bf16.msra.mxu0 %v579
        %1178 = vmatprep.subr.bf16.mxu0 0
        %1179 = vmatpush1.bf16.msra.mxu0 0
        %1180 = vmatprep.subr.bf16.mxu0 0
        %1181 = vmatpush1.bf16.msra.mxu0 0
        %1182 = vmatprep.subr.bf16.mxu0 0
        %1183 = vmatpush1.bf16.msra.mxu0 0
        %1184 = vmatprep.subr.bf16.mxu0 0
        %1185 = vmatpush1.bf16.msra.mxu0 0
        %1186 = vmatprep.subr.bf16.mxu0 0
        %1187 = vmatpush1.bf16.msra.mxu0 0
        %1188 = vmatprep.subr.bf16.mxu0 0
        %1189 = vmatpush1.bf16.msra.mxu0 0
        %1190 = vmatprep.subr.bf16.mxu0 0
        %1191 = vmatpush1.bf16.msra.mxu0 0
        %1192 = vmatprep.subr.bf16.mxu0 0
        %1193 = vmatpush1.bf16.msra.mxu0 0
        %1194 = vmatprep.mubr.bf16.mxu0 0
        %1195 = vmatmul.mubr.bf16.gmra.mrb[0].mxu0 %v1145
        %v1196 = vpop.f32.mrb[0].mxu0
        %v1197 = vadd.f32 0.0, %v1196
        %v1198 = vpop.f32.mrb[0].mxu0
        %v1199 = vadd.f32 0.0, %v1198
        %v1200 = vpop.f32.mrb[0].mxu0
        %v1201 = vadd.f32 0.0, %v1200
        %v1202 = vpop.f32.mrb[0].mxu0
        %v1203 = vadd.f32 0.0, %v1202
        %1204 = vdwg.mxu0
        %1205 = vmatprep.subr.bf16.mxu0 %v554
        %1206 = vmatpush1.bf16.msra.mxu0 %v553
        %1207 = vmatprep.subr.bf16.mxu0 %v558
        %1208 = vmatpush1.bf16.msra.mxu0 %v557
        %1209 = vmatprep.subr.bf16.mxu0 %v562
        %1210 = vmatpush1.bf16.msra.mxu0 %v561
        %1211 = vmatprep.subr.bf16.mxu0 %v566
        %1212 = vmatpush1.bf16.msra.mxu0 %v565
        %1213 = vmatprep.subr.bf16.mxu0 %v570
        %1214 = vmatpush1.bf16.msra.mxu0 %v569
        %1215 = vmatprep.subr.bf16.mxu0 %v574
        %1216 = vmatpush1.bf16.msra.mxu0 %v573
        %1217 = vmatprep.subr.bf16.mxu0 %v578
        %1218 = vmatpush1.bf16.msra.mxu0 %v577
        %1219 = vmatprep.subr.bf16.mxu0 %v582
        %1220 = vmatpush1.bf16.msra.mxu0 %v581
        %1221 = vmatprep.subr.bf16.mxu0 0
        %1222 = vmatpush1.bf16.msra.mxu0 0
        %1223 = vmatprep.subr.bf16.mxu0 0
        %1224 = vmatpush1.bf16.msra.mxu0 0
        %1225 = vmatprep.subr.bf16.mxu0 0
        %1226 = vmatpush1.bf16.msra.mxu0 0
        %1227 = vmatprep.subr.bf16.mxu0 0
        %1228 = vmatpush1.bf16.msra.mxu0 0
        %1229 = vmatprep.subr.bf16.mxu0 0
        %1230 = vmatpush1.bf16.msra.mxu0 0
        %1231 = vmatprep.subr.bf16.mxu0 0
        %1232 = vmatpush1.bf16.msra.mxu0 0
        %1233 = vmatprep.subr.bf16.mxu0 0
        %1234 = vmatpush1.bf16.msra.mxu0 0
        %1235 = vmatprep.subr.bf16.mxu0 0
        %1236 = vmatpush1.bf16.msra.mxu0 0
        %1237 = vmatprep.mubr.bf16.mxu0 0
        %1238 = vmatmul.mubr.bf16.gmra.mrb[0].mxu0 %v1145
        %v1239 = vpop.f32.mrb[0].mxu0
        %v1240 = vadd.f32 0.0, %v1239
        %v1241 = vpop.f32.mrb[0].mxu0
        %v1242 = vadd.f32 0.0, %v1241
        %v1243 = vpop.f32.mrb[0].mxu0
        %v1244 = vadd.f32 0.0, %v1243
        %v1245 = vpop.f32.mrb[0].mxu0
        %v1246 = vadd.f32 0.0, %v1245
        %1247 = vdwg.mxu0
        %v1250 = vunpack.c.l.b16 %v1160
        %v1251 = vunpack.c.l.b16 %v1161
        %v1252 = vpack.c.b16 %v1251, %v1250
        %v1254 = vsel %vm726, %v1252, 0
        %1256 = vmatprep.subr.bf16.mxu0 %v719
        %1257 = vmatpush1.bf16.msra.mxu0 %v718
        %1258 = vmatprep.subr.bf16.mxu0 0
        %1259 = vmatpush1.bf16.msra.mxu0 0
        %1260 = vmatprep.subr.bf16.mxu0 0
        %1261 = vmatpush1.bf16.msra.mxu0 0
        %1262 = vmatprep.subr.bf16.mxu0 0
        %1263 = vmatpush1.bf16.msra.mxu0 0
        %1264 = vmatprep.subr.bf16.mxu0 0
        %1265 = vmatpush1.bf16.msra.mxu0 0
        %1266 = vmatprep.subr.bf16.mxu0 0
        %1267 = vmatpush1.bf16.msra.mxu0 0
        %1268 = vmatprep.subr.bf16.mxu0 0
        %1269 = vmatpush1.bf16.msra.mxu0 0
        %1270 = vmatprep.subr.bf16.mxu0 0
        %1271 = vmatpush1.bf16.msra.mxu0 0
        %1272 = vmatprep.subr.bf16.mxu0 0
        %1273 = vmatpush1.bf16.msra.mxu0 0
        %1274 = vmatprep.subr.bf16.mxu0 0
        %1275 = vmatpush1.bf16.msra.mxu0 0
        %1276 = vmatprep.subr.bf16.mxu0 0
        %1277 = vmatpush1.bf16.msra.mxu0 0
        %1278 = vmatprep.subr.bf16.mxu0 0
        %1279 = vmatpush1.bf16.msra.mxu0 0
        %1280 = vmatprep.subr.bf16.mxu0 0
        %1281 = vmatpush1.bf16.msra.mxu0 0
        %1282 = vmatprep.subr.bf16.mxu0 0
        %1283 = vmatpush1.bf16.msra.mxu0 0
        %1284 = vmatprep.subr.bf16.mxu0 0
        %1285 = vmatpush1.bf16.msra.mxu0 0
        %1286 = vmatprep.subr.bf16.mxu0 0
        %1287 = vmatpush1.bf16.msra.mxu0 0
        %1288 = vmatprep.mubr.bf16.mxu0 0
        %1289 = vmatmul.mubr.bf16.gmra.mrb[0].mxu0 %v1254
        %v1290 = vpop.f32.mrb[0].mxu0
        %v1291 = vadd.f32 %v1197, %v1290
        %v1292 = vpop.f32.mrb[0].mxu0
        %v1293 = vadd.f32 %v1199, %v1292
        %v1294 = vpop.f32.mrb[0].mxu0
        %v1295 = vadd.f32 %v1201, %v1294
        %v1296 = vpop.f32.mrb[0].mxu0
        %v1297 = vadd.f32 %v1203, %v1296
        %1298 = vdwg.mxu0
        %1299 = vmatprep.subr.bf16.mxu0 %v721
        %1300 = vmatpush1.bf16.msra.mxu0 %v720
        %1301 = vmatprep.subr.bf16.mxu0 0
        %1302 = vmatpush1.bf16.msra.mxu0 0
        %1303 = vmatprep.subr.bf16.mxu0 0
        %1304 = vmatpush1.bf16.msra.mxu0 0
        %1305 = vmatprep.subr.bf16.mxu0 0
        %1306 = vmatpush1.bf16.msra.mxu0 0
        %1307 = vmatprep.subr.bf16.mxu0 0
        %1308 = vmatpush1.bf16.msra.mxu0 0
        %1309 = vmatprep.subr.bf16.mxu0 0
        %1310 = vmatpush1.bf16.msra.mxu0 0
        %1311 = vmatprep.subr.bf16.mxu0 0
        %1312 = vmatpush1.bf16.msra.mxu0 0
        %1313 = vmatprep.subr.bf16.mxu0 0
        %1314 = vmatpush1.bf16.msra.mxu0 0
        %1315 = vmatprep.subr.bf16.mxu0 0
        %1316 = vmatpush1.bf16.msra.mxu0 0
        %1317 = vmatprep.subr.bf16.mxu0 0
        %1318 = vmatpush1.bf16.msra.mxu0 0
        %1319 = vmatprep.subr.bf16.mxu0 0
        %1320 = vmatpush1.bf16.msra.mxu0 0
        %1321 = vmatprep.subr.bf16.mxu0 0
        %1322 = vmatpush1.bf16.msra.mxu0 0
        %1323 = vmatprep.subr.bf16.mxu0 0
        %1324 = vmatpush1.bf16.msra.mxu0 0
        %1325 = vmatprep.subr.bf16.mxu0 0
        %1326 = vmatpush1.bf16.msra.mxu0 0
        %1327 = vmatprep.subr.bf16.mxu0 0
        %1328 = vmatpush1.bf16.msra.mxu0 0
        %1329 = vmatprep.subr.bf16.mxu0 0
        %1330 = vmatpush1.bf16.msra.mxu0 0
        %1331 = vmatprep.mubr.bf16.mxu0 0
        %1332 = vmatmul.mubr.bf16.gmra.mrb[0].mxu0 %v1254
        %v1333 = vpop.f32.mrb[0].mxu0
        %v1334 = vadd.f32 %v1240, %v1333
        %v1335 = vpop.f32.mrb[0].mxu0
        %v1336 = vadd.f32 %v1242, %v1335
        %v1337 = vpop.f32.mrb[0].mxu0
        %v1338 = vadd.f32 %v1244, %v1337
        %v1339 = vpop.f32.mrb[0].mxu0
        %v1340 = vadd.f32 %v1246, %v1339
        %1341 = vdwg.mxu0
        %v1342 = vadd.f32 %v1291, %v432
        %v1343 = vadd.f32 %v1293, %v436
        %v1344 = vadd.f32 %v1334, %v440
        %v1345 = vadd.f32 %v1336, %v444
        %v1346 = vadd.f32 %v1295, %v432
        %v1347 = vadd.f32 %v1297, %v436
        %v1348 = vadd.f32 %v1338, %v440
        %v1349 = vadd.f32 %v1340, %v444
        %v1350 = vmul.f32 %v1342, 0.5
        %v1351 = vmul.f32 %v1346, 0.5
        %v1352 = vtanh.pop %v1350
        %v1353 = vtanh.pop %v1351
        %v1354 = vmul.f32 %v1352, 0.5
        %v1355 = vmul.f32 %v1353, 0.5
        %v1356 = vadd.f32 %v1354, 0.5
        %v1357 = vadd.f32 %v1355, 0.5
        %v1358 = vmul.f32 %v1343, 0.5
        %v1359 = vmul.f32 %v1347, 0.5
        %v1360 = vtanh.pop %v1358
        %v1361 = vtanh.pop %v1359
        %v1362 = vmul.f32 %v1360, 0.5
        %v1363 = vmul.f32 %v1361, 0.5
        %v1364 = vadd.f32 %v1362, 0.5
        %v1365 = vadd.f32 %v1363, 0.5
        %v1366 = vtanh.pop %v1344
        %v1367 = vtanh.pop %v1348
        %v1368 = vmul.f32 %v1345, 0.5
        %v1369 = vmul.f32 %v1349, 0.5
        %v1370 = vtanh.pop %v1368
        %v1371 = vtanh.pop %v1369
        %v1372 = vmul.f32 %v1370, 0.5
        %v1373 = vmul.f32 %v1371, 0.5
        %v1374 = vadd.f32 %v1372, 0.5
        %v1375 = vadd.f32 %v1373, 0.5
        %v1376 = vmul.f32 %v1364, %v1146
        %v1377 = vmul.f32 %v1365, %v1147
        %v1378 = vmul.f32 %v1356, %v1366
        %v1379 = vmul.f32 %v1357, %v1367
        %v1380 = vadd.f32 %v1376, %v1378
        %v1381 = vadd.f32 %v1377, %v1379
        %v1382 = vtanh.pop %v1380
        %v1383 = vtanh.pop %v1381
        %v1384 = vmul.f32 %v1374, %v1382
        %v1385 = vmul.f32 %v1375, %v1383
        %v1386 = vpack.c.bf16 %v1385, %v1384
        %s1387 = sadd.s32 %s449, 2
        %v1388 = vstv %s1387
        %vm1389 = vcmp.lt.s32.totalorder %v1388, %v389
        %vm1390 = vcmp.lt.s32.totalorder %v1388, %v390
        %v1391 = vsel %vm1389, 1, 0
        %v1392 = vsel %vm1390, 1, 0
        %1393 = vset.pattern.permute.xlu0 0
        %1394 = vperm.xlu0 %1393, %v1391
        %v1395 = vpop.permute.xlu0 %1394
        %1396 = vset.pattern.permute.xlu0 0
        %1397 = vperm.xlu0 %1396, %v1392
        %v1398 = vpop.permute.xlu0 %1397
        %vm1399 = vcmp.eq.s32.totalorder %v1395, 1
        %vm1400 = vcmp.eq.s32.totalorder %v1398, 1
        %vm1401 = vmpackc.low %vm1399, %vm1399
        %vm1402 = vmpackc.low %vm1400, %vm1400
        %v1403 = vsel %vm1401, 65537, 0
        %v1404 = vsel %vm1402, 65537, 0
        %v1405 = vunpack.c.l.b16 %v1403
        %v1406 = vunpack.c.l.b16 %v1404
        %v1407 = vpack.c.b16 %v1406, %v1405
        %vm1408 = vcmp.ne.s16.totalorder %v1407, 0
        %v1409 = vsel %vm1408, %v1386, %v1145
        %v1410 = vsel %vm1399, %v1380, %v1146
        %v1411 = vsel %vm1400, %v1381, %v1147
        %v1412 = vsel %vm1408, %v1386, 0
        %v1414 = vunpack.c.l.b16 %v1412
        %v1415 = vunpack.c.h.b16 %v1412
        %v1416 = vpack.c.b16 %v1414, %v1414
        %v1417 = vpack.c.b16 %v1415, %v1415
        %s1420 = scalar_lea.vmem %s362, 16 [#allocation10]
        %1421 = vst [vmem:[%s1420] sm:$0xf] %v1416
        %1422 = vst [vmem:[%s1420 + $0x4] sm:$0xf] %v1417
        %s1423 = scalar_lea.vmem %s323, 24 [#allocation4]
        %v1424 = vld [vmem:[%s1423] sm:$0xf]
        %v1425 = vld [vmem:[%s1423 + $0x4] sm:$0xf]
        %1426 = vmatprep.subr.bf16.mxu0 %v552
        %1427 = vmatpush1.bf16.msra.mxu0 %v551
        %1428 = vmatprep.subr.bf16.mxu0 %v556
        %1429 = vmatpush1.bf16.msra.mxu0 %v555
        %1430 = vmatprep.subr.bf16.mxu0 %v560
        %1431 = vmatpush1.bf16.msra.mxu0 %v559
        %1432 = vmatprep.subr.bf16.mxu0 %v564
        %1433 = vmatpush1.bf16.msra.mxu0 %v563
        %1434 = vmatprep.subr.bf16.mxu0 %v568
        %1435 = vmatpush1.bf16.msra.mxu0 %v567
        %1436 = vmatprep.subr.bf16.mxu0 %v572
        %1437 = vmatpush1.bf16.msra.mxu0 %v571
        %1438 = vmatprep.subr.bf16.mxu0 %v576
        %1439 = vmatpush1.bf16.msra.mxu0 %v575
        %1440 = vmatprep.subr.bf16.mxu0 %v580
        %1441 = vmatpush1.bf16.msra.mxu0 %v579
        %1442 = vmatprep.subr.bf16.mxu0 0
        %1443 = vmatpush1.bf16.msra.mxu0 0
        %1444 = vmatprep.subr.bf16.mxu0 0
        %1445 = vmatpush1.bf16.msra.mxu0 0
        %1446 = vmatprep.subr.bf16.mxu0 0
        %1447 = vmatpush1.bf16.msra.mxu0 0
        %1448 = vmatprep.subr.bf16.mxu0 0
        %1449 = vmatpush1.bf16.msra.mxu0 0
        %1450 = vmatprep.subr.bf16.mxu0 0
        %1451 = vmatpush1.bf16.msra.mxu0 0
        %1452 = vmatprep.subr.bf16.mxu0 0
        %1453 = vmatpush1.bf16.msra.mxu0 0
        %1454 = vmatprep.subr.bf16.mxu0 0
        %1455 = vmatpush1.bf16.msra.mxu0 0
        %1456 = vmatprep.subr.bf16.mxu0 0
        %1457 = vmatpush1.bf16.msra.mxu0 0
        %1458 = vmatprep.mubr.bf16.mxu0 0
        %1459 = vmatmul.mubr.bf16.gmra.mrb[0].mxu0 %v1409
        %v1460 = vpop.f32.mrb[0].mxu0
        %v1461 = vadd.f32 0.0, %v1460
        %v1462 = vpop.f32.mrb[0].mxu0
        %v1463 = vadd.f32 0.0, %v1462
        %v1464 = vpop.f32.mrb[0].mxu0
        %v1465 = vadd.f32 0.0, %v1464
        %v1466 = vpop.f32.mrb[0].mxu0
        %v1467 = vadd.f32 0.0, %v1466
        %1468 = vdwg.mxu0
        %1469 = vmatprep.subr.bf16.mxu0 %v554
        %1470 = vmatpush1.bf16.msra.mxu0 %v553
        %1471 = vmatprep.subr.bf16.mxu0 %v558
        %1472 = vmatpush1.bf16.msra.mxu0 %v557
        %1473 = vmatprep.subr.bf16.mxu0 %v562
        %1474 = vmatpush1.bf16.msra.mxu0 %v561
        %1475 = vmatprep.subr.bf16.mxu0 %v566
        %1476 = vmatpush1.bf16.msra.mxu0 %v565
        %1477 = vmatprep.subr.bf16.mxu0 %v570
        %1478 = vmatpush1.bf16.msra.mxu0 %v569
        %1479 = vmatprep.subr.bf16.mxu0 %v574
        %1480 = vmatpush1.bf16.msra.mxu0 %v573
        %1481 = vmatprep.subr.bf16.mxu0 %v578
        %1482 = vmatpush1.bf16.msra.mxu0 %v577
        %1483 = vmatprep.subr.bf16.mxu0 %v582
        %1484 = vmatpush1.bf16.msra.mxu0 %v581
        %1485 = vmatprep.subr.bf16.mxu0 0
        %1486 = vmatpush1.bf16.msra.mxu0 0
        %1487 = vmatprep.subr.bf16.mxu0 0
        %1488 = vmatpush1.bf16.msra.mxu0 0
        %1489 = vmatprep.subr.bf16.mxu0 0
        %1490 = vmatpush1.bf16.msra.mxu0 0
        %1491 = vmatprep.subr.bf16.mxu0 0
        %1492 = vmatpush1.bf16.msra.mxu0 0
        %1493 = vmatprep.subr.bf16.mxu0 0
        %1494 = vmatpush1.bf16.msra.mxu0 0
        %1495 = vmatprep.subr.bf16.mxu0 0
        %1496 = vmatpush1.bf16.msra.mxu0 0
        %1497 = vmatprep.subr.bf16.mxu0 0
        %1498 = vmatpush1.bf16.msra.mxu0 0
        %1499 = vmatprep.subr.bf16.mxu0 0
        %1500 = vmatpush1.bf16.msra.mxu0 0
        %1501 = vmatprep.mubr.bf16.mxu0 0
        %1502 = vmatmul.mubr.bf16.gmra.mrb[0].mxu0 %v1409
        %v1503 = vpop.f32.mrb[0].mxu0
        %v1504 = vadd.f32 0.0, %v1503
        %v1505 = vpop.f32.mrb[0].mxu0
        %v1506 = vadd.f32 0.0, %v1505
        %v1507 = vpop.f32.mrb[0].mxu0
        %v1508 = vadd.f32 0.0, %v1507
        %v1509 = vpop.f32.mrb[0].mxu0
        %v1510 = vadd.f32 0.0, %v1509
        %1511 = vdwg.mxu0
        %v1514 = vunpack.c.l.b16 %v1424
        %v1515 = vunpack.c.l.b16 %v1425
        %v1516 = vpack.c.b16 %v1515, %v1514
        %v1518 = vsel %vm726, %v1516, 0
        %1520 = vmatprep.subr.bf16.mxu0 %v719
        %1521 = vmatpush1.bf16.msra.mxu0 %v718
        %1522 = vmatprep.subr.bf16.mxu0 0
        %1523 = vmatpush1.bf16.msra.mxu0 0
        %1524 = vmatprep.subr.bf16.mxu0 0
        %1525 = vmatpush1.bf16.msra.mxu0 0
        %1526 = vmatprep.subr.bf16.mxu0 0
        %1527 = vmatpush1.bf16.msra.mxu0 0
        %1528 = vmatprep.subr.bf16.mxu0 0
        %1529 = vmatpush1.bf16.msra.mxu0 0
        %1530 = vmatprep.subr.bf16.mxu0 0
        %1531 = vmatpush1.bf16.msra.mxu0 0
        %1532 = vmatprep.subr.bf16.mxu0 0
        %1533 = vmatpush1.bf16.msra.mxu0 0
        %1534 = vmatprep.subr.bf16.mxu0 0
        %1535 = vmatpush1.bf16.msra.mxu0 0
        %1536 = vmatprep.subr.bf16.mxu0 0
        %1537 = vmatpush1.bf16.msra.mxu0 0
        %1538 = vmatprep.subr.bf16.mxu0 0
        %1539 = vmatpush1.bf16.msra.mxu0 0
        %1540 = vmatprep.subr.bf16.mxu0 0
        %1541 = vmatpush1.bf16.msra.mxu0 0
        %1542 = vmatprep.subr.bf16.mxu0 0
        %1543 = vmatpush1.bf16.msra.mxu0 0
        %1544 = vmatprep.subr.bf16.mxu0 0
        %1545 = vmatpush1.bf16.msra.mxu0 0
        %1546 = vmatprep.subr.bf16.mxu0 0
        %1547 = vmatpush1.bf16.msra.mxu0 0
        %1548 = vmatprep.subr.bf16.mxu0 0
        %1549 = vmatpush1.bf16.msra.mxu0 0
        %1550 = vmatprep.subr.bf16.mxu0 0
        %1551 = vmatpush1.bf16.msra.mxu0 0
        %1552 = vmatprep.mubr.bf16.mxu0 0
        %1553 = vmatmul.mubr.bf16.gmra.mrb[0].mxu0 %v1518
        %v1554 = vpop.f32.mrb[0].mxu0
        %v1555 = vadd.f32 %v1461, %v1554
        %v1556 = vpop.f32.mrb[0].mxu0
        %v1557 = vadd.f32 %v1463, %v1556
        %v1558 = vpop.f32.mrb[0].mxu0
        %v1559 = vadd.f32 %v1465, %v1558
        %v1560 = vpop.f32.mrb[0].mxu0
        %v1561 = vadd.f32 %v1467, %v1560
        %1562 = vdwg.mxu0
        %1563 = vmatprep.subr.bf16.mxu0 %v721
        %1564 = vmatpush1.bf16.msra.mxu0 %v720
        %1565 = vmatprep.subr.bf16.mxu0 0
        %1566 = vmatpush1.bf16.msra.mxu0 0
        %1567 = vmatprep.subr.bf16.mxu0 0
        %1568 = vmatpush1.bf16.msra.mxu0 0
        %1569 = vmatprep.subr.bf16.mxu0 0
        %1570 = vmatpush1.bf16.msra.mxu0 0
        %1571 = vmatprep.subr.bf16.mxu0 0
        %1572 = vmatpush1.bf16.msra.mxu0 0
        %1573 = vmatprep.subr.bf16.mxu0 0
        %1574 = vmatpush1.bf16.msra.mxu0 0
        %1575 = vmatprep.subr.bf16.mxu0 0
        %1576 = vmatpush1.bf16.msra.mxu0 0
        %1577 = vmatprep.subr.bf16.mxu0 0
        %1578 = vmatpush1.bf16.msra.mxu0 0
        %1579 = vmatprep.subr.bf16.mxu0 0
        %1580 = vmatpush1.bf16.msra.mxu0 0
        %1581 = vmatprep.subr.bf16.mxu0 0
        %1582 = vmatpush1.bf16.msra.mxu0 0
        %1583 = vmatprep.subr.bf16.mxu0 0
        %1584 = vmatpush1.bf16.msra.mxu0 0
        %1585 = vmatprep.subr.bf16.mxu0 0
        %1586 = vmatpush1.bf16.msra.mxu0 0
        %1587 = vmatprep.subr.bf16.mxu0 0
        %1588 = vmatpush1.bf16.msra.mxu0 0
        %1589 = vmatprep.subr.bf16.mxu0 0
        %1590 = vmatpush1.bf16.msra.mxu0 0
        %1591 = vmatprep.subr.bf16.mxu0 0
        %1592 = vmatpush1.bf16.msra.mxu0 0
        %1593 = vmatprep.subr.bf16.mxu0 0
        %1594 = vmatpush1.bf16.msra.mxu0 0
        %1595 = vmatprep.mubr.bf16.mxu0 0
        %1596 = vmatmul.mubr.bf16.gmra.mrb[0].mxu0 %v1518
        %v1597 = vpop.f32.mrb[0].mxu0
        %v1598 = vadd.f32 %v1504, %v1597
        %v1599 = vpop.f32.mrb[0].mxu0
        %v1600 = vadd.f32 %v1506, %v1599
        %v1601 = vpop.f32.mrb[0].mxu0
        %v1602 = vadd.f32 %v1508, %v1601
        %v1603 = vpop.f32.mrb[0].mxu0
        %v1604 = vadd.f32 %v1510, %v1603
        %1605 = vdwg.mxu0
        %v1606 = vadd.f32 %v1555, %v432
        %v1607 = vadd.f32 %v1557, %v436
        %v1608 = vadd.f32 %v1598, %v440
        %v1609 = vadd.f32 %v1600, %v444
        %v1610 = vadd.f32 %v1559, %v432
        %v1611 = vadd.f32 %v1561, %v436
        %v1612 = vadd.f32 %v1602, %v440
        %v1613 = vadd.f32 %v1604, %v444
        %v1614 = vmul.f32 %v1606, 0.5
        %v1615 = vmul.f32 %v1610, 0.5
        %v1616 = vtanh.pop %v1614
        %v1617 = vtanh.pop %v1615
        %v1618 = vmul.f32 %v1616, 0.5
        %v1619 = vmul.f32 %v1617, 0.5
        %v1620 = vadd.f32 %v1618, 0.5
        %v1621 = vadd.f32 %v1619, 0.5
        %v1622 = vmul.f32 %v1607, 0.5
        %v1623 = vmul.f32 %v1611, 0.5
        %v1624 = vtanh.pop %v1622
        %v1625 = vtanh.pop %v1623
        %v1626 = vmul.f32 %v1624, 0.5
        %v1627 = vmul.f32 %v1625, 0.5
        %v1628 = vadd.f32 %v1626, 0.5
        %v1629 = vadd.f32 %v1627, 0.5
        %v1630 = vtanh.pop %v1608
        %v1631 = vtanh.pop %v1612
        %v1632 = vmul.f32 %v1609, 0.5
        %v1633 = vmul.f32 %v1613, 0.5
        %v1634 = vtanh.pop %v1632
        %v1635 = vtanh.pop %v1633
        %v1636 = vmul.f32 %v1634, 0.5
        %v1637 = vmul.f32 %v1635, 0.5
        %v1638 = vadd.f32 %v1636, 0.5
        %v1639 = vadd.f32 %v1637, 0.5
        %v1640 = vmul.f32 %v1628, %v1410
        %v1641 = vmul.f32 %v1629, %v1411
        %v1642 = vmul.f32 %v1620, %v1630
        %v1643 = vmul.f32 %v1621, %v1631
        %v1644 = vadd.f32 %v1640, %v1642
        %v1645 = vadd.f32 %v1641, %v1643
        %v1646 = vtanh.pop %v1644
        %v1647 = vtanh.pop %v1645
        %v1648 = vmul.f32 %v1638, %v1646
        %v1649 = vmul.f32 %v1639, %v1647
        %v1650 = vpack.c.bf16 %v1649, %v1648
        %s1651 = sadd.s32 %s449, 3
        %v1652 = vstv %s1651
        %vm1653 = vcmp.lt.s32.totalorder %v1652, %v389
        %vm1654 = vcmp.lt.s32.totalorder %v1652, %v390
        %v1655 = vsel %vm1653, 1, 0
        %v1656 = vsel %vm1654, 1, 0
        %1657 = vset.pattern.permute.xlu0 0
        %1658 = vperm.xlu0 %1657, %v1655
        %v1659 = vpop.permute.xlu0 %1658
        %1660 = vset.pattern.permute.xlu0 0
        %1661 = vperm.xlu0 %1660, %v1656
        %v1662 = vpop.permute.xlu0 %1661
        %vm1663 = vcmp.eq.s32.totalorder %v1659, 1
        %vm1664 = vcmp.eq.s32.totalorder %v1662, 1
        %vm1665 = vmpackc.low %vm1663, %vm1663
        %vm1666 = vmpackc.low %vm1664, %vm1664
        %v1667 = vsel %vm1665, 65537, 0
        %v1668 = vsel %vm1666, 65537, 0
        %v1669 = vunpack.c.l.b16 %v1667
        %v1670 = vunpack.c.l.b16 %v1668
        %v1671 = vpack.c.b16 %v1670, %v1669
        %vm1672 = vcmp.ne.s16.totalorder %v1671, 0
        %v1673 = vsel %vm1672, %v1650, %v1409
        %v1674 = vsel %vm1663, %v1644, %v1410
        %v1675 = vsel %vm1664, %v1645, %v1411
        %v1676 = vsel %vm1672, %v1650, 0
        %v1678 = vunpack.c.l.b16 %v1676
        %v1679 = vunpack.c.h.b16 %v1676
        %v1680 = vpack.c.b16 %v1678, %v1678
        %v1681 = vpack.c.b16 %v1679, %v1679
        %s1684 = scalar_lea.vmem %s362, 24 [#allocation10]
        %1685 = vst [vmem:[%s1684] sm:$0xf] %v1680
        %1686 = vst [vmem:[%s1684 + $0x4] sm:$0xf] %v1681
        %s1687 = scalar_lea.vmem %s323, 32 [#allocation4]
        %v1688 = vld [vmem:[%s1687] sm:$0xf]
        %v1689 = vld [vmem:[%s1687 + $0x4] sm:$0xf]
        %1690 = vmatprep.subr.bf16.mxu0 %v552
        %1691 = vmatpush1.bf16.msra.mxu0 %v551
        %1692 = vmatprep.subr.bf16.mxu0 %v556
        %1693 = vmatpush1.bf16.msra.mxu0 %v555
        %1694 = vmatprep.subr.bf16.mxu0 %v560
        %1695 = vmatpush1.bf16.msra.mxu0 %v559
        %1696 = vmatprep.subr.bf16.mxu0 %v564
        %1697 = vmatpush1.bf16.msra.mxu0 %v563
        %1698 = vmatprep.subr.bf16.mxu0 %v568
        %1699 = vmatpush1.bf16.msra.mxu0 %v567
        %1700 = vmatprep.subr.bf16.mxu0 %v572
        %1701 = vmatpush1.bf16.msra.mxu0 %v571
        %1702 = vmatprep.subr.bf16.mxu0 %v576
        %1703 = vmatpush1.bf16.msra.mxu0 %v575
        %1704 = vmatprep.subr.bf16.mxu0 %v580
        %1705 = vmatpush1.bf16.msra.mxu0 %v579
        %1706 = vmatprep.subr.bf16.mxu0 0
        %1707 = vmatpush1.bf16.msra.mxu0 0
        %1708 = vmatprep.subr.bf16.mxu0 0
        %1709 = vmatpush1.bf16.msra.mxu0 0
        %1710 = vmatprep.subr.bf16.mxu0 0
        %1711 = vmatpush1.bf16.msra.mxu0 0
        %1712 = vmatprep.subr.bf16.mxu0 0
        %1713 = vmatpush1.bf16.msra.mxu0 0
        %1714 = vmatprep.subr.bf16.mxu0 0
        %1715 = vmatpush1.bf16.msra.mxu0 0
        %1716 = vmatprep.subr.bf16.mxu0 0
        %1717 = vmatpush1.bf16.msra.mxu0 0
        %1718 = vmatprep.subr.bf16.mxu0 0
        %1719 = vmatpush1.bf16.msra.mxu0 0
        %1720 = vmatprep.subr.bf16.mxu0 0
        %1721 = vmatpush1.bf16.msra.mxu0 0
        %1722 = vmatprep.mubr.bf16.mxu0 0
        %1723 = vmatmul.mubr.bf16.gmra.mrb[0].mxu0 %v1673
        %v1724 = vpop.f32.mrb[0].mxu0
        %v1725 = vadd.f32 0.0, %v1724
        %v1726 = vpop.f32.mrb[0].mxu0
        %v1727 = vadd.f32 0.0, %v1726
        %v1728 = vpop.f32.mrb[0].mxu0
        %v1729 = vadd.f32 0.0, %v1728
        %v1730 = vpop.f32.mrb[0].mxu0
        %v1731 = vadd.f32 0.0, %v1730
        %1732 = vdwg.mxu0
        %1733 = vmatprep.subr.bf16.mxu0 %v554
        %1734 = vmatpush1.bf16.msra.mxu0 %v553
        %1735 = vmatprep.subr.bf16.mxu0 %v558
        %1736 = vmatpush1.bf16.msra.mxu0 %v557
        %1737 = vmatprep.subr.bf16.mxu0 %v562
        %1738 = vmatpush1.bf16.msra.mxu0 %v561
        %1739 = vmatprep.subr.bf16.mxu0 %v566
        %1740 = vmatpush1.bf16.msra.mxu0 %v565
        %1741 = vmatprep.subr.bf16.mxu0 %v570
        %1742 = vmatpush1.bf16.msra.mxu0 %v569
        %1743 = vmatprep.subr.bf16.mxu0 %v574
        %1744 = vmatpush1.bf16.msra.mxu0 %v573
        %1745 = vmatprep.subr.bf16.mxu0 %v578
        %1746 = vmatpush1.bf16.msra.mxu0 %v577
        %1747 = vmatprep.subr.bf16.mxu0 %v582
        %1748 = vmatpush1.bf16.msra.mxu0 %v581
        %1749 = vmatprep.subr.bf16.mxu0 0
        %1750 = vmatpush1.bf16.msra.mxu0 0
        %1751 = vmatprep.subr.bf16.mxu0 0
        %1752 = vmatpush1.bf16.msra.mxu0 0
        %1753 = vmatprep.subr.bf16.mxu0 0
        %1754 = vmatpush1.bf16.msra.mxu0 0
        %1755 = vmatprep.subr.bf16.mxu0 0
        %1756 = vmatpush1.bf16.msra.mxu0 0
        %1757 = vmatprep.subr.bf16.mxu0 0
        %1758 = vmatpush1.bf16.msra.mxu0 0
        %1759 = vmatprep.subr.bf16.mxu0 0
        %1760 = vmatpush1.bf16.msra.mxu0 0
        %1761 = vmatprep.subr.bf16.mxu0 0
        %1762 = vmatpush1.bf16.msra.mxu0 0
        %1763 = vmatprep.subr.bf16.mxu0 0
        %1764 = vmatpush1.bf16.msra.mxu0 0
        %1765 = vmatprep.mubr.bf16.mxu0 0
        %1766 = vmatmul.mubr.bf16.gmra.mrb[0].mxu0 %v1673
        %v1767 = vpop.f32.mrb[0].mxu0
        %v1768 = vadd.f32 0.0, %v1767
        %v1769 = vpop.f32.mrb[0].mxu0
        %v1770 = vadd.f32 0.0, %v1769
        %v1771 = vpop.f32.mrb[0].mxu0
        %v1772 = vadd.f32 0.0, %v1771
        %v1773 = vpop.f32.mrb[0].mxu0
        %v1774 = vadd.f32 0.0, %v1773
        %1775 = vdwg.mxu0
        %v1778 = vunpack.c.l.b16 %v1688
        %v1779 = vunpack.c.l.b16 %v1689
        %v1780 = vpack.c.b16 %v1779, %v1778
        %v1782 = vsel %vm726, %v1780, 0
        %1784 = vmatprep.subr.bf16.mxu0 %v719
        %1785 = vmatpush1.bf16.msra.mxu0 %v718
        %1786 = vmatprep.subr.bf16.mxu0 0
        %1787 = vmatpush1.bf16.msra.mxu0 0
        %1788 = vmatprep.subr.bf16.mxu0 0
        %1789 = vmatpush1.bf16.msra.mxu0 0
        %1790 = vmatprep.subr.bf16.mxu0 0
        %1791 = vmatpush1.bf16.msra.mxu0 0
        %1792 = vmatprep.subr.bf16.mxu0 0
        %1793 = vmatpush1.bf16.msra.mxu0 0
        %1794 = vmatprep.subr.bf16.mxu0 0
        %1795 = vmatpush1.bf16.msra.mxu0 0
        %1796 = vmatprep.subr.bf16.mxu0 0
        %1797 = vmatpush1.bf16.msra.mxu0 0
        %1798 = vmatprep.subr.bf16.mxu0 0
        %1799 = vmatpush1.bf16.msra.mxu0 0
        %1800 = vmatprep.subr.bf16.mxu0 0
        %1801 = vmatpush1.bf16.msra.mxu0 0
        %1802 = vmatprep.subr.bf16.mxu0 0
        %1803 = vmatpush1.bf16.msra.mxu0 0
        %1804 = vmatprep.subr.bf16.mxu0 0
        %1805 = vmatpush1.bf16.msra.mxu0 0
        %1806 = vmatprep.subr.bf16.mxu0 0
        %1807 = vmatpush1.bf16.msra.mxu0 0
        %1808 = vmatprep.subr.bf16.mxu0 0
        %1809 = vmatpush1.bf16.msra.mxu0 0
        %1810 = vmatprep.subr.bf16.mxu0 0
        %1811 = vmatpush1.bf16.msra.mxu0 0
        %1812 = vmatprep.subr.bf16.mxu0 0
        %1813 = vmatpush1.bf16.msra.mxu0 0
        %1814 = vmatprep.subr.bf16.mxu0 0
        %1815 = vmatpush1.bf16.msra.mxu0 0
        %1816 = vmatprep.mubr.bf16.mxu0 0
        %1817 = vmatmul.mubr.bf16.gmra.mrb[0].mxu0 %v1782
        %v1818 = vpop.f32.mrb[0].mxu0
        %v1819 = vadd.f32 %v1725, %v1818
        %v1820 = vpop.f32.mrb[0].mxu0
        %v1821 = vadd.f32 %v1727, %v1820
        %v1822 = vpop.f32.mrb[0].mxu0
        %v1823 = vadd.f32 %v1729, %v1822
        %v1824 = vpop.f32.mrb[0].mxu0
        %v1825 = vadd.f32 %v1731, %v1824
        %1826 = vdwg.mxu0
        %1827 = vmatprep.subr.bf16.mxu0 %v721
        %1828 = vmatpush1.bf16.msra.mxu0 %v720
        %1829 = vmatprep.subr.bf16.mxu0 0
        %1830 = vmatpush1.bf16.msra.mxu0 0
        %1831 = vmatprep.subr.bf16.mxu0 0
        %1832 = vmatpush1.bf16.msra.mxu0 0
        %1833 = vmatprep.subr.bf16.mxu0 0
        %1834 = vmatpush1.bf16.msra.mxu0 0
        %1835 = vmatprep.subr.bf16.mxu0 0
        %1836 = vmatpush1.bf16.msra.mxu0 0
        %1837 = vmatprep.subr.bf16.mxu0 0
        %1838 = vmatpush1.bf16.msra.mxu0 0
        %1839 = vmatprep.subr.bf16.mxu0 0
        %1840 = vmatpush1.bf16.msra.mxu0 0
        %1841 = vmatprep.subr.bf16.mxu0 0
        %1842 = vmatpush1.bf16.msra.mxu0 0
        %1843 = vmatprep.subr.bf16.mxu0 0
        %1844 = vmatpush1.bf16.msra.mxu0 0
        %1845 = vmatprep.subr.bf16.mxu0 0
        %1846 = vmatpush1.bf16.msra.mxu0 0
        %1847 = vmatprep.subr.bf16.mxu0 0
        %1848 = vmatpush1.bf16.msra.mxu0 0
        %1849 = vmatprep.subr.bf16.mxu0 0
        %1850 = vmatpush1.bf16.msra.mxu0 0
        %1851 = vmatprep.subr.bf16.mxu0 0
        %1852 = vmatpush1.bf16.msra.mxu0 0
        %1853 = vmatprep.subr.bf16.mxu0 0
        %1854 = vmatpush1.bf16.msra.mxu0 0
        %1855 = vmatprep.subr.bf16.mxu0 0
        %1856 = vmatpush1.bf16.msra.mxu0 0
        %1857 = vmatprep.subr.bf16.mxu0 0
        %1858 = vmatpush1.bf16.msra.mxu0 0
        %1859 = vmatprep.mubr.bf16.mxu0 0
        %1860 = vmatmul.mubr.bf16.gmra.mrb[0].mxu0 %v1782
        %v1861 = vpop.f32.mrb[0].mxu0
        %v1862 = vadd.f32 %v1768, %v1861
        %v1863 = vpop.f32.mrb[0].mxu0
        %v1864 = vadd.f32 %v1770, %v1863
        %v1865 = vpop.f32.mrb[0].mxu0
        %v1866 = vadd.f32 %v1772, %v1865
        %v1867 = vpop.f32.mrb[0].mxu0
        %v1868 = vadd.f32 %v1774, %v1867
        %1869 = vdwg.mxu0
        %v1870 = vadd.f32 %v1819, %v432
        %v1871 = vadd.f32 %v1821, %v436
        %v1872 = vadd.f32 %v1862, %v440
        %v1873 = vadd.f32 %v1864, %v444
        %v1874 = vadd.f32 %v1823, %v432
        %v1875 = vadd.f32 %v1825, %v436
        %v1876 = vadd.f32 %v1866, %v440
        %v1877 = vadd.f32 %v1868, %v444
        %v1878 = vmul.f32 %v1870, 0.5
        %v1879 = vmul.f32 %v1874, 0.5
        %v1880 = vtanh.pop %v1878
        %v1881 = vtanh.pop %v1879
        %v1882 = vmul.f32 %v1880, 0.5
        %v1883 = vmul.f32 %v1881, 0.5
        %v1884 = vadd.f32 %v1882, 0.5
        %v1885 = vadd.f32 %v1883, 0.5
        %v1886 = vmul.f32 %v1871, 0.5
        %v1887 = vmul.f32 %v1875, 0.5
        %v1888 = vtanh.pop %v1886
        %v1889 = vtanh.pop %v1887
        %v1890 = vmul.f32 %v1888, 0.5
        %v1891 = vmul.f32 %v1889, 0.5
        %v1892 = vadd.f32 %v1890, 0.5
        %v1893 = vadd.f32 %v1891, 0.5
        %v1894 = vtanh.pop %v1872
        %v1895 = vtanh.pop %v1876
        %v1896 = vmul.f32 %v1873, 0.5
        %v1897 = vmul.f32 %v1877, 0.5
        %v1898 = vtanh.pop %v1896
        %v1899 = vtanh.pop %v1897
        %v1900 = vmul.f32 %v1898, 0.5
        %v1901 = vmul.f32 %v1899, 0.5
        %v1902 = vadd.f32 %v1900, 0.5
        %v1903 = vadd.f32 %v1901, 0.5
        %v1904 = vmul.f32 %v1892, %v1674
        %v1905 = vmul.f32 %v1893, %v1675
        %v1906 = vmul.f32 %v1884, %v1894
        %v1907 = vmul.f32 %v1885, %v1895
        %v1908 = vadd.f32 %v1904, %v1906
        %v1909 = vadd.f32 %v1905, %v1907
        %v1910 = vtanh.pop %v1908
        %v1911 = vtanh.pop %v1909
        %v1912 = vmul.f32 %v1902, %v1910
        %v1913 = vmul.f32 %v1903, %v1911
        %v1914 = vpack.c.bf16 %v1913, %v1912
        %s1915 = sadd.s32 %s449, 4
        %v1916 = vstv %s1915
        %vm1917 = vcmp.lt.s32.totalorder %v1916, %v389
        %vm1918 = vcmp.lt.s32.totalorder %v1916, %v390
        %v1919 = vsel %vm1917, 1, 0
        %v1920 = vsel %vm1918, 1, 0
        %1921 = vset.pattern.permute.xlu0 0
        %1922 = vperm.xlu0 %1921, %v1919
        %v1923 = vpop.permute.xlu0 %1922
        %1924 = vset.pattern.permute.xlu0 0
        %1925 = vperm.xlu0 %1924, %v1920
        %v1926 = vpop.permute.xlu0 %1925
        %vm1927 = vcmp.eq.s32.totalorder %v1923, 1
        %vm1928 = vcmp.eq.s32.totalorder %v1926, 1
        %vm1929 = vmpackc.low %vm1927, %vm1927
        %vm1930 = vmpackc.low %vm1928, %vm1928
        %v1931 = vsel %vm1929, 65537, 0
        %v1932 = vsel %vm1930, 65537, 0
        %v1933 = vunpack.c.l.b16 %v1931
        %v1934 = vunpack.c.l.b16 %v1932
        %v1935 = vpack.c.b16 %v1934, %v1933
        %vm1936 = vcmp.ne.s16.totalorder %v1935, 0
        %v1937 = vsel %vm1936, %v1914, %v1673
        %v1938 = vsel %vm1927, %v1908, %v1674
        %v1939 = vsel %vm1928, %v1909, %v1675
        %v1940 = vsel %vm1936, %v1914, 0
        %v1942 = vunpack.c.l.b16 %v1940
        %v1943 = vunpack.c.h.b16 %v1940
        %v1944 = vpack.c.b16 %v1942, %v1942
        %v1945 = vpack.c.b16 %v1943, %v1943
        %s1948 = scalar_lea.vmem %s362, 32 [#allocation10]
        %1949 = vst [vmem:[%s1948] sm:$0xf] %v1944
        %1950 = vst [vmem:[%s1948 + $0x4] sm:$0xf] %v1945
        %s1951 = scalar_lea.vmem %s323, 40 [#allocation4]
        %v1952 = vld [vmem:[%s1951] sm:$0xf]
        %v1953 = vld [vmem:[%s1951 + $0x4] sm:$0xf]
        %1954 = vmatprep.subr.bf16.mxu0 %v552
        %1955 = vmatpush1.bf16.msra.mxu0 %v551
        %1956 = vmatprep.subr.bf16.mxu0 %v556
        %1957 = vmatpush1.bf16.msra.mxu0 %v555
        %1958 = vmatprep.subr.bf16.mxu0 %v560
        %1959 = vmatpush1.bf16.msra.mxu0 %v559
        %1960 = vmatprep.subr.bf16.mxu0 %v564
        %1961 = vmatpush1.bf16.msra.mxu0 %v563
        %1962 = vmatprep.subr.bf16.mxu0 %v568
        %1963 = vmatpush1.bf16.msra.mxu0 %v567
        %1964 = vmatprep.subr.bf16.mxu0 %v572
        %1965 = vmatpush1.bf16.msra.mxu0 %v571
        %1966 = vmatprep.subr.bf16.mxu0 %v576
        %1967 = vmatpush1.bf16.msra.mxu0 %v575
        %1968 = vmatprep.subr.bf16.mxu0 %v580
        %1969 = vmatpush1.bf16.msra.mxu0 %v579
        %1970 = vmatprep.subr.bf16.mxu0 0
        %1971 = vmatpush1.bf16.msra.mxu0 0
        %1972 = vmatprep.subr.bf16.mxu0 0
        %1973 = vmatpush1.bf16.msra.mxu0 0
        %1974 = vmatprep.subr.bf16.mxu0 0
        %1975 = vmatpush1.bf16.msra.mxu0 0
        %1976 = vmatprep.subr.bf16.mxu0 0
        %1977 = vmatpush1.bf16.msra.mxu0 0
        %1978 = vmatprep.subr.bf16.mxu0 0
        %1979 = vmatpush1.bf16.msra.mxu0 0
        %1980 = vmatprep.subr.bf16.mxu0 0
        %1981 = vmatpush1.bf16.msra.mxu0 0
        %1982 = vmatprep.subr.bf16.mxu0 0
        %1983 = vmatpush1.bf16.msra.mxu0 0
        %1984 = vmatprep.subr.bf16.mxu0 0
        %1985 = vmatpush1.bf16.msra.mxu0 0
        %1986 = vmatprep.mubr.bf16.mxu0 0
        %1987 = vmatmul.mubr.bf16.gmra.mrb[0].mxu0 %v1937
        %v1988 = vpop.f32.mrb[0].mxu0
        %v1989 = vadd.f32 0.0, %v1988
        %v1990 = vpop.f32.mrb[0].mxu0
        %v1991 = vadd.f32 0.0, %v1990
        %v1992 = vpop.f32.mrb[0].mxu0
        %v1993 = vadd.f32 0.0, %v1992
        %v1994 = vpop.f32.mrb[0].mxu0
        %v1995 = vadd.f32 0.0, %v1994
        %1996 = vdwg.mxu0
        %1997 = vmatprep.subr.bf16.mxu0 %v554
        %1998 = vmatpush1.bf16.msra.mxu0 %v553
        %1999 = vmatprep.subr.bf16.mxu0 %v558
        %2000 = vmatpush1.bf16.msra.mxu0 %v557
        %2001 = vmatprep.subr.bf16.mxu0 %v562
        %2002 = vmatpush1.bf16.msra.mxu0 %v561
        %2003 = vmatprep.subr.bf16.mxu0 %v566
        %2004 = vmatpush1.bf16.msra.mxu0 %v565
        %2005 = vmatprep.subr.bf16.mxu0 %v570
        %2006 = vmatpush1.bf16.msra.mxu0 %v569
        %2007 = vmatprep.subr.bf16.mxu0 %v574
        %2008 = vmatpush1.bf16.msra.mxu0 %v573
        %2009 = vmatprep.subr.bf16.mxu0 %v578
        %2010 = vmatpush1.bf16.msra.mxu0 %v577
        %2011 = vmatprep.subr.bf16.mxu0 %v582
        %2012 = vmatpush1.bf16.msra.mxu0 %v581
        %2013 = vmatprep.subr.bf16.mxu0 0
        %2014 = vmatpush1.bf16.msra.mxu0 0
        %2015 = vmatprep.subr.bf16.mxu0 0
        %2016 = vmatpush1.bf16.msra.mxu0 0
        %2017 = vmatprep.subr.bf16.mxu0 0
        %2018 = vmatpush1.bf16.msra.mxu0 0
        %2019 = vmatprep.subr.bf16.mxu0 0
        %2020 = vmatpush1.bf16.msra.mxu0 0
        %2021 = vmatprep.subr.bf16.mxu0 0
        %2022 = vmatpush1.bf16.msra.mxu0 0
        %2023 = vmatprep.subr.bf16.mxu0 0
        %2024 = vmatpush1.bf16.msra.mxu0 0
        %2025 = vmatprep.subr.bf16.mxu0 0
        %2026 = vmatpush1.bf16.msra.mxu0 0
        %2027 = vmatprep.subr.bf16.mxu0 0
        %2028 = vmatpush1.bf16.msra.mxu0 0
        %2029 = vmatprep.mubr.bf16.mxu0 0
        %2030 = vmatmul.mubr.bf16.gmra.mrb[0].mxu0 %v1937
        %v2031 = vpop.f32.mrb[0].mxu0
        %v2032 = vadd.f32 0.0, %v2031
        %v2033 = vpop.f32.mrb[0].mxu0
        %v2034 = vadd.f32 0.0, %v2033
        %v2035 = vpop.f32.mrb[0].mxu0
        %v2036 = vadd.f32 0.0, %v2035
        %v2037 = vpop.f32.mrb[0].mxu0
        %v2038 = vadd.f32 0.0, %v2037
        %2039 = vdwg.mxu0
        %v2042 = vunpack.c.l.b16 %v1952
        %v2043 = vunpack.c.l.b16 %v1953
        %v2044 = vpack.c.b16 %v2043, %v2042
        %v2046 = vsel %vm726, %v2044, 0
        %2048 = vmatprep.subr.bf16.mxu0 %v719
        %2049 = vmatpush1.bf16.msra.mxu0 %v718
        %2050 = vmatprep.subr.bf16.mxu0 0
        %2051 = vmatpush1.bf16.msra.mxu0 0
        %2052 = vmatprep.subr.bf16.mxu0 0
        %2053 = vmatpush1.bf16.msra.mxu0 0
        %2054 = vmatprep.subr.bf16.mxu0 0
        %2055 = vmatpush1.bf16.msra.mxu0 0
        %2056 = vmatprep.subr.bf16.mxu0 0
        %2057 = vmatpush1.bf16.msra.mxu0 0
        %2058 = vmatprep.subr.bf16.mxu0 0
        %2059 = vmatpush1.bf16.msra.mxu0 0
        %2060 = vmatprep.subr.bf16.mxu0 0
        %2061 = vmatpush1.bf16.msra.mxu0 0
        %2062 = vmatprep.subr.bf16.mxu0 0
        %2063 = vmatpush1.bf16.msra.mxu0 0
        %2064 = vmatprep.subr.bf16.mxu0 0
        %2065 = vmatpush1.bf16.msra.mxu0 0
        %2066 = vmatprep.subr.bf16.mxu0 0
        %2067 = vmatpush1.bf16.msra.mxu0 0
        %2068 = vmatprep.subr.bf16.mxu0 0
        %2069 = vmatpush1.bf16.msra.mxu0 0
        %2070 = vmatprep.subr.bf16.mxu0 0
        %2071 = vmatpush1.bf16.msra.mxu0 0
        %2072 = vmatprep.subr.bf16.mxu0 0
        %2073 = vmatpush1.bf16.msra.mxu0 0
        %2074 = vmatprep.subr.bf16.mxu0 0
        %2075 = vmatpush1.bf16.msra.mxu0 0
        %2076 = vmatprep.subr.bf16.mxu0 0
        %2077 = vmatpush1.bf16.msra.mxu0 0
        %2078 = vmatprep.subr.bf16.mxu0 0
        %2079 = vmatpush1.bf16.msra.mxu0 0
        %2080 = vmatprep.mubr.bf16.mxu0 0
        %2081 = vmatmul.mubr.bf16.gmra.mrb[0].mxu0 %v2046
        %v2082 = vpop.f32.mrb[0].mxu0
        %v2083 = vadd.f32 %v1989, %v2082
        %v2084 = vpop.f32.mrb[0].mxu0
        %v2085 = vadd.f32 %v1991, %v2084
        %v2086 = vpop.f32.mrb[0].mxu0
        %v2087 = vadd.f32 %v1993, %v2086
        %v2088 = vpop.f32.mrb[0].mxu0
        %v2089 = vadd.f32 %v1995, %v2088
        %2090 = vdwg.mxu0
        %2091 = vmatprep.subr.bf16.mxu0 %v721
        %2092 = vmatpush1.bf16.msra.mxu0 %v720
        %2093 = vmatprep.subr.bf16.mxu0 0
        %2094 = vmatpush1.bf16.msra.mxu0 0
        %2095 = vmatprep.subr.bf16.mxu0 0
        %2096 = vmatpush1.bf16.msra.mxu0 0
        %2097 = vmatprep.subr.bf16.mxu0 0
        %2098 = vmatpush1.bf16.msra.mxu0 0
        %2099 = vmatprep.subr.bf16.mxu0 0
        %2100 = vmatpush1.bf16.msra.mxu0 0
        %2101 = vmatprep.subr.bf16.mxu0 0
        %2102 = vmatpush1.bf16.msra.mxu0 0
        %2103 = vmatprep.subr.bf16.mxu0 0
        %2104 = vmatpush1.bf16.msra.mxu0 0
        %2105 = vmatprep.subr.bf16.mxu0 0
        %2106 = vmatpush1.bf16.msra.mxu0 0
        %2107 = vmatprep.subr.bf16.mxu0 0
        %2108 = vmatpush1.bf16.msra.mxu0 0
        %2109 = vmatprep.subr.bf16.mxu0 0
        %2110 = vmatpush1.bf16.msra.mxu0 0
        %2111 = vmatprep.subr.bf16.mxu0 0
        %2112 = vmatpush1.bf16.msra.mxu0 0
        %2113 = vmatprep.subr.bf16.mxu0 0
        %2114 = vmatpush1.bf16.msra.mxu0 0
        %2115 = vmatprep.subr.bf16.mxu0 0
        %2116 = vmatpush1.bf16.msra.mxu0 0
        %2117 = vmatprep.subr.bf16.mxu0 0
        %2118 = vmatpush1.bf16.msra.mxu0 0
        %2119 = vmatprep.subr.bf16.mxu0 0
        %2120 = vmatpush1.bf16.msra.mxu0 0
        %2121 = vmatprep.subr.bf16.mxu0 0
        %2122 = vmatpush1.bf16.msra.mxu0 0
        %2123 = vmatprep.mubr.bf16.mxu0 0
        %2124 = vmatmul.mubr.bf16.gmra.mrb[0].mxu0 %v2046
        %v2125 = vpop.f32.mrb[0].mxu0
        %v2126 = vadd.f32 %v2032, %v2125
        %v2127 = vpop.f32.mrb[0].mxu0
        %v2128 = vadd.f32 %v2034, %v2127
        %v2129 = vpop.f32.mrb[0].mxu0
        %v2130 = vadd.f32 %v2036, %v2129
        %v2131 = vpop.f32.mrb[0].mxu0
        %v2132 = vadd.f32 %v2038, %v2131
        %2133 = vdwg.mxu0
        %v2134 = vadd.f32 %v2083, %v432
        %v2135 = vadd.f32 %v2085, %v436
        %v2136 = vadd.f32 %v2126, %v440
        %v2137 = vadd.f32 %v2128, %v444
        %v2138 = vadd.f32 %v2087, %v432
        %v2139 = vadd.f32 %v2089, %v436
        %v2140 = vadd.f32 %v2130, %v440
        %v2141 = vadd.f32 %v2132, %v444
        %v2142 = vmul.f32 %v2134, 0.5
        %v2143 = vmul.f32 %v2138, 0.5
        %v2144 = vtanh.pop %v2142
        %v2145 = vtanh.pop %v2143
        %v2146 = vmul.f32 %v2144, 0.5
        %v2147 = vmul.f32 %v2145, 0.5
        %v2148 = vadd.f32 %v2146, 0.5
        %v2149 = vadd.f32 %v2147, 0.5
        %v2150 = vmul.f32 %v2135, 0.5
        %v2151 = vmul.f32 %v2139, 0.5
        %v2152 = vtanh.pop %v2150
        %v2153 = vtanh.pop %v2151
        %v2154 = vmul.f32 %v2152, 0.5
        %v2155 = vmul.f32 %v2153, 0.5
        %v2156 = vadd.f32 %v2154, 0.5
        %v2157 = vadd.f32 %v2155, 0.5
        %v2158 = vtanh.pop %v2136
        %v2159 = vtanh.pop %v2140
        %v2160 = vmul.f32 %v2137, 0.5
        %v2161 = vmul.f32 %v2141, 0.5
        %v2162 = vtanh.pop %v2160
        %v2163 = vtanh.pop %v2161
        %v2164 = vmul.f32 %v2162, 0.5
        %v2165 = vmul.f32 %v2163, 0.5
        %v2166 = vadd.f32 %v2164, 0.5
        %v2167 = vadd.f32 %v2165, 0.5
        %v2168 = vmul.f32 %v2156, %v1938
        %v2169 = vmul.f32 %v2157, %v1939
        %v2170 = vmul.f32 %v2148, %v2158
        %v2171 = vmul.f32 %v2149, %v2159
        %v2172 = vadd.f32 %v2168, %v2170
        %v2173 = vadd.f32 %v2169, %v2171
        %v2174 = vtanh.pop %v2172
        %v2175 = vtanh.pop %v2173
        %v2176 = vmul.f32 %v2166, %v2174
        %v2177 = vmul.f32 %v2167, %v2175
        %v2178 = vpack.c.bf16 %v2177, %v2176
        %s2179 = sadd.s32 %s449, 5
        %v2180 = vstv %s2179
        %vm2181 = vcmp.lt.s32.totalorder %v2180, %v389
        %vm2182 = vcmp.lt.s32.totalorder %v2180, %v390
        %v2183 = vsel %vm2181, 1, 0
        %v2184 = vsel %vm2182, 1, 0
        %2185 = vset.pattern.permute.xlu0 0
        %2186 = vperm.xlu0 %2185, %v2183
        %v2187 = vpop.permute.xlu0 %2186
        %2188 = vset.pattern.permute.xlu0 0
        %2189 = vperm.xlu0 %2188, %v2184
        %v2190 = vpop.permute.xlu0 %2189
        %vm2191 = vcmp.eq.s32.totalorder %v2187, 1
        %vm2192 = vcmp.eq.s32.totalorder %v2190, 1
        %vm2193 = vmpackc.low %vm2191, %vm2191
        %vm2194 = vmpackc.low %vm2192, %vm2192
        %v2195 = vsel %vm2193, 65537, 0
        %v2196 = vsel %vm2194, 65537, 0
        %v2197 = vunpack.c.l.b16 %v2195
        %v2198 = vunpack.c.l.b16 %v2196
        %v2199 = vpack.c.b16 %v2198, %v2197
        %vm2200 = vcmp.ne.s16.totalorder %v2199, 0
        %v2201 = vsel %vm2200, %v2178, %v1937
        %v2202 = vsel %vm2191, %v2172, %v1938
        %v2203 = vsel %vm2192, %v2173, %v1939
        %v2204 = vsel %vm2200, %v2178, 0
        %v2206 = vunpack.c.l.b16 %v2204
        %v2207 = vunpack.c.h.b16 %v2204
        %v2208 = vpack.c.b16 %v2206, %v2206
        %v2209 = vpack.c.b16 %v2207, %v2207
        %s2212 = scalar_lea.vmem %s362, 40 [#allocation10]
        %2213 = vst [vmem:[%s2212] sm:$0xf] %v2208
        %2214 = vst [vmem:[%s2212 + $0x4] sm:$0xf] %v2209
        %s2215 = scalar_lea.vmem %s323, 48 [#allocation4]
        %v2216 = vld [vmem:[%s2215] sm:$0xf]
        %v2217 = vld [vmem:[%s2215 + $0x4] sm:$0xf]
        %2218 = vmatprep.subr.bf16.mxu0 %v552
        %2219 = vmatpush1.bf16.msra.mxu0 %v551
        %2220 = vmatprep.subr.bf16.mxu0 %v556
        %2221 = vmatpush1.bf16.msra.mxu0 %v555
        %2222 = vmatprep.subr.bf16.mxu0 %v560
        %2223 = vmatpush1.bf16.msra.mxu0 %v559
        %2224 = vmatprep.subr.bf16.mxu0 %v564
        %2225 = vmatpush1.bf16.msra.mxu0 %v563
        %2226 = vmatprep.subr.bf16.mxu0 %v568
        %2227 = vmatpush1.bf16.msra.mxu0 %v567
        %2228 = vmatprep.subr.bf16.mxu0 %v572
        %2229 = vmatpush1.bf16.msra.mxu0 %v571
        %2230 = vmatprep.subr.bf16.mxu0 %v576
        %2231 = vmatpush1.bf16.msra.mxu0 %v575
        %2232 = vmatprep.subr.bf16.mxu0 %v580
        %2233 = vmatpush1.bf16.msra.mxu0 %v579
        %2234 = vmatprep.subr.bf16.mxu0 0
        %2235 = vmatpush1.bf16.msra.mxu0 0
        %2236 = vmatprep.subr.bf16.mxu0 0
        %2237 = vmatpush1.bf16.msra.mxu0 0
        %2238 = vmatprep.subr.bf16.mxu0 0
        %2239 = vmatpush1.bf16.msra.mxu0 0
        %2240 = vmatprep.subr.bf16.mxu0 0
        %2241 = vmatpush1.bf16.msra.mxu0 0
        %2242 = vmatprep.subr.bf16.mxu0 0
        %2243 = vmatpush1.bf16.msra.mxu0 0
        %2244 = vmatprep.subr.bf16.mxu0 0
        %2245 = vmatpush1.bf16.msra.mxu0 0
        %2246 = vmatprep.subr.bf16.mxu0 0
        %2247 = vmatpush1.bf16.msra.mxu0 0
        %2248 = vmatprep.subr.bf16.mxu0 0
        %2249 = vmatpush1.bf16.msra.mxu0 0
        %2250 = vmatprep.mubr.bf16.mxu0 0
        %2251 = vmatmul.mubr.bf16.gmra.mrb[0].mxu0 %v2201
        %v2252 = vpop.f32.mrb[0].mxu0
        %v2253 = vadd.f32 0.0, %v2252
        %v2254 = vpop.f32.mrb[0].mxu0
        %v2255 = vadd.f32 0.0, %v2254
        %v2256 = vpop.f32.mrb[0].mxu0
        %v2257 = vadd.f32 0.0, %v2256
        %v2258 = vpop.f32.mrb[0].mxu0
        %v2259 = vadd.f32 0.0, %v2258
        %2260 = vdwg.mxu0
        %2261 = vmatprep.subr.bf16.mxu0 %v554
        %2262 = vmatpush1.bf16.msra.mxu0 %v553
        %2263 = vmatprep.subr.bf16.mxu0 %v558
        %2264 = vmatpush1.bf16.msra.mxu0 %v557
        %2265 = vmatprep.subr.bf16.mxu0 %v562
        %2266 = vmatpush1.bf16.msra.mxu0 %v561
        %2267 = vmatprep.subr.bf16.mxu0 %v566
        %2268 = vmatpush1.bf16.msra.mxu0 %v565
        %2269 = vmatprep.subr.bf16.mxu0 %v570
        %2270 = vmatpush1.bf16.msra.mxu0 %v569
        %2271 = vmatprep.subr.bf16.mxu0 %v574
        %2272 = vmatpush1.bf16.msra.mxu0 %v573
        %2273 = vmatprep.subr.bf16.mxu0 %v578
        %2274 = vmatpush1.bf16.msra.mxu0 %v577
        %2275 = vmatprep.subr.bf16.mxu0 %v582
        %2276 = vmatpush1.bf16.msra.mxu0 %v581
        %2277 = vmatprep.subr.bf16.mxu0 0
        %2278 = vmatpush1.bf16.msra.mxu0 0
        %2279 = vmatprep.subr.bf16.mxu0 0
        %2280 = vmatpush1.bf16.msra.mxu0 0
        %2281 = vmatprep.subr.bf16.mxu0 0
        %2282 = vmatpush1.bf16.msra.mxu0 0
        %2283 = vmatprep.subr.bf16.mxu0 0
        %2284 = vmatpush1.bf16.msra.mxu0 0
        %2285 = vmatprep.subr.bf16.mxu0 0
        %2286 = vmatpush1.bf16.msra.mxu0 0
        %2287 = vmatprep.subr.bf16.mxu0 0
        %2288 = vmatpush1.bf16.msra.mxu0 0
        %2289 = vmatprep.subr.bf16.mxu0 0
        %2290 = vmatpush1.bf16.msra.mxu0 0
        %2291 = vmatprep.subr.bf16.mxu0 0
        %2292 = vmatpush1.bf16.msra.mxu0 0
        %2293 = vmatprep.mubr.bf16.mxu0 0
        %2294 = vmatmul.mubr.bf16.gmra.mrb[0].mxu0 %v2201
        %v2295 = vpop.f32.mrb[0].mxu0
        %v2296 = vadd.f32 0.0, %v2295
        %v2297 = vpop.f32.mrb[0].mxu0
        %v2298 = vadd.f32 0.0, %v2297
        %v2299 = vpop.f32.mrb[0].mxu0
        %v2300 = vadd.f32 0.0, %v2299
        %v2301 = vpop.f32.mrb[0].mxu0
        %v2302 = vadd.f32 0.0, %v2301
        %2303 = vdwg.mxu0
        %v2306 = vunpack.c.l.b16 %v2216
        %v2307 = vunpack.c.l.b16 %v2217
        %v2308 = vpack.c.b16 %v2307, %v2306
        %v2310 = vsel %vm726, %v2308, 0
        %2312 = vmatprep.subr.bf16.mxu0 %v719
        %2313 = vmatpush1.bf16.msra.mxu0 %v718
        %2314 = vmatprep.subr.bf16.mxu0 0
        %2315 = vmatpush1.bf16.msra.mxu0 0
        %2316 = vmatprep.subr.bf16.mxu0 0
        %2317 = vmatpush1.bf16.msra.mxu0 0
        %2318 = vmatprep.subr.bf16.mxu0 0
        %2319 = vmatpush1.bf16.msra.mxu0 0
        %2320 = vmatprep.subr.bf16.mxu0 0
        %2321 = vmatpush1.bf16.msra.mxu0 0
        %2322 = vmatprep.subr.bf16.mxu0 0
        %2323 = vmatpush1.bf16.msra.mxu0 0
        %2324 = vmatprep.subr.bf16.mxu0 0
        %2325 = vmatpush1.bf16.msra.mxu0 0
        %2326 = vmatprep.subr.bf16.mxu0 0
        %2327 = vmatpush1.bf16.msra.mxu0 0
        %2328 = vmatprep.subr.bf16.mxu0 0
        %2329 = vmatpush1.bf16.msra.mxu0 0
        %2330 = vmatprep.subr.bf16.mxu0 0
        %2331 = vmatpush1.bf16.msra.mxu0 0
        %2332 = vmatprep.subr.bf16.mxu0 0
        %2333 = vmatpush1.bf16.msra.mxu0 0
        %2334 = vmatprep.subr.bf16.mxu0 0
        %2335 = vmatpush1.bf16.msra.mxu0 0
        %2336 = vmatprep.subr.bf16.mxu0 0
        %2337 = vmatpush1.bf16.msra.mxu0 0
        %2338 = vmatprep.subr.bf16.mxu0 0
        %2339 = vmatpush1.bf16.msra.mxu0 0
        %2340 = vmatprep.subr.bf16.mxu0 0
        %2341 = vmatpush1.bf16.msra.mxu0 0
        %2342 = vmatprep.subr.bf16.mxu0 0
        %2343 = vmatpush1.bf16.msra.mxu0 0
        %2344 = vmatprep.mubr.bf16.mxu0 0
        %2345 = vmatmul.mubr.bf16.gmra.mrb[0].mxu0 %v2310
        %v2346 = vpop.f32.mrb[0].mxu0
        %v2347 = vadd.f32 %v2253, %v2346
        %v2348 = vpop.f32.mrb[0].mxu0
        %v2349 = vadd.f32 %v2255, %v2348
        %v2350 = vpop.f32.mrb[0].mxu0
        %v2351 = vadd.f32 %v2257, %v2350
        %v2352 = vpop.f32.mrb[0].mxu0
        %v2353 = vadd.f32 %v2259, %v2352
        %2354 = vdwg.mxu0
        %2355 = vmatprep.subr.bf16.mxu0 %v721
        %2356 = vmatpush1.bf16.msra.mxu0 %v720
        %2357 = vmatprep.subr.bf16.mxu0 0
        %2358 = vmatpush1.bf16.msra.mxu0 0
        %2359 = vmatprep.subr.bf16.mxu0 0
        %2360 = vmatpush1.bf16.msra.mxu0 0
        %2361 = vmatprep.subr.bf16.mxu0 0
        %2362 = vmatpush1.bf16.msra.mxu0 0
        %2363 = vmatprep.subr.bf16.mxu0 0
        %2364 = vmatpush1.bf16.msra.mxu0 0
        %2365 = vmatprep.subr.bf16.mxu0 0
        %2366 = vmatpush1.bf16.msra.mxu0 0
        %2367 = vmatprep.subr.bf16.mxu0 0
        %2368 = vmatpush1.bf16.msra.mxu0 0
        %2369 = vmatprep.subr.bf16.mxu0 0
        %2370 = vmatpush1.bf16.msra.mxu0 0
        %2371 = vmatprep.subr.bf16.mxu0 0
        %2372 = vmatpush1.bf16.msra.mxu0 0
        %2373 = vmatprep.subr.bf16.mxu0 0
        %2374 = vmatpush1.bf16.msra.mxu0 0
        %2375 = vmatprep.subr.bf16.mxu0 0
        %2376 = vmatpush1.bf16.msra.mxu0 0
        %2377 = vmatprep.subr.bf16.mxu0 0
        %2378 = vmatpush1.bf16.msra.mxu0 0
        %2379 = vmatprep.subr.bf16.mxu0 0
        %2380 = vmatpush1.bf16.msra.mxu0 0
        %2381 = vmatprep.subr.bf16.mxu0 0
        %2382 = vmatpush1.bf16.msra.mxu0 0
        %2383 = vmatprep.subr.bf16.mxu0 0
        %2384 = vmatpush1.bf16.msra.mxu0 0
        %2385 = vmatprep.subr.bf16.mxu0 0
        %2386 = vmatpush1.bf16.msra.mxu0 0
        %2387 = vmatprep.mubr.bf16.mxu0 0
        %2388 = vmatmul.mubr.bf16.gmra.mrb[0].mxu0 %v2310
        %v2389 = vpop.f32.mrb[0].mxu0
        %v2390 = vadd.f32 %v2296, %v2389
        %v2391 = vpop.f32.mrb[0].mxu0
        %v2392 = vadd.f32 %v2298, %v2391
        %v2393 = vpop.f32.mrb[0].mxu0
        %v2394 = vadd.f32 %v2300, %v2393
        %v2395 = vpop.f32.mrb[0].mxu0
        %v2396 = vadd.f32 %v2302, %v2395
        %2397 = vdwg.mxu0
        %v2398 = vadd.f32 %v2347, %v432
        %v2399 = vadd.f32 %v2349, %v436
        %v2400 = vadd.f32 %v2390, %v440
        %v2401 = vadd.f32 %v2392, %v444
        %v2402 = vadd.f32 %v2351, %v432
        %v2403 = vadd.f32 %v2353, %v436
        %v2404 = vadd.f32 %v2394, %v440
        %v2405 = vadd.f32 %v2396, %v444
        %v2406 = vmul.f32 %v2398, 0.5
        %v2407 = vmul.f32 %v2402, 0.5
        %v2408 = vtanh.pop %v2406
        %v2409 = vtanh.pop %v2407
        %v2410 = vmul.f32 %v2408, 0.5
        %v2411 = vmul.f32 %v2409, 0.5
        %v2412 = vadd.f32 %v2410, 0.5
        %v2413 = vadd.f32 %v2411, 0.5
        %v2414 = vmul.f32 %v2399, 0.5
        %v2415 = vmul.f32 %v2403, 0.5
        %v2416 = vtanh.pop %v2414
        %v2417 = vtanh.pop %v2415
        %v2418 = vmul.f32 %v2416, 0.5
        %v2419 = vmul.f32 %v2417, 0.5
        %v2420 = vadd.f32 %v2418, 0.5
        %v2421 = vadd.f32 %v2419, 0.5
        %v2422 = vtanh.pop %v2400
        %v2423 = vtanh.pop %v2404
        %v2424 = vmul.f32 %v2401, 0.5
        %v2425 = vmul.f32 %v2405, 0.5
        %v2426 = vtanh.pop %v2424
        %v2427 = vtanh.pop %v2425
        %v2428 = vmul.f32 %v2426, 0.5
        %v2429 = vmul.f32 %v2427, 0.5
        %v2430 = vadd.f32 %v2428, 0.5
        %v2431 = vadd.f32 %v2429, 0.5
        %v2432 = vmul.f32 %v2420, %v2202
        %v2433 = vmul.f32 %v2421, %v2203
        %v2434 = vmul.f32 %v2412, %v2422
        %v2435 = vmul.f32 %v2413, %v2423
        %v2436 = vadd.f32 %v2432, %v2434
        %v2437 = vadd.f32 %v2433, %v2435
        %v2438 = vtanh.pop %v2436
        %v2439 = vtanh.pop %v2437
        %v2440 = vmul.f32 %v2430, %v2438
        %v2441 = vmul.f32 %v2431, %v2439
        %v2442 = vpack.c.bf16 %v2441, %v2440
        %s2443 = sadd.s32 %s449, 6
        %v2444 = vstv %s2443
        %vm2445 = vcmp.lt.s32.totalorder %v2444, %v389
        %vm2446 = vcmp.lt.s32.totalorder %v2444, %v390
        %v2447 = vsel %vm2445, 1, 0
        %v2448 = vsel %vm2446, 1, 0
        %2449 = vset.pattern.permute.xlu0 0
        %2450 = vperm.xlu0 %2449, %v2447
        %v2451 = vpop.permute.xlu0 %2450
        %2452 = vset.pattern.permute.xlu0 0
        %2453 = vperm.xlu0 %2452, %v2448
        %v2454 = vpop.permute.xlu0 %2453
        %vm2455 = vcmp.eq.s32.totalorder %v2451, 1
        %vm2456 = vcmp.eq.s32.totalorder %v2454, 1
        %vm2457 = vmpackc.low %vm2455, %vm2455
        %vm2458 = vmpackc.low %vm2456, %vm2456
        %v2459 = vsel %vm2457, 65537, 0
        %v2460 = vsel %vm2458, 65537, 0
        %v2461 = vunpack.c.l.b16 %v2459
        %v2462 = vunpack.c.l.b16 %v2460
        %v2463 = vpack.c.b16 %v2462, %v2461
        %vm2464 = vcmp.ne.s16.totalorder %v2463, 0
        %v2465 = vsel %vm2464, %v2442, %v2201
        %v2466 = vsel %vm2455, %v2436, %v2202
        %v2467 = vsel %vm2456, %v2437, %v2203
        %v2468 = vsel %vm2464, %v2442, 0
        %v2470 = vunpack.c.l.b16 %v2468
        %v2471 = vunpack.c.h.b16 %v2468
        %v2472 = vpack.c.b16 %v2470, %v2470
        %v2473 = vpack.c.b16 %v2471, %v2471
        %s2476 = scalar_lea.vmem %s362, 48 [#allocation10]
        %2477 = vst [vmem:[%s2476] sm:$0xf] %v2472
        %2478 = vst [vmem:[%s2476 + $0x4] sm:$0xf] %v2473
        %s2479 = scalar_lea.vmem %s323, 56 [#allocation4]
        %v2480 = vld [vmem:[%s2479] sm:$0xf]
        %v2481 = vld [vmem:[%s2479 + $0x4] sm:$0xf]
        %2482 = vmatprep.subr.bf16.mxu0 %v552
        %2483 = vmatpush1.bf16.msra.mxu0 %v551
        %2484 = vmatprep.subr.bf16.mxu0 %v556
        %2485 = vmatpush1.bf16.msra.mxu0 %v555
        %2486 = vmatprep.subr.bf16.mxu0 %v560
        %2487 = vmatpush1.bf16.msra.mxu0 %v559
        %2488 = vmatprep.subr.bf16.mxu0 %v564
        %2489 = vmatpush1.bf16.msra.mxu0 %v563
        %2490 = vmatprep.subr.bf16.mxu0 %v568
        %2491 = vmatpush1.bf16.msra.mxu0 %v567
        %2492 = vmatprep.subr.bf16.mxu0 %v572
        %2493 = vmatpush1.bf16.msra.mxu0 %v571
        %2494 = vmatprep.subr.bf16.mxu0 %v576
        %2495 = vmatpush1.bf16.msra.mxu0 %v575
        %2496 = vmatprep.subr.bf16.mxu0 %v580
        %2497 = vmatpush1.bf16.msra.mxu0 %v579
        %2498 = vmatprep.subr.bf16.mxu0 0
        %2499 = vmatpush1.bf16.msra.mxu0 0
        %2500 = vmatprep.subr.bf16.mxu0 0
        %2501 = vmatpush1.bf16.msra.mxu0 0
        %2502 = vmatprep.subr.bf16.mxu0 0
        %2503 = vmatpush1.bf16.msra.mxu0 0
        %2504 = vmatprep.subr.bf16.mxu0 0
        %2505 = vmatpush1.bf16.msra.mxu0 0
        %2506 = vmatprep.subr.bf16.mxu0 0
        %2507 = vmatpush1.bf16.msra.mxu0 0
        %2508 = vmatprep.subr.bf16.mxu0 0
        %2509 = vmatpush1.bf16.msra.mxu0 0
        %2510 = vmatprep.subr.bf16.mxu0 0
        %2511 = vmatpush1.bf16.msra.mxu0 0
        %2512 = vmatprep.subr.bf16.mxu0 0
        %2513 = vmatpush1.bf16.msra.mxu0 0
        %2514 = vmatprep.mubr.bf16.mxu0 0
        %2515 = vmatmul.mubr.bf16.gmra.mrb[0].mxu0 %v2465
        %v2516 = vpop.f32.mrb[0].mxu0
        %v2517 = vadd.f32 0.0, %v2516
        %v2518 = vpop.f32.mrb[0].mxu0
        %v2519 = vadd.f32 0.0, %v2518
        %v2520 = vpop.f32.mrb[0].mxu0
        %v2521 = vadd.f32 0.0, %v2520
        %v2522 = vpop.f32.mrb[0].mxu0
        %v2523 = vadd.f32 0.0, %v2522
        %2524 = vdwg.mxu0
        %2525 = vmatprep.subr.bf16.mxu0 %v554
        %2526 = vmatpush1.bf16.msra.mxu0 %v553
        %2527 = vmatprep.subr.bf16.mxu0 %v558
        %2528 = vmatpush1.bf16.msra.mxu0 %v557
        %2529 = vmatprep.subr.bf16.mxu0 %v562
        %2530 = vmatpush1.bf16.msra.mxu0 %v561
        %2531 = vmatprep.subr.bf16.mxu0 %v566
        %2532 = vmatpush1.bf16.msra.mxu0 %v565
        %2533 = vmatprep.subr.bf16.mxu0 %v570
        %2534 = vmatpush1.bf16.msra.mxu0 %v569
        %2535 = vmatprep.subr.bf16.mxu0 %v574
        %2536 = vmatpush1.bf16.msra.mxu0 %v573
        %2537 = vmatprep.subr.bf16.mxu0 %v578
        %2538 = vmatpush1.bf16.msra.mxu0 %v577
        %2539 = vmatprep.subr.bf16.mxu0 %v582
        %2540 = vmatpush1.bf16.msra.mxu0 %v581
        %2541 = vmatprep.subr.bf16.mxu0 0
        %2542 = vmatpush1.bf16.msra.mxu0 0
        %2543 = vmatprep.subr.bf16.mxu0 0
        %2544 = vmatpush1.bf16.msra.mxu0 0
        %2545 = vmatprep.subr.bf16.mxu0 0
        %2546 = vmatpush1.bf16.msra.mxu0 0
        %2547 = vmatprep.subr.bf16.mxu0 0
        %2548 = vmatpush1.bf16.msra.mxu0 0
        %2549 = vmatprep.subr.bf16.mxu0 0
        %2550 = vmatpush1.bf16.msra.mxu0 0
        %2551 = vmatprep.subr.bf16.mxu0 0
        %2552 = vmatpush1.bf16.msra.mxu0 0
        %2553 = vmatprep.subr.bf16.mxu0 0
        %2554 = vmatpush1.bf16.msra.mxu0 0
        %2555 = vmatprep.subr.bf16.mxu0 0
        %2556 = vmatpush1.bf16.msra.mxu0 0
        %2557 = vmatprep.mubr.bf16.mxu0 0
        %2558 = vmatmul.mubr.bf16.gmra.mrb[0].mxu0 %v2465
        %v2559 = vpop.f32.mrb[0].mxu0
        %v2560 = vadd.f32 0.0, %v2559
        %v2561 = vpop.f32.mrb[0].mxu0
        %v2562 = vadd.f32 0.0, %v2561
        %v2563 = vpop.f32.mrb[0].mxu0
        %v2564 = vadd.f32 0.0, %v2563
        %v2565 = vpop.f32.mrb[0].mxu0
        %v2566 = vadd.f32 0.0, %v2565
        %2567 = vdwg.mxu0
        %v2570 = vunpack.c.l.b16 %v2480
        %v2571 = vunpack.c.l.b16 %v2481
        %v2572 = vpack.c.b16 %v2571, %v2570
        %v2574 = vsel %vm726, %v2572, 0
        %2576 = vmatprep.subr.bf16.mxu0 %v719
        %2577 = vmatpush1.bf16.msra.mxu0 %v718
        %2578 = vmatprep.subr.bf16.mxu0 0
        %2579 = vmatpush1.bf16.msra.mxu0 0
        %2580 = vmatprep.subr.bf16.mxu0 0
        %2581 = vmatpush1.bf16.msra.mxu0 0
        %2582 = vmatprep.subr.bf16.mxu0 0
        %2583 = vmatpush1.bf16.msra.mxu0 0
        %2584 = vmatprep.subr.bf16.mxu0 0
        %2585 = vmatpush1.bf16.msra.mxu0 0
        %2586 = vmatprep.subr.bf16.mxu0 0
        %2587 = vmatpush1.bf16.msra.mxu0 0
        %2588 = vmatprep.subr.bf16.mxu0 0
        %2589 = vmatpush1.bf16.msra.mxu0 0
        %2590 = vmatprep.subr.bf16.mxu0 0
        %2591 = vmatpush1.bf16.msra.mxu0 0
        %2592 = vmatprep.subr.bf16.mxu0 0
        %2593 = vmatpush1.bf16.msra.mxu0 0
        %2594 = vmatprep.subr.bf16.mxu0 0
        %2595 = vmatpush1.bf16.msra.mxu0 0
        %2596 = vmatprep.subr.bf16.mxu0 0
        %2597 = vmatpush1.bf16.msra.mxu0 0
        %2598 = vmatprep.subr.bf16.mxu0 0
        %2599 = vmatpush1.bf16.msra.mxu0 0
        %2600 = vmatprep.subr.bf16.mxu0 0
        %2601 = vmatpush1.bf16.msra.mxu0 0
        %2602 = vmatprep.subr.bf16.mxu0 0
        %2603 = vmatpush1.bf16.msra.mxu0 0
        %2604 = vmatprep.subr.bf16.mxu0 0
        %2605 = vmatpush1.bf16.msra.mxu0 0
        %2606 = vmatprep.subr.bf16.mxu0 0
        %2607 = vmatpush1.bf16.msra.mxu0 0
        %2608 = vmatprep.mubr.bf16.mxu0 0
        %2609 = vmatmul.mubr.bf16.gmra.mrb[0].mxu0 %v2574
        %v2610 = vpop.f32.mrb[0].mxu0
        %v2611 = vadd.f32 %v2517, %v2610
        %v2612 = vpop.f32.mrb[0].mxu0
        %v2613 = vadd.f32 %v2519, %v2612
        %v2614 = vpop.f32.mrb[0].mxu0
        %v2615 = vadd.f32 %v2521, %v2614
        %v2616 = vpop.f32.mrb[0].mxu0
        %v2617 = vadd.f32 %v2523, %v2616
        %2618 = vdwg.mxu0
        %2619 = vmatprep.subr.bf16.mxu0 %v721
        %2620 = vmatpush1.bf16.msra.mxu0 %v720
        %2621 = vmatprep.subr.bf16.mxu0 0
        %2622 = vmatpush1.bf16.msra.mxu0 0
        %2623 = vmatprep.subr.bf16.mxu0 0
        %2624 = vmatpush1.bf16.msra.mxu0 0
        %2625 = vmatprep.subr.bf16.mxu0 0
        %2626 = vmatpush1.bf16.msra.mxu0 0
        %2627 = vmatprep.subr.bf16.mxu0 0
        %2628 = vmatpush1.bf16.msra.mxu0 0
        %2629 = vmatprep.subr.bf16.mxu0 0
        %2630 = vmatpush1.bf16.msra.mxu0 0
        %2631 = vmatprep.subr.bf16.mxu0 0
        %2632 = vmatpush1.bf16.msra.mxu0 0
        %2633 = vmatprep.subr.bf16.mxu0 0
        %2634 = vmatpush1.bf16.msra.mxu0 0
        %2635 = vmatprep.subr.bf16.mxu0 0
        %2636 = vmatpush1.bf16.msra.mxu0 0
        %2637 = vmatprep.subr.bf16.mxu0 0
        %2638 = vmatpush1.bf16.msra.mxu0 0
        %2639 = vmatprep.subr.bf16.mxu0 0
        %2640 = vmatpush1.bf16.msra.mxu0 0
        %2641 = vmatprep.subr.bf16.mxu0 0
        %2642 = vmatpush1.bf16.msra.mxu0 0
        %2643 = vmatprep.subr.bf16.mxu0 0
        %2644 = vmatpush1.bf16.msra.mxu0 0
        %2645 = vmatprep.subr.bf16.mxu0 0
        %2646 = vmatpush1.bf16.msra.mxu0 0
        %2647 = vmatprep.subr.bf16.mxu0 0
        %2648 = vmatpush1.bf16.msra.mxu0 0
        %2649 = vmatprep.subr.bf16.mxu0 0
        %2650 = vmatpush1.bf16.msra.mxu0 0
        %2651 = vmatprep.mubr.bf16.mxu0 0
        %2652 = vmatmul.mubr.bf16.gmra.mrb[0].mxu0 %v2574
        %v2653 = vpop.f32.mrb[0].mxu0
        %v2654 = vadd.f32 %v2560, %v2653
        %v2655 = vpop.f32.mrb[0].mxu0
        %v2656 = vadd.f32 %v2562, %v2655
        %v2657 = vpop.f32.mrb[0].mxu0
        %v2658 = vadd.f32 %v2564, %v2657
        %v2659 = vpop.f32.mrb[0].mxu0
        %v2660 = vadd.f32 %v2566, %v2659
        %2661 = vdwg.mxu0
        %v2662 = vadd.f32 %v2611, %v432
        %v2663 = vadd.f32 %v2613, %v436
        %v2664 = vadd.f32 %v2654, %v440
        %v2665 = vadd.f32 %v2656, %v444
        %v2666 = vadd.f32 %v2615, %v432
        %v2667 = vadd.f32 %v2617, %v436
        %v2668 = vadd.f32 %v2658, %v440
        %v2669 = vadd.f32 %v2660, %v444
        %v2670 = vmul.f32 %v2662, 0.5
        %v2671 = vmul.f32 %v2666, 0.5
        %v2672 = vtanh.pop %v2670
        %v2673 = vtanh.pop %v2671
        %v2674 = vmul.f32 %v2672, 0.5
        %v2675 = vmul.f32 %v2673, 0.5
        %v2676 = vadd.f32 %v2674, 0.5
        %v2677 = vadd.f32 %v2675, 0.5
        %v2678 = vmul.f32 %v2663, 0.5
        %v2679 = vmul.f32 %v2667, 0.5
        %v2680 = vtanh.pop %v2678
        %v2681 = vtanh.pop %v2679
        %v2682 = vmul.f32 %v2680, 0.5
        %v2683 = vmul.f32 %v2681, 0.5
        %v2684 = vadd.f32 %v2682, 0.5
        %v2685 = vadd.f32 %v2683, 0.5
        %v2686 = vtanh.pop %v2664
        %v2687 = vtanh.pop %v2668
        %v2688 = vmul.f32 %v2665, 0.5
        %v2689 = vmul.f32 %v2669, 0.5
        %v2690 = vtanh.pop %v2688
        %v2691 = vtanh.pop %v2689
        %v2692 = vmul.f32 %v2690, 0.5
        %v2693 = vmul.f32 %v2691, 0.5
        %v2694 = vadd.f32 %v2692, 0.5
        %v2695 = vadd.f32 %v2693, 0.5
        %v2696 = vmul.f32 %v2684, %v2466
        %v2697 = vmul.f32 %v2685, %v2467
        %v2698 = vmul.f32 %v2676, %v2686
        %v2699 = vmul.f32 %v2677, %v2687
        %v2700 = vadd.f32 %v2696, %v2698
        %v2701 = vadd.f32 %v2697, %v2699
        %v2702 = vtanh.pop %v2700
        %v2703 = vtanh.pop %v2701
        %v2704 = vmul.f32 %v2694, %v2702
        %v2705 = vmul.f32 %v2695, %v2703
        %v2706 = vpack.c.bf16 %v2705, %v2704
        %s2707 = sadd.s32 %s449, 7
        %v2708 = vstv %s2707
        %vm2709 = vcmp.lt.s32.totalorder %v2708, %v389
        %vm2710 = vcmp.lt.s32.totalorder %v2708, %v390
        %v2711 = vsel %vm2709, 1, 0
        %v2712 = vsel %vm2710, 1, 0
        %2713 = vset.pattern.permute.xlu0 0
        %2714 = vperm.xlu0 %2713, %v2711
        %v2715 = vpop.permute.xlu0 %2714
        %2716 = vset.pattern.permute.xlu0 0
        %2717 = vperm.xlu0 %2716, %v2712
        %v2718 = vpop.permute.xlu0 %2717
        %vm2719 = vcmp.eq.s32.totalorder %v2715, 1
        %vm2720 = vcmp.eq.s32.totalorder %v2718, 1
        %vm2721 = vmpackc.low %vm2719, %vm2719
        %vm2722 = vmpackc.low %vm2720, %vm2720
        %v2723 = vsel %vm2721, 65537, 0
        %v2724 = vsel %vm2722, 65537, 0
        %v2725 = vunpack.c.l.b16 %v2723
        %v2726 = vunpack.c.l.b16 %v2724
        %v2727 = vpack.c.b16 %v2726, %v2725
        %vm2728 = vcmp.ne.s16.totalorder %v2727, 0
        %v2729 = vsel %vm2728, %v2706, %v2465
        %v2730 = vsel %vm2719, %v2700, %v2466
        %v2731 = vsel %vm2720, %v2701, %v2467
        %v2732 = vsel %vm2728, %v2706, 0
        %v2734 = vunpack.c.l.b16 %v2732
        %v2735 = vunpack.c.h.b16 %v2732
        %v2736 = vpack.c.b16 %v2734, %v2734
        %v2737 = vpack.c.b16 %v2735, %v2735
        %s2740 = scalar_lea.vmem %s362, 56 [#allocation10]
        %2741 = vst [vmem:[%s2740] sm:$0xf] %v2736
        %2742 = vst [vmem:[%s2740 + $0x4] sm:$0xf] %v2737
        %2743 = vst [vmem:[#allocation2] sm:$0xff] %v2729
        %2744 = vst [vmem:[#allocation3] sm:$0xff] %v2730
        %2745 = vst [vmem:[#allocation3 + $0x8] sm:$0xff] %v2731
        %p2746 = scmp.eq.s32.totalorder %s32, 1
        // Predicated region
        $region57: #{tpu_custom_call.1} parent=39 // pred_check
          %p2747 = pneg %p2746
        $region58: #{tpu_custom_call.1} parent=39 // pred_check_branch
          %2749 = sbr.rel (%p2747) target = $region60
        $region59: #{tpu_custom_call.1} parent=39 // pred_region
          %v2750 = vunpack.c.l.bf16 %v2729
          %v2751 = vunpack.c.h.bf16 %v2729
          %2752 = vst [vmem:[#allocation11] sm:$0xff] %v2750
          %2753 = vst [vmem:[#allocation11 + $0x8] sm:$0xff] %v2751
          %2754 = vst [vmem:[#allocation13] sm:$0xff] %v2730
          %2755 = vst [vmem:[#allocation13 + $0x8] sm:$0xff] %v2731
        $region60: #{tpu_custom_call.1} parent=39 // pred_fallthru
          _
        %s2756 = sand.u32 %s166, 1
        %s2757 = scalar_lea.sflag [#allocation6], %s2756
        %s2758 = sand.u32 %s166, 1
        %s2759 = smul.addr %s2758, 64
        %s2760 = scalar_lea.vmem [#allocation10], %s2759
        // Predicated region
        $region61: #{tpu_custom_call.1} parent=39 // pred_check
          %p2761 = pneg %p176
        $region62: #{tpu_custom_call.1} parent=39 // pred_check_branch
          %2763 = sbr.rel (%p2761) target = $region64
        $region63: #{tpu_custom_call.1} parent=39 // pred_region
          %s2764 = smul.u32 8, %s32
          %s2765 = smul.u32 2, %s31
          %s2767 = ssub.s32 1024, 1024
          %2768 = vsyncadd %s2757, %s2767
          %s2769 = smul.addr %s2764, 2
          %s2770 = sadd.s32 %s2765, %s2769
          %s2771 = smul.addr %s2770, 64
          %s2772 = scalar_lea.hbm %s5, %s2771
          %s2773 = sshll.u32 %s2760, 4
          %s2774 = int_to_ptr.vmem [resolvable:$true] %s2773
          %2779 = dma.vmem_to_hbm [thread:$0]  %s2774, 1024, %s2772, %s2757, 64, 64, 4
        $region64: #{tpu_custom_call.1} parent=39 // pred_fallthru
          _
        // Predicated region
        $region65: #{tpu_custom_call.1} parent=39 // pred_check
          %p2780 = pneg %p202
        $region66: #{tpu_custom_call.1} parent=39 // pred_check_branch
          %2782 = sbr.rel (%p2780) target = $region68
        $region67: #{tpu_custom_call.1} parent=39 // pred_region
          %s2783 = smul.u32 2, %s31
          %s2785 = ssub.s32 256, 256
          %2786 = vsyncadd [#allocation12], %s2785
          %s2787 = smul.addr %s2783, 128
          %s2788 = scalar_lea.hbm %s6, %s2787
          %s2789 = sshll.u32 [#allocation11], 4
          %s2790 = int_to_ptr.vmem [resolvable:$true] %s2789
          %2795 = dma.vmem_to_hbm [thread:$0]  %s2790, 256, %s2788, [#allocation12], 128, 128, 8
        $region68: #{tpu_custom_call.1} parent=39 // pred_fallthru
          _
        // Predicated region
        $region69: #{tpu_custom_call.1} parent=39 // pred_check
          %p2796 = pneg %p228
        $region70: #{tpu_custom_call.1} parent=39 // pred_check_branch
          %2798 = sbr.rel (%p2796) target = $region72
        $region71: #{tpu_custom_call.1} parent=39 // pred_region
          %s2799 = smul.u32 2, %s31
          %s2801 = ssub.s32 256, 256
          %2802 = vsyncadd [#allocation12], %s2801
          %s2803 = smul.addr %s2799, 128
          %s2804 = scalar_lea.hbm %s7, %s2803
          %s2805 = sshll.u32 [#allocation13], 4
          %s2806 = int_to_ptr.vmem [resolvable:$true] %s2805
          %2811 = dma.vmem_to_hbm [thread:$0]  %s2806, 256, %s2804, [#allocation12], 128, 128, 8
        $region72: #{tpu_custom_call.1} parent=39 // pred_fallthru
          _
        // Predicated region
        $region73: #{tpu_custom_call.1} parent=39 // pred_check
          %p2812 = pneg %p202
        $region74: #{tpu_custom_call.1} parent=39 // pred_check_branch
          %2814 = sbr.rel (%p2812) target = $region76
        $region75: #{tpu_custom_call.1} parent=39 // pred_region
          %2815 = dma.done [#allocation12], 256
        $region76: #{tpu_custom_call.1} parent=39 // pred_fallthru
          _
        // Predicated region
        $region77: #{tpu_custom_call.1} parent=39 // pred_check
          %p2816 = pneg %p228
        $region78: #{tpu_custom_call.1} parent=39 // pred_check_branch
          %2818 = sbr.rel (%p2816) target = $region80
        $region79: #{tpu_custom_call.1} parent=39 // pred_region
          %2819 = dma.done [#allocation12], 256
        $region80: #{tpu_custom_call.1} parent=39 // pred_fallthru
          _
      $region40: #{tpu_custom_call.1} parent=5 // pred_fallthru
        _
      %p2820 = scmp.le.s32.totalorder 2, %s22
      // Predicated region
      $region81: #{tpu_custom_call.1} parent=5 // pred_check
        %p2821 = pneg %p2820
      $region82: #{tpu_custom_call.1} parent=5 // pred_check_branch
        %2823 = sbr.rel (%p2821) target = $region84
      $region83: #{tpu_custom_call.1} parent=5 // pred_region
        %s2824 = ssub.s32 %s22, 2
        // Predicated region
        $region85: #{tpu_custom_call.1} parent=83 // pred_check
          %p2825 = pneg %p182
        $region86: #{tpu_custom_call.1} parent=83 // pred_check_branch
          %2827 = sbr.rel (%p2825) target = $region88
        $region87: #{tpu_custom_call.1} parent=83 // pred_region
          %s2828 = sand.u32 %s167, 1
          %s2829 = scalar_lea.sflag [#allocation6], %s2828
          %s2830 = sand.u32 %s167, 1
          %s2831 = smul.addr %s2830, 64
          %s2832 = scalar_lea.vmem [#allocation10], %s2831
          %2833 = dma.done %s2829, 1024
        $region88: #{tpu_custom_call.1} parent=83 // pred_fallthru
          _
      $region84: #{tpu_custom_call.1} parent=5 // pred_fallthru
        _
    $region6: #{tpu_custom_call.1} parent=1 // loop_footer
      %s26 = sadd.s32 1, %s22
    $region7: #{tpu_custom_call.1} parent=1 // loop_footer_branch
      %21 = sbr.rel target = $region3
    $region8: #{tpu_custom_call.1} parent=1 // loop_exit
      _
    %2834 = vsyncpa [#allocation5], 1
    %s2835 = scalar_lea.sflag [#allocation5], 1
    %2836 = vsyncpa %s2835, 1
    %2837 = vsyncpa [#allocation8], 1
    %2838 = vsyncpa [#allocation6], 1
    %s2839 = scalar_lea.sflag [#allocation6], 1
    %2840 = vsyncpa %s2839, 1
    %2841 = vsyncpa [#allocation12], 1

</llo_original>
